<compile_context>
chip_gen: v7x
topology: tpu7x:2x2x1
jax: 0.10.0
libtpu: 0.0.40
codegen_flags: <defaults>
</compile_context>

<pallas_src>
import math

import jax
import jax.numpy as jnp
import numpy as np
from jax.experimental import pallas as pl
from jax.experimental.pallas import tpu as pltpu


# ---------------------------------------------------------------------------
# Constant 0/1 matrices (built with numpy once at trace time; exact in bf16).
# NOTE(scaling): g1 and the gather FLOPs are O((H*W)^2) per tap -- fine at
# 16x16 (~0.3 MiB bf16) but quadratic in image area.  For large images tile
# the spatial axis in the BlockSpec or replace the MXU gather with strided
# loads; at the shapes of this module it is the fastest formulation.
# ---------------------------------------------------------------------------
def _conv_gather_mats(H, W):
    """9 matrices G_t (H*W, Ho*Wo): column (i,j) of X @ G_t is
    x[:, 2i+kh-1, 2j+kw-1] (zero outside the image), i.e. tap (kh,kw) of a
    kernel-3 / stride-2 / pad-1 conv."""
    Ho, Wo = H // 2, W // 2
    mats = np.zeros((9, H * W, Ho * Wo), np.float32)
    for kh in range(3):
        for kw in range(3):
            t = 3 * kh + kw
            for i in range(Ho):
                for j in range(Wo):
                    h, w = 2 * i + kh - 1, 2 * j + kw - 1
                    if 0 <= h < H and 0 <= w < W:
                        mats[t, h * W + w, i * Wo + j] = 1.0
    return mats


def _shift_mats(H, W):
    """3 matrices S (H*W, H*W): X @ S shifts the flattened image by
    (0,+1), (+1,0), (+1,+1) with zero fill."""
    mats = np.zeros((3, H * W, H * W), np.float32)
    for k, (dr, dc) in enumerate(((0, 1), (1, 0), (1, 1))):
        for i in range(H):
            for j in range(W):
                si, sj = i + dr, j + dc
                if si < H and sj < W:
                    mats[k, si * W + sj, i * W + j] = 1.0
    return mats


def _plane_regather_mats(Hi, Wi):
    """T[s, p] (Hi*Wi, 4*Hi*Wi): sum_p plane_p @ T[s, p] rebuilds the shifted
    full-resolution image (shift s in {(0,0),(0,1),(1,0),(1,1)}) from the four
    parity planes p = 2a+b produced by a stride-2 transposed conv."""
    Hf, Wf = 2 * Hi, 2 * Wi
    mats = np.zeros((4, 4, Hi * Wi, Hf * Wf), np.float32)
    for s, (sr, sc) in enumerate(((0, 0), (0, 1), (1, 0), (1, 1))):
        for y in range(Hf):
            for x in range(Wf):
                yy, xx = y + sr, x + sc
                if yy >= Hf or xx >= Wf:
                    continue
                p = 2 * (yy % 2) + (xx % 2)
                mats[s, p, (yy // 2) * Wi + (xx // 2), y * Wf + x] = 1.0
    return mats


def _interleave_mats(Hh, Wh):
    """4 matrices R_p (Hh*Wh, 4*Hh*Wh): sum_p plane_p @ R_p interleaves the
    parity planes p = 2a+b (plane (a,b) holds pixels (2i+a, 2j+b)) into the
    flattened full-resolution image.  Each output column receives exactly one
    contribution, so bias + sigmoid commute with this placement."""
    H, W = 2 * Hh, 2 * Wh
    mats = np.zeros((4, Hh * Wh, H * W), np.float32)
    for a in range(2):
        for b in range(2):
            p = 2 * a + b
            for i in range(Hh):
                for j in range(Wh):
                    mats[p, i * Wh + j, (2 * i + a) * W + (2 * j + b)] = 1.0
    return mats


def _block_diag(mat, nb):
    """(..., r, c) -> (..., nb*r, nb*c): block-diagonal with nb identical
    copies of `mat` (applies the same per-sample weight to Nb row-stacked
    samples in one matmul)."""
    if nb == 1:
        return mat
    eye = jnp.eye(nb, dtype=mat.dtype)
    out = jnp.einsum('ij,...rc->...irjc', eye, mat)
    return out.reshape(mat.shape[:-2] + (nb * mat.shape[-2], nb * mat.shape[-1]))


# ---------------------------------------------------------------------------
# Fused Pallas kernel: full AE forward for Nb batch samples per grid step.
# Activation layout everywhere: (Nb * channels, flattened spatial) so the long
# spatial axis sits on the 128-lane dimension and batch rides the sublanes.
# ---------------------------------------------------------------------------
def _ae_kernel(x_ref, g1_ref, w1_ref, b1_ref, g2_ref, w2_ref, b2_ref,
               sm_ref, m1_ref, b3_ref, tc_ref, m2_ref, r_ref, b4_ref,
               enc_ref, dec_ref, xg1_ref, xg2_ref):
    bf16 = jnp.bfloat16

    def mm(a, b):  # bf16 operands, f32 accumulate, default precision (1 pass)
        return jnp.dot(a, b, preferred_element_type=jnp.float32)

    x = x_ref[...]                                        # (nb*4, H*W) bf16
    r1 = x_ref.shape[0]                                   # nb*4

    # ---- encoder conv 1: Conv2d(4->16, k3, s2, p1) + ReLU -----------------
    # 9 batched spatial-gather matmuls stacked into scratch, then ONE fused
    # weight matmul with K = 9 * nb * 4.
    for t in range(9):
        xg1_ref[t * r1:(t + 1) * r1, :] = mm(x, g1_ref[t])
    h1 = mm(w1_ref[...], xg1_ref[...].astype(bf16)) + b1_ref[...]
    h1 = jnp.maximum(h1, 0.0).astype(bf16)                # (nb*16, H1*W1)

    # ---- encoder conv 2: Conv2d(16->32, k3, s2, p1) + ReLU ----------------
    r2 = h1.shape[0]                                      # nb*16
    for t in range(9):
        xg2_ref[t * r2:(t + 1) * r2, :] = mm(h1, g2_ref[t])
    enc = mm(w2_ref[...], xg2_ref[...].astype(bf16)) + b2_ref[...]
    enc = jnp.maximum(enc, 0.0)                           # (nb*32, H2*W2) f32
    enc_ref[...] = enc
    encb = enc.astype(bf16)

    # ---- transposed convs via sub-pixel (parity-plane) decomposition ------
    # plane (a, b) holds output pixels (2i+a, 2j+b); m_ref[kh, kw] is the
    # block-diagonalised W_pt^T tap.
    def planes(m_ref, z, zc, zr, zrc):
        p00 = mm(m_ref[1, 1], z)
        p01 = mm(m_ref[1, 2], z) + mm(m_ref[1, 0], zc)
        p10 = mm(m_ref[2, 1], z) + mm(m_ref[0, 1], zr)
        p11 = (mm(m_ref[2, 2], z) + mm(m_ref[2, 0], zc) +
               mm(m_ref[0, 2], zr) + mm(m_ref[0, 0], zrc))
        return p00, p01, p10, p11

    # dec1: ConvTranspose2d(32->16, k3, s2, p1, op1) + ReLU
    zc = mm(encb, sm_ref[0]).astype(bf16)                 # shift (0,+1)
    zr = mm(encb, sm_ref[1]).astype(bf16)                 # shift (+1,0)
    zrc = mm(encb, sm_ref[2]).astype(bf16)                # shift (+1,+1)
    d1 = [jnp.maximum(p + b3_ref[...], 0.0).astype(bf16)
          for p in planes(m1_ref, encb, zc, zr, zrc)]     # 4 x (nb*16, H2*W2)

    # regather dec1's parity planes into the 4 shifted operands of dec2; all
    # four shifts land lane-concatenated in one (nb*16, 4*H1*W1) value.
    z2 = mm(d1[0], tc_ref[0])
    for p in range(1, 4):
        z2 = z2 + mm(d1[p], tc_ref[p])
    z2 = z2.astype(bf16)
    s1 = tc_ref.shape[2] // 4                             # H1*W1
    z2s = [z2[:, s * s1:(s + 1) * s1] for s in range(4)]

    # dec2: ConvTranspose2d(16->4, k3, s2, p1, op1)
    q = planes(m2_ref, z2s[0], z2s[1], z2s[2], z2s[3])    # 4 x (nb*4, H1*W1)

    # parity interleave -> lane-dense full-resolution logits; bias + sigmoid
    # commute with the (exact, disjoint) placement, so apply them afterwards.
    logits = mm(q[0].astype(bf16), r_ref[0])
    for p2 in range(1, 4):
        logits = logits + mm(q[p2].astype(bf16), r_ref[p2])
    logits = logits + b4_ref[...]
    dec_ref[...] = 1.0 / (1.0 + jnp.exp(-logits))         # (nb*4, H*W)


# ---------------------------------------------------------------------------
# Wrapper: packs weights/constants, runs the single pallas_call, un-packs.
# ---------------------------------------------------------------------------
def ae_forward(params, x_nchw, *, samples_per_step=None):
    """Returns (decoded (N,4,H,W), encoded (N,32,H/4,W/4)) like AE.forward."""
    N, cin, H, W = x_nchw.shape
    assert H % 4 == 0 and W % 4 == 0
    H1, W1, H2, W2 = H // 2, W // 2, H // 4, W // 4
    S0, S1, S2 = H * W, H1 * W1, H2 * W2
    f32, bf16 = jnp.float32, jnp.bfloat16

    (w1, b1), (w2, b2) = params["enc1"], params["enc2"]
    (w3, b3), (w4, b4) = params["dec1"], params["dec2"]
    co1, ci1 = w1.shape[0], w1.shape[1]        # 16, 4
    co2, ci2 = w2.shape[0], w2.shape[1]        # 32, 16
    co3, co4 = w3.shape[1], w4.shape[1]        # 16, 4   (ConvT: (in,out,kh,kw))
    assert cin == ci1

    # batch blocking: Nb samples per grid step (amortises per-step overhead,
    # widens the sublane/M axis of every gather matmul)
    nb = samples_per_step or min(N, 8)
    n_pad = pl.cdiv(N, nb) * nb
    steps = n_pad // nb

    # --- kernel-ready weights (block-diagonal over the nb in-step samples) --
    w1t = jnp.transpose(w1, (2, 3, 0, 1)).reshape(9, co1, ci1)
    w2t = jnp.transpose(w2, (2, 3, 0, 1)).reshape(9, co2, ci2)
    # fused encoder weights: rows (n, cout), cols (tap, n, cin)
    w1p = jnp.transpose(_block_diag(w1t, nb), (1, 0, 2)).reshape(
        nb * co1, 9 * nb * ci1).astype(bf16)
    w2p = jnp.transpose(_block_diag(w2t, nb), (1, 0, 2)).reshape(
        nb * co2, 9 * nb * ci2).astype(bf16)
    # transposed-conv taps: (3,3,out,in), block-diagonalised over nb
    m1bd = _block_diag(jnp.transpose(w3, (2, 3, 1, 0)), nb).astype(bf16)
    m2bd = _block_diag(jnp.transpose(w4, (2, 3, 1, 0)), nb).astype(bf16)
    # biases tiled over the nb row blocks
    b1t = jnp.tile(b1, (nb,)).reshape(nb * co1, 1).astype(f32)
    b2t = jnp.tile(b2, (nb,)).reshape(nb * co2, 1).astype(f32)
    b3t = jnp.tile(b3, (nb,)).reshape(nb * co3, 1).astype(f32)
    b4t = jnp.tile(b4, (nb,)).reshape(nb * co4, 1).astype(f32)

    # --- constant 0/1 matrices (exact in bf16; half the DMA of f32) ---------
    g1 = jnp.asarray(_conv_gather_mats(H, W), dtype=bf16)       # (9, S0, S1)
    g2 = jnp.asarray(_conv_gather_mats(H1, W1), dtype=bf16)     # (9, S1, S2)
    sm = jnp.asarray(_shift_mats(H2, W2), dtype=bf16)           # (3, S2, S2)
    t4 = _plane_regather_mats(H2, W2)                           # (4,4,S2,S1)
    tc = jnp.asarray(np.transpose(t4, (1, 2, 0, 3)).reshape(4, S2, 4 * S1),
                     dtype=bf16)                                # (4, S2, 4*S1)
    rm = jnp.asarray(_interleave_mats(H1, W1), dtype=bf16)      # (4, S1, S0)

    # --- input: (N*4, H*W) bf16, batch stacked on the sublane axis ----------
    x_flat = x_nchw.reshape(N, cin, S0).astype(bf16)
    if n_pad != N:
        x_flat = jnp.concatenate(
            [x_flat, jnp.zeros((n_pad - N, cin, S0), bf16)], axis=0)
    x_rows = x_flat.reshape(n_pad * cin, S0)

    def _const(arr):
        nd = arr.ndim
        return pl.BlockSpec(arr.shape, lambda i, _nd=nd: (0,) * _nd)

    enc_rows, dec_rows = pl.pallas_call(
        _ae_kernel,
        out_shape=(
            jax.ShapeDtypeStruct((n_pad * co2, S2), f32),
            jax.ShapeDtypeStruct((n_pad * co4, S0), f32),
        ),
        grid=(steps,),
        in_specs=[
            pl.BlockSpec((nb * cin, S0), lambda i: (i, 0)),
            _const(g1), _const(w1p), _const(b1t),
            _const(g2), _const(w2p), _const(b2t),
            _const(sm), _const(m1bd), _const(b3t),
            _const(tc), _const(m2bd), _const(rm), _const(b4t),
        ],
        out_specs=(
            pl.BlockSpec((nb * co2, S2), lambda i: (i, 0)),
            pl.BlockSpec((nb * co4, S0), lambda i: (i, 0)),
        ),
        scratch_shapes=[
            pltpu.VMEM((9 * nb * ci1, S1), f32),   # stacked conv1 tap gathers
            pltpu.VMEM((9 * nb * ci2, S2), f32),   # stacked conv2 tap gathers
        ],
        compiler_params=pltpu.CompilerParams(
            dimension_semantics=("parallel",)),    # v7x: batch blocks per core
    )(x_rows, g1, w1p, b1t, g2, w2p, b2t, sm, m1bd, b3t, tc, m2bd, rm, b4t)

    # free reshapes (no transposes): row layout is already (n, channel)
    encoded = enc_rows.reshape(n_pad, co2, H2, W2)[:N]
    decoded = dec_rows.reshape(n_pad, co4, H, W)[:N]
    return decoded, encoded


# ---------------------------------------------------------------------------
# Pure-XLA f32 reference (used only for the runtime self-check).
# ---------------------------------------------------------------------------
def ae_forward_reference(params, x_nchw):
    dn = ("NCHW", "OIHW", "NCHW")
    prec = jax.lax.Precision.HIGHEST
    (w1, b1), (w2, b2) = params["enc1"], params["enc2"]
    (w3, b3), (w4, b4) = params["dec1"], params["dec2"]

    def conv(x, w, b):
        y = jax.lax.conv_general_dilated(x, w, (2, 2), ((1, 1), (1, 1)),
                                         dimension_numbers=dn, precision=prec)
        return y + b.reshape(1, -1, 1, 1)

    def tconv(x, w, b):
        w_eq = jnp.transpose(w[:, :, ::-1, ::-1], (1, 0, 2, 3))
        y = jax.lax.conv_general_dilated(x, w_eq, (1, 1), ((1, 2), (1, 2)),
                                         lhs_dilation=(2, 2),
                                         dimension_numbers=dn, precision=prec)
        return y + b.reshape(1, -1, 1, 1)

    h = jax.nn.relu(conv(x_nchw, w1, b1))
    encoded = jax.nn.relu(conv(h, w2, b2))
    d = jax.nn.relu(tconv(encoded, w3, b3))
    decoded = jax.nn.sigmoid(tconv(d, w4, b4))
    return decoded, encoded


# ---------------------------------------------------------------------------
# Parameter init (deterministic, PyTorch-style uniform bounds)
# ---------------------------------------------------------------------------
def _init_conv(key, cout, cin, k):
    kw_key, kb_key = jax.random.split(key)
    bound = 1.0 / math.sqrt(cin * k * k)
    w = jax.random.uniform(kw_key, (cout, cin, k, k), jnp.float32, -bound, bound)
    b = jax.random.uniform(kb_key, (cout,), jnp.float32, -bound, bound)
    return w, b


def _init_convT(key, cin, cout, k):
    kw_key, kb_key = jax.random.split(key)
    bound = 1.0 / math.sqrt(cout * k * k)   # PyTorch uses weight.size(1)*k*k
    w = jax.random.uniform(kw_key, (cin, cout, k, k), jnp.float32, -bound, bound)
    b = jax.random.uniform(kb_key, (cout,), jnp.float32, -bound, bound)
    return w, b


def init_ae_params(seed=0):
    keys = jax.random.split(jax.random.PRNGKey(seed), 4)
    return {
        "enc1": _init_conv(keys[0], 16, 4, 3),
        "enc2": _init_conv(keys[1], 32, 16, 3),
        "dec1": _init_convT(keys[2], 32, 16, 3),
        "dec2": _init_convT(keys[3], 16, 4, 3),
    }


if __name__ == "__main__":
    params = init_ae_params(seed=0)
    x = jax.random.normal(jax.random.PRNGKey(0), (2, 4, 16, 16), dtype=jnp.float32)

    decoded, encoded = jax.jit(ae_forward)(params, x)
    jax.block_until_ready((decoded, encoded))

    assert decoded.shape == (2, 4, 16, 16), decoded.shape
    assert encoded.shape == (2, 32, 4, 4), encoded.shape

    # numerical self-check against the plain-XLA f32 reference of the module
    dec_exp, enc_exp = jax.jit(ae_forward_reference)(params, x)
    np.testing.assert_allclose(np.asarray(decoded), np.asarray(dec_exp),
                               rtol=2e-2, atol=2e-2)
    np.testing.assert_allclose(np.asarray(encoded), np.asarray(enc_exp),
                               rtol=2e-2, atol=2e-2)

    assert bool(jnp.all((decoded >= 0.0) & (decoded <= 1.0)))   # sigmoid range
    assert bool(jnp.all(encoded >= 0.0))                        # relu range
    print("KERNEL_OK")
</pallas_src>

<mosaic_0001>
module attributes {stable_mosaic.version = 11 : i64} {
  func.func @_ae_kernel(%arg0: i32, %arg1: memref<8x256xbf16, #tpu.memory_space<vmem>>, %arg2: memref<9x256x64xbf16, #tpu.memory_space<vmem>>, %arg3: memref<32x72xbf16, #tpu.memory_space<vmem>>, %arg4: memref<32x1xf32, #tpu.memory_space<vmem>>, %arg5: memref<9x64x16xbf16, #tpu.memory_space<vmem>>, %arg6: memref<64x288xbf16, #tpu.memory_space<vmem>>, %arg7: memref<64x1xf32, #tpu.memory_space<vmem>>, %arg8: memref<3x16x16xbf16, #tpu.memory_space<vmem>>, %arg9: memref<3x3x32x64xbf16, #tpu.memory_space<vmem>>, %arg10: memref<32x1xf32, #tpu.memory_space<vmem>>, %arg11: memref<4x16x256xbf16, #tpu.memory_space<vmem>>, %arg12: memref<3x3x8x32xbf16, #tpu.memory_space<vmem>>, %arg13: memref<4x64x256xbf16, #tpu.memory_space<vmem>>, %arg14: memref<8x1xf32, #tpu.memory_space<vmem>>, %arg15: memref<64x16xf32, #tpu.memory_space<vmem>>, %arg16: memref<8x256xf32, #tpu.memory_space<vmem>>, %arg17: memref<72x64xf32, #tpu.memory_space<vmem>>, %arg18: memref<288x16xf32, #tpu.memory_space<vmem>>) attributes {dimension_semantics = [#tpu.dimension_semantics<parallel>], iteration_bounds = array<i64: 1>, scalar_prefetch = 0 : i64, scratch_operands = 2 : i64, tpu.core_type = #tpu.core_type<tc>, window_params = [{transform_indices = @transform_0, window_bounds = array<i64: 8, 256>}, {pipeline_mode = #tpu.pipeline_mode<synchronous>, transform_indices = @transform_1, window_bounds = array<i64: 9, 256, 64>}, {pipeline_mode = #tpu.pipeline_mode<synchronous>, transform_indices = @transform_2, window_bounds = array<i64: 32, 72>}, {pipeline_mode = #tpu.pipeline_mode<synchronous>, transform_indices = @transform_3, window_bounds = array<i64: 32, 1>}, {pipeline_mode = #tpu.pipeline_mode<synchronous>, transform_indices = @transform_4, window_bounds = array<i64: 9, 64, 16>}, {pipeline_mode = #tpu.pipeline_mode<synchronous>, transform_indices = @transform_5, window_bounds = array<i64: 64, 288>}, {pipeline_mode = #tpu.pipeline_mode<synchronous>, transform_indices = @transform_6, window_bounds = array<i64: 64, 1>}, {pipeline_mode = #tpu.pipeline_mode<synchronous>, transform_indices = @transform_7, window_bounds = array<i64: 3, 16, 16>}, {pipeline_mode = #tpu.pipeline_mode<synchronous>, transform_indices = @transform_8, window_bounds = array<i64: 3, 3, 32, 64>}, {pipeline_mode = #tpu.pipeline_mode<synchronous>, transform_indices = @transform_9, window_bounds = array<i64: 32, 1>}, {pipeline_mode = #tpu.pipeline_mode<synchronous>, transform_indices = @transform_10, window_bounds = array<i64: 4, 16, 256>}, {pipeline_mode = #tpu.pipeline_mode<synchronous>, transform_indices = @transform_11, window_bounds = array<i64: 3, 3, 8, 32>}, {pipeline_mode = #tpu.pipeline_mode<synchronous>, transform_indices = @transform_12, window_bounds = array<i64: 4, 64, 256>}, {pipeline_mode = #tpu.pipeline_mode<synchronous>, transform_indices = @transform_13, window_bounds = array<i64: 8, 1>}, {transform_indices = @transform_14, window_bounds = array<i64: 64, 16>}, {transform_indices = @transform_15, window_bounds = array<i64: 8, 256>}]} {
    %c0 = arith.constant 0 : index
    %c0_0 = arith.constant 0 : index
    %0 = vector.load %arg1[%c0, %c0_0] : memref<8x256xbf16, #tpu.memory_space<vmem>>, vector<8x256xbf16>
    %c0_1 = arith.constant 0 : index
    %c0_2 = arith.constant 0 : index
    %c0_3 = arith.constant 0 : index
    %1 = vector.load %arg2[%c0_1, %c0_2, %c0_3] : memref<9x256x64xbf16, #tpu.memory_space<vmem>>, vector<1x256x64xbf16>
    %2 = vector.shape_cast %1 : vector<1x256x64xbf16> to vector<256x64xbf16>
    %cst = arith.constant dense<0.000000e+00> : vector<8x64xf32>
    %3 = tpu.matmul %0, %2, %cst {dimension_numbers = #tpu.dot_dimension_numbers<[1], [0], [0], [1], [0, 0, 1, 1], [], []>} : vector<8x256xbf16>, vector<256x64xbf16>, vector<8x64xf32> -> vector<8x64xf32>
    %c0_4 = arith.constant 0 : index
    %c0_5 = arith.constant 0 : index
    %4 = vector.load %arg17[%c0_4, %c0_5] : memref<72x64xf32, #tpu.memory_space<vmem>>, vector<8x64xf32>
    tpu.vector_store %arg17[%c0_4, %c0_5], %3 {strides = array<i32>} : memref<72x64xf32, #tpu.memory_space<vmem>>, vector<8x64xf32>,
    %c1 = arith.constant 1 : index
    %c0_6 = arith.constant 0 : index
    %c0_7 = arith.constant 0 : index
    %5 = vector.load %arg2[%c1, %c0_6, %c0_7] : memref<9x256x64xbf16, #tpu.memory_space<vmem>>, vector<1x256x64xbf16>
    %6 = vector.shape_cast %5 : vector<1x256x64xbf16> to vector<256x64xbf16>
    %cst_8 = arith.constant dense<0.000000e+00> : vector<8x64xf32>
    %7 = tpu.matmul %0, %6, %cst_8 {dimension_numbers = #tpu.dot_dimension_numbers<[1], [0], [0], [1], [0, 0, 1, 1], [], []>} : vector<8x256xbf16>, vector<256x64xbf16>, vector<8x64xf32> -> vector<8x64xf32>
    %c8 = arith.constant 8 : index
    %c0_9 = arith.constant 0 : index
    %8 = vector.load %arg17[%c8, %c0_9] : memref<72x64xf32, #tpu.memory_space<vmem>>, vector<8x64xf32>
    tpu.vector_store %arg17[%c8, %c0_9], %7 {strides = array<i32>} : memref<72x64xf32, #tpu.memory_space<vmem>>, vector<8x64xf32>,
    %c2 = arith.constant 2 : index
    %c0_10 = arith.constant 0 : index
    %c0_11 = arith.constant 0 : index
    %9 = vector.load %arg2[%c2, %c0_10, %c0_11] : memref<9x256x64xbf16, #tpu.memory_space<vmem>>, vector<1x256x64xbf16>
    %10 = vector.shape_cast %9 : vector<1x256x64xbf16> to vector<256x64xbf16>
    %cst_12 = arith.constant dense<0.000000e+00> : vector<8x64xf32>
    %11 = tpu.matmul %0, %10, %cst_12 {dimension_numbers = #tpu.dot_dimension_numbers<[1], [0], [0], [1], [0, 0, 1, 1], [], []>} : vector<8x256xbf16>, vector<256x64xbf16>, vector<8x64xf32> -> vector<8x64xf32>
    %c16 = arith.constant 16 : index
    %c0_13 = arith.constant 0 : index
    %12 = vector.load %arg17[%c16, %c0_13] : memref<72x64xf32, #tpu.memory_space<vmem>>, vector<8x64xf32>
    tpu.vector_store %arg17[%c16, %c0_13], %11 {strides = array<i32>} : memref<72x64xf32, #tpu.memory_space<vmem>>, vector<8x64xf32>,
    %c3 = arith.constant 3 : index
    %c0_14 = arith.constant 0 : index
    %c0_15 = arith.constant 0 : index
    %13 = vector.load %arg2[%c3, %c0_14, %c0_15] : memref<9x256x64xbf16, #tpu.memory_space<vmem>>, vector<1x256x64xbf16>
    %14 = vector.shape_cast %13 : vector<1x256x64xbf16> to vector<256x64xbf16>
    %cst_16 = arith.constant dense<0.000000e+00> : vector<8x64xf32>
    %15 = tpu.matmul %0, %14, %cst_16 {dimension_numbers = #tpu.dot_dimension_numbers<[1], [0], [0], [1], [0, 0, 1, 1], [], []>} : vector<8x256xbf16>, vector<256x64xbf16>, vector<8x64xf32> -> vector<8x64xf32>
    %c24 = arith.constant 24 : index
    %c0_17 = arith.constant 0 : index
    %16 = vector.load %arg17[%c24, %c0_17] : memref<72x64xf32, #tpu.memory_space<vmem>>, vector<8x64xf32>
    tpu.vector_store %arg17[%c24, %c0_17], %15 {strides = array<i32>} : memref<72x64xf32, #tpu.memory_space<vmem>>, vector<8x64xf32>,
    %c4 = arith.constant 4 : index
    %c0_18 = arith.constant 0 : index
    %c0_19 = arith.constant 0 : index
    %17 = vector.load %arg2[%c4, %c0_18, %c0_19] : memref<9x256x64xbf16, #tpu.memory_space<vmem>>, vector<1x256x64xbf16>
    %18 = vector.shape_cast %17 : vector<1x256x64xbf16> to vector<256x64xbf16>
    %cst_20 = arith.constant dense<0.000000e+00> : vector<8x64xf32>
    %19 = tpu.matmul %0, %18, %cst_20 {dimension_numbers = #tpu.dot_dimension_numbers<[1], [0], [0], [1], [0, 0, 1, 1], [], []>} : vector<8x256xbf16>, vector<256x64xbf16>, vector<8x64xf32> -> vector<8x64xf32>
    %c32 = arith.constant 32 : index
    %c0_21 = arith.constant 0 : index
    %20 = vector.load %arg17[%c32, %c0_21] : memref<72x64xf32, #tpu.memory_space<vmem>>, vector<8x64xf32>
    tpu.vector_store %arg17[%c32, %c0_21], %19 {strides = array<i32>} : memref<72x64xf32, #tpu.memory_space<vmem>>, vector<8x64xf32>,
    %c5 = arith.constant 5 : index
    %c0_22 = arith.constant 0 : index
    %c0_23 = arith.constant 0 : index
    %21 = vector.load %arg2[%c5, %c0_22, %c0_23] : memref<9x256x64xbf16, #tpu.memory_space<vmem>>, vector<1x256x64xbf16>
    %22 = vector.shape_cast %21 : vector<1x256x64xbf16> to vector<256x64xbf16>
    %cst_24 = arith.constant dense<0.000000e+00> : vector<8x64xf32>
    %23 = tpu.matmul %0, %22, %cst_24 {dimension_numbers = #tpu.dot_dimension_numbers<[1], [0], [0], [1], [0, 0, 1, 1], [], []>} : vector<8x256xbf16>, vector<256x64xbf16>, vector<8x64xf32> -> vector<8x64xf32>
    %c40 = arith.constant 40 : index
    %c0_25 = arith.constant 0 : index
    %24 = vector.load %arg17[%c40, %c0_25] : memref<72x64xf32, #tpu.memory_space<vmem>>, vector<8x64xf32>
    tpu.vector_store %arg17[%c40, %c0_25], %23 {strides = array<i32>} : memref<72x64xf32, #tpu.memory_space<vmem>>, vector<8x64xf32>,
    %c6 = arith.constant 6 : index
    %c0_26 = arith.constant 0 : index
    %c0_27 = arith.constant 0 : index
    %25 = vector.load %arg2[%c6, %c0_26, %c0_27] : memref<9x256x64xbf16, #tpu.memory_space<vmem>>, vector<1x256x64xbf16>
    %26 = vector.shape_cast %25 : vector<1x256x64xbf16> to vector<256x64xbf16>
    %cst_28 = arith.constant dense<0.000000e+00> : vector<8x64xf32>
    %27 = tpu.matmul %0, %26, %cst_28 {dimension_numbers = #tpu.dot_dimension_numbers<[1], [0], [0], [1], [0, 0, 1, 1], [], []>} : vector<8x256xbf16>, vector<256x64xbf16>, vector<8x64xf32> -> vector<8x64xf32>
    %c48 = arith.constant 48 : index
    %c0_29 = arith.constant 0 : index
    %28 = vector.load %arg17[%c48, %c0_29] : memref<72x64xf32, #tpu.memory_space<vmem>>, vector<8x64xf32>
    tpu.vector_store %arg17[%c48, %c0_29], %27 {strides = array<i32>} : memref<72x64xf32, #tpu.memory_space<vmem>>, vector<8x64xf32>,
    %c7 = arith.constant 7 : index
    %c0_30 = arith.constant 0 : index
    %c0_31 = arith.constant 0 : index
    %29 = vector.load %arg2[%c7, %c0_30, %c0_31] : memref<9x256x64xbf16, #tpu.memory_space<vmem>>, vector<1x256x64xbf16>
    %30 = vector.shape_cast %29 : vector<1x256x64xbf16> to vector<256x64xbf16>
    %cst_32 = arith.constant dense<0.000000e+00> : vector<8x64xf32>
    %31 = tpu.matmul %0, %30, %cst_32 {dimension_numbers = #tpu.dot_dimension_numbers<[1], [0], [0], [1], [0, 0, 1, 1], [], []>} : vector<8x256xbf16>, vector<256x64xbf16>, vector<8x64xf32> -> vector<8x64xf32>
    %c56 = arith.constant 56 : index
    %c0_33 = arith.constant 0 : index
    %32 = vector.load %arg17[%c56, %c0_33] : memref<72x64xf32, #tpu.memory_space<vmem>>, vector<8x64xf32>
    tpu.vector_store %arg17[%c56, %c0_33], %31 {strides = array<i32>} : memref<72x64xf32, #tpu.memory_space<vmem>>, vector<8x64xf32>,
    %c8_34 = arith.constant 8 : index
    %c0_35 = arith.constant 0 : index
    %c0_36 = arith.constant 0 : index
    %33 = vector.load %arg2[%c8_34, %c0_35, %c0_36] : memref<9x256x64xbf16, #tpu.memory_space<vmem>>, vector<1x256x64xbf16>
    %34 = vector.shape_cast %33 : vector<1x256x64xbf16> to vector<256x64xbf16>
    %cst_37 = arith.constant dense<0.000000e+00> : vector<8x64xf32>
    %35 = tpu.matmul %0, %34, %cst_37 {dimension_numbers = #tpu.dot_dimension_numbers<[1], [0], [0], [1], [0, 0, 1, 1], [], []>} : vector<8x256xbf16>, vector<256x64xbf16>, vector<8x64xf32> -> vector<8x64xf32>
    %c64 = arith.constant 64 : index
    %c0_38 = arith.constant 0 : index
    %36 = vector.load %arg17[%c64, %c0_38] : memref<72x64xf32, #tpu.memory_space<vmem>>, vector<8x64xf32>
    tpu.vector_store %arg17[%c64, %c0_38], %35 {strides = array<i32>} : memref<72x64xf32, #tpu.memory_space<vmem>>, vector<8x64xf32>,
    %c0_39 = arith.constant 0 : index
    %c0_40 = arith.constant 0 : index
    %37 = vector.load %arg3[%c0_39, %c0_40] : memref<32x72xbf16, #tpu.memory_space<vmem>>, vector<32x72xbf16>
    %c0_41 = arith.constant 0 : index
    %c0_42 = arith.constant 0 : index
    %38 = vector.load %arg17[%c0_41, %c0_42] : memref<72x64xf32, #tpu.memory_space<vmem>>, vector<72x64xf32>
    %39 = arith.truncf %38 : vector<72x64xf32> to vector<72x64xbf16>
    %cst_43 = arith.constant dense<0.000000e+00> : vector<32x64xf32>
    %40 = tpu.matmul %37, %39, %cst_43 {dimension_numbers = #tpu.dot_dimension_numbers<[1], [0], [0], [1], [0, 0, 1, 1], [], []>} : vector<32x72xbf16>, vector<72x64xbf16>, vector<32x64xf32> -> vector<32x64xf32>
    %c0_44 = arith.constant 0 : index
    %c0_45 = arith.constant 0 : index
    %41 = vector.load %arg4[%c0_44, %c0_45] : memref<32x1xf32, #tpu.memory_space<vmem>>, vector<32x1xf32>
    %42 = vector.broadcast %41 : vector<32x1xf32> to vector<32x64xf32>
    %43 = arith.addf %40, %42 : vector<32x64xf32>
    %cst_46 = arith.constant 0.000000e+00 : f32
    %44 = vector.broadcast %cst_46 : f32 to vector<32x64xf32>
    %45 = arith.maximumf %43, %44 : vector<32x64xf32>
    %46 = arith.truncf %45 : vector<32x64xf32> to vector<32x64xbf16>
    %c0_47 = arith.constant 0 : index
    %c0_48 = arith.constant 0 : index
    %c0_49 = arith.constant 0 : index
    %47 = vector.load %arg5[%c0_47, %c0_48, %c0_49] : memref<9x64x16xbf16, #tpu.memory_space<vmem>>, vector<1x64x16xbf16>
    %48 = vector.shape_cast %47 : vector<1x64x16xbf16> to vector<64x16xbf16>
    %cst_50 = arith.constant dense<0.000000e+00> : vector<32x16xf32>
    %49 = tpu.matmul %46, %48, %cst_50 {dimension_numbers = #tpu.dot_dimension_numbers<[1], [0], [0], [1], [0, 0, 1, 1], [], []>} : vector<32x64xbf16>, vector<64x16xbf16>, vector<32x16xf32> -> vector<32x16xf32>
    %c0_51 = arith.constant 0 : index
    %c0_52 = arith.constant 0 : index
    %50 = vector.load %arg18[%c0_51, %c0_52] : memref<288x16xf32, #tpu.memory_space<vmem>>, vector<32x16xf32>
    tpu.vector_store %arg18[%c0_51, %c0_52], %49 {strides = array<i32>} : memref<288x16xf32, #tpu.memory_space<vmem>>, vector<32x16xf32>,
    %c1_53 = arith.constant 1 : index
    %c0_54 = arith.constant 0 : index
    %c0_55 = arith.constant 0 : index
    %51 = vector.load %arg5[%c1_53, %c0_54, %c0_55] : memref<9x64x16xbf16, #tpu.memory_space<vmem>>, vector<1x64x16xbf16>
    %52 = vector.shape_cast %51 : vector<1x64x16xbf16> to vector<64x16xbf16>
    %cst_56 = arith.constant dense<0.000000e+00> : vector<32x16xf32>
    %53 = tpu.matmul %46, %52, %cst_56 {dimension_numbers = #tpu.dot_dimension_numbers<[1], [0], [0], [1], [0, 0, 1, 1], [], []>} : vector<32x64xbf16>, vector<64x16xbf16>, vector<32x16xf32> -> vector<32x16xf32>
    %c32_57 = arith.constant 32 : index
    %c0_58 = arith.constant 0 : index
    %54 = vector.load %arg18[%c32_57, %c0_58] : memref<288x16xf32, #tpu.memory_space<vmem>>, vector<32x16xf32>
    tpu.vector_store %arg18[%c32_57, %c0_58], %53 {strides = array<i32>} : memref<288x16xf32, #tpu.memory_space<vmem>>, vector<32x16xf32>,
    %c2_59 = arith.constant 2 : index
    %c0_60 = arith.constant 0 : index
    %c0_61 = arith.constant 0 : index
    %55 = vector.load %arg5[%c2_59, %c0_60, %c0_61] : memref<9x64x16xbf16, #tpu.memory_space<vmem>>, vector<1x64x16xbf16>
    %56 = vector.shape_cast %55 : vector<1x64x16xbf16> to vector<64x16xbf16>
    %cst_62 = arith.constant dense<0.000000e+00> : vector<32x16xf32>
    %57 = tpu.matmul %46, %56, %cst_62 {dimension_numbers = #tpu.dot_dimension_numbers<[1], [0], [0], [1], [0, 0, 1, 1], [], []>} : vector<32x64xbf16>, vector<64x16xbf16>, vector<32x16xf32> -> vector<32x16xf32>
    %c64_63 = arith.constant 64 : index
    %c0_64 = arith.constant 0 : index
    %58 = vector.load %arg18[%c64_63, %c0_64] : memref<288x16xf32, #tpu.memory_space<vmem>>, vector<32x16xf32>
    tpu.vector_store %arg18[%c64_63, %c0_64], %57 {strides = array<i32>} : memref<288x16xf32, #tpu.memory_space<vmem>>, vector<32x16xf32>,
    %c3_65 = arith.constant 3 : index
    %c0_66 = arith.constant 0 : index
    %c0_67 = arith.constant 0 : index
    %59 = vector.load %arg5[%c3_65, %c0_66, %c0_67] : memref<9x64x16xbf16, #tpu.memory_space<vmem>>, vector<1x64x16xbf16>
    %60 = vector.shape_cast %59 : vector<1x64x16xbf16> to vector<64x16xbf16>
    %cst_68 = arith.constant dense<0.000000e+00> : vector<32x16xf32>
    %61 = tpu.matmul %46, %60, %cst_68 {dimension_numbers = #tpu.dot_dimension_numbers<[1], [0], [0], [1], [0, 0, 1, 1], [], []>} : vector<32x64xbf16>, vector<64x16xbf16>, vector<32x16xf32> -> vector<32x16xf32>
    %c96 = arith.constant 96 : index
    %c0_69 = arith.constant 0 : index
    %62 = vector.load %arg18[%c96, %c0_69] : memref<288x16xf32, #tpu.memory_space<vmem>>, vector<32x16xf32>
    tpu.vector_store %arg18[%c96, %c0_69], %61 {strides = array<i32>} : memref<288x16xf32, #tpu.memory_space<vmem>>, vector<32x16xf32>,
    %c4_70 = arith.constant 4 : index
    %c0_71 = arith.constant 0 : index
    %c0_72 = arith.constant 0 : index
    %63 = vector.load %arg5[%c4_70, %c0_71, %c0_72] : memref<9x64x16xbf16, #tpu.memory_space<vmem>>, vector<1x64x16xbf16>
    %64 = vector.shape_cast %63 : vector<1x64x16xbf16> to vector<64x16xbf16>
    %cst_73 = arith.constant dense<0.000000e+00> : vector<32x16xf32>
    %65 = tpu.matmul %46, %64, %cst_73 {dimension_numbers = #tpu.dot_dimension_numbers<[1], [0], [0], [1], [0, 0, 1, 1], [], []>} : vector<32x64xbf16>, vector<64x16xbf16>, vector<32x16xf32> -> vector<32x16xf32>
    %c128 = arith.constant 128 : index
    %c0_74 = arith.constant 0 : index
    %66 = vector.load %arg18[%c128, %c0_74] : memref<288x16xf32, #tpu.memory_space<vmem>>, vector<32x16xf32>
    tpu.vector_store %arg18[%c128, %c0_74], %65 {strides = array<i32>} : memref<288x16xf32, #tpu.memory_space<vmem>>, vector<32x16xf32>,
    %c5_75 = arith.constant 5 : index
    %c0_76 = arith.constant 0 : index
    %c0_77 = arith.constant 0 : index
    %67 = vector.load %arg5[%c5_75, %c0_76, %c0_77] : memref<9x64x16xbf16, #tpu.memory_space<vmem>>, vector<1x64x16xbf16>
    %68 = vector.shape_cast %67 : vector<1x64x16xbf16> to vector<64x16xbf16>
    %cst_78 = arith.constant dense<0.000000e+00> : vector<32x16xf32>
    %69 = tpu.matmul %46, %68, %cst_78 {dimension_numbers = #tpu.dot_dimension_numbers<[1], [0], [0], [1], [0, 0, 1, 1], [], []>} : vector<32x64xbf16>, vector<64x16xbf16>, vector<32x16xf32> -> vector<32x16xf32>
    %c160 = arith.constant 160 : index
    %c0_79 = arith.constant 0 : index
    %70 = vector.load %arg18[%c160, %c0_79] : memref<288x16xf32, #tpu.memory_space<vmem>>, vector<32x16xf32>
    tpu.vector_store %arg18[%c160, %c0_79], %69 {strides = array<i32>} : memref<288x16xf32, #tpu.memory_space<vmem>>, vector<32x16xf32>,
    %c6_80 = arith.constant 6 : index
    %c0_81 = arith.constant 0 : index
    %c0_82 = arith.constant 0 : index
    %71 = vector.load %arg5[%c6_80, %c0_81, %c0_82] : memref<9x64x16xbf16, #tpu.memory_space<vmem>>, vector<1x64x16xbf16>
    %72 = vector.shape_cast %71 : vector<1x64x16xbf16> to vector<64x16xbf16>
    %cst_83 = arith.constant dense<0.000000e+00> : vector<32x16xf32>
    %73 = tpu.matmul %46, %72, %cst_83 {dimension_numbers = #tpu.dot_dimension_numbers<[1], [0], [0], [1], [0, 0, 1, 1], [], []>} : vector<32x64xbf16>, vector<64x16xbf16>, vector<32x16xf32> -> vector<32x16xf32>
    %c192 = arith.constant 192 : index
    %c0_84 = arith.constant 0 : index
    %74 = vector.load %arg18[%c192, %c0_84] : memref<288x16xf32, #tpu.memory_space<vmem>>, vector<32x16xf32>
    tpu.vector_store %arg18[%c192, %c0_84], %73 {strides = array<i32>} : memref<288x16xf32, #tpu.memory_space<vmem>>, vector<32x16xf32>,
    %c7_85 = arith.constant 7 : index
    %c0_86 = arith.constant 0 : index
    %c0_87 = arith.constant 0 : index
    %75 = vector.load %arg5[%c7_85, %c0_86, %c0_87] : memref<9x64x16xbf16, #tpu.memory_space<vmem>>, vector<1x64x16xbf16>
    %76 = vector.shape_cast %75 : vector<1x64x16xbf16> to vector<64x16xbf16>
    %cst_88 = arith.constant dense<0.000000e+00> : vector<32x16xf32>
    %77 = tpu.matmul %46, %76, %cst_88 {dimension_numbers = #tpu.dot_dimension_numbers<[1], [0], [0], [1], [0, 0, 1, 1], [], []>} : vector<32x64xbf16>, vector<64x16xbf16>, vector<32x16xf32> -> vector<32x16xf32>
    %c224 = arith.constant 224 : index
    %c0_89 = arith.constant 0 : index
    %78 = vector.load %arg18[%c224, %c0_89] : memref<288x16xf32, #tpu.memory_space<vmem>>, vector<32x16xf32>
    tpu.vector_store %arg18[%c224, %c0_89], %77 {strides = array<i32>} : memref<288x16xf32, #tpu.memory_space<vmem>>, vector<32x16xf32>,
    %c8_90 = arith.constant 8 : index
    %c0_91 = arith.constant 0 : index
    %c0_92 = arith.constant 0 : index
    %79 = vector.load %arg5[%c8_90, %c0_91, %c0_92] : memref<9x64x16xbf16, #tpu.memory_space<vmem>>, vector<1x64x16xbf16>
    %80 = vector.shape_cast %79 : vector<1x64x16xbf16> to vector<64x16xbf16>
    %cst_93 = arith.constant dense<0.000000e+00> : vector<32x16xf32>
    %81 = tpu.matmul %46, %80, %cst_93 {dimension_numbers = #tpu.dot_dimension_numbers<[1], [0], [0], [1], [0, 0, 1, 1], [], []>} : vector<32x64xbf16>, vector<64x16xbf16>, vector<32x16xf32> -> vector<32x16xf32>
    %c256 = arith.constant 256 : index
    %c0_94 = arith.constant 0 : index
    %82 = vector.load %arg18[%c256, %c0_94] : memref<288x16xf32, #tpu.memory_space<vmem>>, vector<32x16xf32>
    tpu.vector_store %arg18[%c256, %c0_94], %81 {strides = array<i32>} : memref<288x16xf32, #tpu.memory_space<vmem>>, vector<32x16xf32>,
    %c0_95 = arith.constant 0 : index
    %c0_96 = arith.constant 0 : index
    %83 = vector.load %arg6[%c0_95, %c0_96] : memref<64x288xbf16, #tpu.memory_space<vmem>>, vector<64x288xbf16>
    %c0_97 = arith.constant 0 : index
    %c0_98 = arith.constant 0 : index
    %84 = vector.load %arg18[%c0_97, %c0_98] : memref<288x16xf32, #tpu.memory_space<vmem>>, vector<288x16xf32>
    %85 = arith.truncf %84 : vector<288x16xf32> to vector<288x16xbf16>
    %cst_99 = arith.constant dense<0.000000e+00> : vector<64x16xf32>
    %86 = tpu.matmul %83, %85, %cst_99 {dimension_numbers = #tpu.dot_dimension_numbers<[1], [0], [0], [1], [0, 0, 1, 1], [], []>} : vector<64x288xbf16>, vector<288x16xbf16>, vector<64x16xf32> -> vector<64x16xf32>
    %c0_100 = arith.constant 0 : index
    %c0_101 = arith.constant 0 : index
    %87 = vector.load %arg7[%c0_100, %c0_101] : memref<64x1xf32, #tpu.memory_space<vmem>>, vector<64x1xf32>
    %88 = vector.broadcast %87 : vector<64x1xf32> to vector<64x16xf32>
    %89 = arith.addf %86, %88 : vector<64x16xf32>
    %cst_102 = arith.constant 0.000000e+00 : f32
    %90 = vector.broadcast %cst_102 : f32 to vector<64x16xf32>
    %91 = arith.maximumf %89, %90 : vector<64x16xf32>
    %c0_103 = arith.constant 0 : index
    %c0_104 = arith.constant 0 : index
    %92 = vector.load %arg15[%c0_103, %c0_104] : memref<64x16xf32, #tpu.memory_space<vmem>>, vector<64x16xf32>
    tpu.vector_store %arg15[%c0_103, %c0_104], %91 {strides = array<i32>} : memref<64x16xf32, #tpu.memory_space<vmem>>, vector<64x16xf32>,
    %93 = arith.truncf %91 : vector<64x16xf32> to vector<64x16xbf16>
    %c0_105 = arith.constant 0 : index
    %c0_106 = arith.constant 0 : index
    %c0_107 = arith.constant 0 : index
    %94 = vector.load %arg8[%c0_105, %c0_106, %c0_107] : memref<3x16x16xbf16, #tpu.memory_space<vmem>>, vector<1x16x16xbf16>
    %95 = vector.shape_cast %94 : vector<1x16x16xbf16> to vector<16x16xbf16>
    %cst_108 = arith.constant dense<0.000000e+00> : vector<64x16xf32>
    %96 = tpu.matmul %93, %95, %cst_108 {dimension_numbers = #tpu.dot_dimension_numbers<[1], [0], [0], [1], [0, 0, 1, 1], [], []>} : vector<64x16xbf16>, vector<16x16xbf16>, vector<64x16xf32> -> vector<64x16xf32>
    %97 = arith.truncf %96 : vector<64x16xf32> to vector<64x16xbf16>
    %c1_109 = arith.constant 1 : index
    %c0_110 = arith.constant 0 : index
    %c0_111 = arith.constant 0 : index
    %98 = vector.load %arg8[%c1_109, %c0_110, %c0_111] : memref<3x16x16xbf16, #tpu.memory_space<vmem>>, vector<1x16x16xbf16>
    %99 = vector.shape_cast %98 : vector<1x16x16xbf16> to vector<16x16xbf16>
    %cst_112 = arith.constant dense<0.000000e+00> : vector<64x16xf32>
    %100 = tpu.matmul %93, %99, %cst_112 {dimension_numbers = #tpu.dot_dimension_numbers<[1], [0], [0], [1], [0, 0, 1, 1], [], []>} : vector<64x16xbf16>, vector<16x16xbf16>, vector<64x16xf32> -> vector<64x16xf32>
    %101 = arith.truncf %100 : vector<64x16xf32> to vector<64x16xbf16>
    %c2_113 = arith.constant 2 : index
    %c0_114 = arith.constant 0 : index
    %c0_115 = arith.constant 0 : index
    %102 = vector.load %arg8[%c2_113, %c0_114, %c0_115] : memref<3x16x16xbf16, #tpu.memory_space<vmem>>, vector<1x16x16xbf16>
    %103 = vector.shape_cast %102 : vector<1x16x16xbf16> to vector<16x16xbf16>
    %cst_116 = arith.constant dense<0.000000e+00> : vector<64x16xf32>
    %104 = tpu.matmul %93, %103, %cst_116 {dimension_numbers = #tpu.dot_dimension_numbers<[1], [0], [0], [1], [0, 0, 1, 1], [], []>} : vector<64x16xbf16>, vector<16x16xbf16>, vector<64x16xf32> -> vector<64x16xf32>
    %105 = arith.truncf %104 : vector<64x16xf32> to vector<64x16xbf16>
    %c1_117 = arith.constant 1 : index
    %c1_118 = arith.constant 1 : index
    %c0_119 = arith.constant 0 : index
    %c0_120 = arith.constant 0 : index
    %106 = vector.load %arg9[%c1_117, %c1_118, %c0_119, %c0_120] : memref<3x3x32x64xbf16, #tpu.memory_space<vmem>>, vector<1x1x32x64xbf16>
    %107 = vector.shape_cast %106 : vector<1x1x32x64xbf16> to vector<32x64xbf16>
    %cst_121 = arith.constant dense<0.000000e+00> : vector<32x16xf32>
    %108 = tpu.matmul %107, %93, %cst_121 {dimension_numbers = #tpu.dot_dimension_numbers<[1], [0], [0], [1], [0, 0, 1, 1], [], []>} : vector<32x64xbf16>, vector<64x16xbf16>, vector<32x16xf32> -> vector<32x16xf32>
    %c1_122 = arith.constant 1 : index
    %c2_123 = arith.constant 2 : index
    %c0_124 = arith.constant 0 : index
    %c0_125 = arith.constant 0 : index
    %109 = vector.load %arg9[%c1_122, %c2_123, %c0_124, %c0_125] : memref<3x3x32x64xbf16, #tpu.memory_space<vmem>>, vector<1x1x32x64xbf16>
    %110 = vector.shape_cast %109 : vector<1x1x32x64xbf16> to vector<32x64xbf16>
    %cst_126 = arith.constant dense<0.000000e+00> : vector<32x16xf32>
    %111 = tpu.matmul %110, %93, %cst_126 {dimension_numbers = #tpu.dot_dimension_numbers<[1], [0], [0], [1], [0, 0, 1, 1], [], []>} : vector<32x64xbf16>, vector<64x16xbf16>, vector<32x16xf32> -> vector<32x16xf32>
    %c1_127 = arith.constant 1 : index
    %c0_128 = arith.constant 0 : index
    %c0_129 = arith.constant 0 : index
    %c0_130 = arith.constant 0 : index
    %112 = vector.load %arg9[%c1_127, %c0_128, %c0_129, %c0_130] : memref<3x3x32x64xbf16, #tpu.memory_space<vmem>>, vector<1x1x32x64xbf16>
    %113 = vector.shape_cast %112 : vector<1x1x32x64xbf16> to vector<32x64xbf16>
    %cst_131 = arith.constant dense<0.000000e+00> : vector<32x16xf32>
    %114 = tpu.matmul %113, %97, %cst_131 {dimension_numbers = #tpu.dot_dimension_numbers<[1], [0], [0], [1], [0, 0, 1, 1], [], []>} : vector<32x64xbf16>, vector<64x16xbf16>, vector<32x16xf32> -> vector<32x16xf32>
    %115 = arith.addf %111, %114 : vector<32x16xf32>
    %c2_132 = arith.constant 2 : index
    %c1_133 = arith.constant 1 : index
    %c0_134 = arith.constant 0 : index
    %c0_135 = arith.constant 0 : index
    %116 = vector.load %arg9[%c2_132, %c1_133, %c0_134, %c0_135] : memref<3x3x32x64xbf16, #tpu.memory_space<vmem>>, vector<1x1x32x64xbf16>
    %117 = vector.shape_cast %116 : vector<1x1x32x64xbf16> to vector<32x64xbf16>
    %cst_136 = arith.constant dense<0.000000e+00> : vector<32x16xf32>
    %118 = tpu.matmul %117, %93, %cst_136 {dimension_numbers = #tpu.dot_dimension_numbers<[1], [0], [0], [1], [0, 0, 1, 1], [], []>} : vector<32x64xbf16>, vector<64x16xbf16>, vector<32x16xf32> -> vector<32x16xf32>
    %c0_137 = arith.constant 0 : index
    %c1_138 = arith.constant 1 : index
    %c0_139 = arith.constant 0 : index
    %c0_140 = arith.constant 0 : index
    %119 = vector.load %arg9[%c0_137, %c1_138, %c0_139, %c0_140] : memref<3x3x32x64xbf16, #tpu.memory_space<vmem>>, vector<1x1x32x64xbf16>
    %120 = vector.shape_cast %119 : vector<1x1x32x64xbf16> to vector<32x64xbf16>
    %cst_141 = arith.constant dense<0.000000e+00> : vector<32x16xf32>
    %121 = tpu.matmul %120, %101, %cst_141 {dimension_numbers = #tpu.dot_dimension_numbers<[1], [0], [0], [1], [0, 0, 1, 1], [], []>} : vector<32x64xbf16>, vector<64x16xbf16>, vector<32x16xf32> -> vector<32x16xf32>
    %122 = arith.addf %118, %121 : vector<32x16xf32>
    %c2_142 = arith.constant 2 : index
    %c2_143 = arith.constant 2 : index
    %c0_144 = arith.constant 0 : index
    %c0_145 = arith.constant 0 : index
    %123 = vector.load %arg9[%c2_142, %c2_143, %c0_144, %c0_145] : memref<3x3x32x64xbf16, #tpu.memory_space<vmem>>, vector<1x1x32x64xbf16>
    %124 = vector.shape_cast %123 : vector<1x1x32x64xbf16> to vector<32x64xbf16>
    %cst_146 = arith.constant dense<0.000000e+00> : vector<32x16xf32>
    %125 = tpu.matmul %124, %93, %cst_146 {dimension_numbers = #tpu.dot_dimension_numbers<[1], [0], [0], [1], [0, 0, 1, 1], [], []>} : vector<32x64xbf16>, vector<64x16xbf16>, vector<32x16xf32> -> vector<32x16xf32>
    %c2_147 = arith.constant 2 : index
    %c0_148 = arith.constant 0 : index
    %c0_149 = arith.constant 0 : index
    %c0_150 = arith.constant 0 : index
    %126 = vector.load %arg9[%c2_147, %c0_148, %c0_149, %c0_150] : memref<3x3x32x64xbf16, #tpu.memory_space<vmem>>, vector<1x1x32x64xbf16>
    %127 = vector.shape_cast %126 : vector<1x1x32x64xbf16> to vector<32x64xbf16>
    %cst_151 = arith.constant dense<0.000000e+00> : vector<32x16xf32>
    %128 = tpu.matmul %127, %97, %cst_151 {dimension_numbers = #tpu.dot_dimension_numbers<[1], [0], [0], [1], [0, 0, 1, 1], [], []>} : vector<32x64xbf16>, vector<64x16xbf16>, vector<32x16xf32> -> vector<32x16xf32>
    %129 = arith.addf %125, %128 : vector<32x16xf32>
    %c0_152 = arith.constant 0 : index
    %c2_153 = arith.constant 2 : index
    %c0_154 = arith.constant 0 : index
    %c0_155 = arith.constant 0 : index
    %130 = vector.load %arg9[%c0_152, %c2_153, %c0_154, %c0_155] : memref<3x3x32x64xbf16, #tpu.memory_space<vmem>>, vector<1x1x32x64xbf16>
    %131 = vector.shape_cast %130 : vector<1x1x32x64xbf16> to vector<32x64xbf16>
    %cst_156 = arith.constant dense<0.000000e+00> : vector<32x16xf32>
    %132 = tpu.matmul %131, %101, %cst_156 {dimension_numbers = #tpu.dot_dimension_numbers<[1], [0], [0], [1], [0, 0, 1, 1], [], []>} : vector<32x64xbf16>, vector<64x16xbf16>, vector<32x16xf32> -> vector<32x16xf32>
    %133 = arith.addf %129, %132 : vector<32x16xf32>
    %c0_157 = arith.constant 0 : index
    %c0_158 = arith.constant 0 : index
    %c0_159 = arith.constant 0 : index
    %c0_160 = arith.constant 0 : index
    %134 = vector.load %arg9[%c0_157, %c0_158, %c0_159, %c0_160] : memref<3x3x32x64xbf16, #tpu.memory_space<vmem>>, vector<1x1x32x64xbf16>
    %135 = vector.shape_cast %134 : vector<1x1x32x64xbf16> to vector<32x64xbf16>
    %cst_161 = arith.constant dense<0.000000e+00> : vector<32x16xf32>
    %136 = tpu.matmul %135, %105, %cst_161 {dimension_numbers = #tpu.dot_dimension_numbers<[1], [0], [0], [1], [0, 0, 1, 1], [], []>} : vector<32x64xbf16>, vector<64x16xbf16>, vector<32x16xf32> -> vector<32x16xf32>
    %137 = arith.addf %133, %136 : vector<32x16xf32>
    %c0_162 = arith.constant 0 : index
    %c0_163 = arith.constant 0 : index
    %138 = vector.load %arg10[%c0_162, %c0_163] : memref<32x1xf32, #tpu.memory_space<vmem>>, vector<32x1xf32>
    %139 = vector.broadcast %138 : vector<32x1xf32> to vector<32x16xf32>
    %140 = arith.addf %108, %139 : vector<32x16xf32>
    %cst_164 = arith.constant 0.000000e+00 : f32
    %141 = vector.broadcast %cst_164 : f32 to vector<32x16xf32>
    %142 = arith.maximumf %140, %141 : vector<32x16xf32>
    %143 = arith.truncf %142 : vector<32x16xf32> to vector<32x16xbf16>
    %c0_165 = arith.constant 0 : index
    %c0_166 = arith.constant 0 : index
    %144 = vector.load %arg10[%c0_165, %c0_166] : memref<32x1xf32, #tpu.memory_space<vmem>>, vector<32x1xf32>
    %145 = vector.broadcast %144 : vector<32x1xf32> to vector<32x16xf32>
    %146 = arith.addf %115, %145 : vector<32x16xf32>
    %cst_167 = arith.constant 0.000000e+00 : f32
    %147 = vector.broadcast %cst_167 : f32 to vector<32x16xf32>
    %148 = arith.maximumf %146, %147 : vector<32x16xf32>
    %149 = arith.truncf %148 : vector<32x16xf32> to vector<32x16xbf16>
    %c0_168 = arith.constant 0 : index
    %c0_169 = arith.constant 0 : index
    %150 = vector.load %arg10[%c0_168, %c0_169] : memref<32x1xf32, #tpu.memory_space<vmem>>, vector<32x1xf32>
    %151 = vector.broadcast %150 : vector<32x1xf32> to vector<32x16xf32>
    %152 = arith.addf %122, %151 : vector<32x16xf32>
    %cst_170 = arith.constant 0.000000e+00 : f32
    %153 = vector.broadcast %cst_170 : f32 to vector<32x16xf32>
    %154 = arith.maximumf %152, %153 : vector<32x16xf32>
    %155 = arith.truncf %154 : vector<32x16xf32> to vector<32x16xbf16>
    %c0_171 = arith.constant 0 : index
    %c0_172 = arith.constant 0 : index
    %156 = vector.load %arg10[%c0_171, %c0_172] : memref<32x1xf32, #tpu.memory_space<vmem>>, vector<32x1xf32>
    %157 = vector.broadcast %156 : vector<32x1xf32> to vector<32x16xf32>
    %158 = arith.addf %137, %157 : vector<32x16xf32>
    %cst_173 = arith.constant 0.000000e+00 : f32
    %159 = vector.broadcast %cst_173 : f32 to vector<32x16xf32>
    %160 = arith.maximumf %158, %159 : vector<32x16xf32>
    %161 = arith.truncf %160 : vector<32x16xf32> to vector<32x16xbf16>
    %c0_174 = arith.constant 0 : index
    %c0_175 = arith.constant 0 : index
    %c0_176 = arith.constant 0 : index
    %162 = vector.load %arg11[%c0_174, %c0_175, %c0_176] : memref<4x16x256xbf16, #tpu.memory_space<vmem>>, vector<1x16x256xbf16>
    %163 = vector.shape_cast %162 : vector<1x16x256xbf16> to vector<16x256xbf16>
    %cst_177 = arith.constant dense<0.000000e+00> : vector<32x256xf32>
    %164 = tpu.matmul %143, %163, %cst_177 {dimension_numbers = #tpu.dot_dimension_numbers<[1], [0], [0], [1], [0, 0, 1, 1], [], []>} : vector<32x16xbf16>, vector<16x256xbf16>, vector<32x256xf32> -> vector<32x256xf32>
    %c1_178 = arith.constant 1 : index
    %c0_179 = arith.constant 0 : index
    %c0_180 = arith.constant 0 : index
    %165 = vector.load %arg11[%c1_178, %c0_179, %c0_180] : memref<4x16x256xbf16, #tpu.memory_space<vmem>>, vector<1x16x256xbf16>
    %166 = vector.shape_cast %165 : vector<1x16x256xbf16> to vector<16x256xbf16>
    %cst_181 = arith.constant dense<0.000000e+00> : vector<32x256xf32>
    %167 = tpu.matmul %149, %166, %cst_181 {dimension_numbers = #tpu.dot_dimension_numbers<[1], [0], [0], [1], [0, 0, 1, 1], [], []>} : vector<32x16xbf16>, vector<16x256xbf16>, vector<32x256xf32> -> vector<32x256xf32>
    %168 = arith.addf %164, %167 : vector<32x256xf32>
    %c2_182 = arith.constant 2 : index
    %c0_183 = arith.constant 0 : index
    %c0_184 = arith.constant 0 : index
    %169 = vector.load %arg11[%c2_182, %c0_183, %c0_184] : memref<4x16x256xbf16, #tpu.memory_space<vmem>>, vector<1x16x256xbf16>
    %170 = vector.shape_cast %169 : vector<1x16x256xbf16> to vector<16x256xbf16>
    %cst_185 = arith.constant dense<0.000000e+00> : vector<32x256xf32>
    %171 = tpu.matmul %155, %170, %cst_185 {dimension_numbers = #tpu.dot_dimension_numbers<[1], [0], [0], [1], [0, 0, 1, 1], [], []>} : vector<32x16xbf16>, vector<16x256xbf16>, vector<32x256xf32> -> vector<32x256xf32>
    %172 = arith.addf %168, %171 : vector<32x256xf32>
    %c3_186 = arith.constant 3 : index
    %c0_187 = arith.constant 0 : index
    %c0_188 = arith.constant 0 : index
    %173 = vector.load %arg11[%c3_186, %c0_187, %c0_188] : memref<4x16x256xbf16, #tpu.memory_space<vmem>>, vector<1x16x256xbf16>
    %174 = vector.shape_cast %173 : vector<1x16x256xbf16> to vector<16x256xbf16>
    %cst_189 = arith.constant dense<0.000000e+00> : vector<32x256xf32>
    %175 = tpu.matmul %161, %174, %cst_189 {dimension_numbers = #tpu.dot_dimension_numbers<[1], [0], [0], [1], [0, 0, 1, 1], [], []>} : vector<32x16xbf16>, vector<16x256xbf16>, vector<32x256xf32> -> vector<32x256xf32>
    %176 = arith.addf %172, %175 : vector<32x256xf32>
    %177 = arith.truncf %176 : vector<32x256xf32> to vector<32x256xbf16>
    %178 = vector.extract_strided_slice %177 {offsets = [0, 0], sizes = [32, 64], strides = [1, 1]} : vector<32x256xbf16> to vector<32x64xbf16>
    %179 = vector.extract_strided_slice %177 {offsets = [0, 64], sizes = [32, 64], strides = [1, 1]} : vector<32x256xbf16> to vector<32x64xbf16>
    %180 = vector.extract_strided_slice %177 {offsets = [0, 128], sizes = [32, 64], strides = [1, 1]} : vector<32x256xbf16> to vector<32x64xbf16>
    %181 = vector.extract_strided_slice %177 {offsets = [0, 192], sizes = [32, 64], strides = [1, 1]} : vector<32x256xbf16> to vector<32x64xbf16>
    %c1_190 = arith.constant 1 : index
    %c1_191 = arith.constant 1 : index
    %c0_192 = arith.constant 0 : index
    %c0_193 = arith.constant 0 : index
    %182 = vector.load %arg12[%c1_190, %c1_191, %c0_192, %c0_193] : memref<3x3x8x32xbf16, #tpu.memory_space<vmem>>, vector<1x1x8x32xbf16>
    %183 = vector.shape_cast %182 : vector<1x1x8x32xbf16> to vector<8x32xbf16>
    %cst_194 = arith.constant dense<0.000000e+00> : vector<8x64xf32>
    %184 = tpu.matmul %183, %178, %cst_194 {dimension_numbers = #tpu.dot_dimension_numbers<[1], [0], [0], [1], [0, 0, 1, 1], [], []>} : vector<8x32xbf16>, vector<32x64xbf16>, vector<8x64xf32> -> vector<8x64xf32>
    %c1_195 = arith.constant 1 : index
    %c2_196 = arith.constant 2 : index
    %c0_197 = arith.constant 0 : index
    %c0_198 = arith.constant 0 : index
    %185 = vector.load %arg12[%c1_195, %c2_196, %c0_197, %c0_198] : memref<3x3x8x32xbf16, #tpu.memory_space<vmem>>, vector<1x1x8x32xbf16>
    %186 = vector.shape_cast %185 : vector<1x1x8x32xbf16> to vector<8x32xbf16>
    %cst_199 = arith.constant dense<0.000000e+00> : vector<8x64xf32>
    %187 = tpu.matmul %186, %178, %cst_199 {dimension_numbers = #tpu.dot_dimension_numbers<[1], [0], [0], [1], [0, 0, 1, 1], [], []>} : vector<8x32xbf16>, vector<32x64xbf16>, vector<8x64xf32> -> vector<8x64xf32>
    %c1_200 = arith.constant 1 : index
    %c0_201 = arith.constant 0 : index
    %c0_202 = arith.constant 0 : index
    %c0_203 = arith.constant 0 : index
    %188 = vector.load %arg12[%c1_200, %c0_201, %c0_202, %c0_203] : memref<3x3x8x32xbf16, #tpu.memory_space<vmem>>, vector<1x1x8x32xbf16>
    %189 = vector.shape_cast %188 : vector<1x1x8x32xbf16> to vector<8x32xbf16>
    %cst_204 = arith.constant dense<0.000000e+00> : vector<8x64xf32>
    %190 = tpu.matmul %189, %179, %cst_204 {dimension_numbers = #tpu.dot_dimension_numbers<[1], [0], [0], [1], [0, 0, 1, 1], [], []>} : vector<8x32xbf16>, vector<32x64xbf16>, vector<8x64xf32> -> vector<8x64xf32>
    %191 = arith.addf %187, %190 : vector<8x64xf32>
    %c2_205 = arith.constant 2 : index
    %c1_206 = arith.constant 1 : index
    %c0_207 = arith.constant 0 : index
    %c0_208 = arith.constant 0 : index
    %192 = vector.load %arg12[%c2_205, %c1_206, %c0_207, %c0_208] : memref<3x3x8x32xbf16, #tpu.memory_space<vmem>>, vector<1x1x8x32xbf16>
    %193 = vector.shape_cast %192 : vector<1x1x8x32xbf16> to vector<8x32xbf16>
    %cst_209 = arith.constant dense<0.000000e+00> : vector<8x64xf32>
    %194 = tpu.matmul %193, %178, %cst_209 {dimension_numbers = #tpu.dot_dimension_numbers<[1], [0], [0], [1], [0, 0, 1, 1], [], []>} : vector<8x32xbf16>, vector<32x64xbf16>, vector<8x64xf32> -> vector<8x64xf32>
    %c0_210 = arith.constant 0 : index
    %c1_211 = arith.constant 1 : index
    %c0_212 = arith.constant 0 : index
    %c0_213 = arith.constant 0 : index
    %195 = vector.load %arg12[%c0_210, %c1_211, %c0_212, %c0_213] : memref<3x3x8x32xbf16, #tpu.memory_space<vmem>>, vector<1x1x8x32xbf16>
    %196 = vector.shape_cast %195 : vector<1x1x8x32xbf16> to vector<8x32xbf16>
    %cst_214 = arith.constant dense<0.000000e+00> : vector<8x64xf32>
    %197 = tpu.matmul %196, %180, %cst_214 {dimension_numbers = #tpu.dot_dimension_numbers<[1], [0], [0], [1], [0, 0, 1, 1], [], []>} : vector<8x32xbf16>, vector<32x64xbf16>, vector<8x64xf32> -> vector<8x64xf32>
    %198 = arith.addf %194, %197 : vector<8x64xf32>
    %c2_215 = arith.constant 2 : index
    %c2_216 = arith.constant 2 : index
    %c0_217 = arith.constant 0 : index
    %c0_218 = arith.constant 0 : index
    %199 = vector.load %arg12[%c2_215, %c2_216, %c0_217, %c0_218] : memref<3x3x8x32xbf16, #tpu.memory_space<vmem>>, vector<1x1x8x32xbf16>
    %200 = vector.shape_cast %199 : vector<1x1x8x32xbf16> to vector<8x32xbf16>
    %cst_219 = arith.constant dense<0.000000e+00> : vector<8x64xf32>
    %201 = tpu.matmul %200, %178, %cst_219 {dimension_numbers = #tpu.dot_dimension_numbers<[1], [0], [0], [1], [0, 0, 1, 1], [], []>} : vector<8x32xbf16>, vector<32x64xbf16>, vector<8x64xf32> -> vector<8x64xf32>
    %c2_220 = arith.constant 2 : index
    %c0_221 = arith.constant 0 : index
    %c0_222 = arith.constant 0 : index
    %c0_223 = arith.constant 0 : index
    %202 = vector.load %arg12[%c2_220, %c0_221, %c0_222, %c0_223] : memref<3x3x8x32xbf16, #tpu.memory_space<vmem>>, vector<1x1x8x32xbf16>
    %203 = vector.shape_cast %202 : vector<1x1x8x32xbf16> to vector<8x32xbf16>
    %cst_224 = arith.constant dense<0.000000e+00> : vector<8x64xf32>
    %204 = tpu.matmul %203, %179, %cst_224 {dimension_numbers = #tpu.dot_dimension_numbers<[1], [0], [0], [1], [0, 0, 1, 1], [], []>} : vector<8x32xbf16>, vector<32x64xbf16>, vector<8x64xf32> -> vector<8x64xf32>
    %205 = arith.addf %201, %204 : vector<8x64xf32>
    %c0_225 = arith.constant 0 : index
    %c2_226 = arith.constant 2 : index
    %c0_227 = arith.constant 0 : index
    %c0_228 = arith.constant 0 : index
    %206 = vector.load %arg12[%c0_225, %c2_226, %c0_227, %c0_228] : memref<3x3x8x32xbf16, #tpu.memory_space<vmem>>, vector<1x1x8x32xbf16>
    %207 = vector.shape_cast %206 : vector<1x1x8x32xbf16> to vector<8x32xbf16>
    %cst_229 = arith.constant dense<0.000000e+00> : vector<8x64xf32>
    %208 = tpu.matmul %207, %180, %cst_229 {dimension_numbers = #tpu.dot_dimension_numbers<[1], [0], [0], [1], [0, 0, 1, 1], [], []>} : vector<8x32xbf16>, vector<32x64xbf16>, vector<8x64xf32> -> vector<8x64xf32>
    %209 = arith.addf %205, %208 : vector<8x64xf32>
    %c0_230 = arith.constant 0 : index
    %c0_231 = arith.constant 0 : index
    %c0_232 = arith.constant 0 : index
    %c0_233 = arith.constant 0 : index
    %210 = vector.load %arg12[%c0_230, %c0_231, %c0_232, %c0_233] : memref<3x3x8x32xbf16, #tpu.memory_space<vmem>>, vector<1x1x8x32xbf16>
    %211 = vector.shape_cast %210 : vector<1x1x8x32xbf16> to vector<8x32xbf16>
    %cst_234 = arith.constant dense<0.000000e+00> : vector<8x64xf32>
    %212 = tpu.matmul %211, %181, %cst_234 {dimension_numbers = #tpu.dot_dimension_numbers<[1], [0], [0], [1], [0, 0, 1, 1], [], []>} : vector<8x32xbf16>, vector<32x64xbf16>, vector<8x64xf32> -> vector<8x64xf32>
    %213 = arith.addf %209, %212 : vector<8x64xf32>
    %214 = arith.truncf %184 : vector<8x64xf32> to vector<8x64xbf16>
    %c0_235 = arith.constant 0 : index
    %c0_236 = arith.constant 0 : index
    %c0_237 = arith.constant 0 : index
    %215 = vector.load %arg13[%c0_235, %c0_236, %c0_237] : memref<4x64x256xbf16, #tpu.memory_space<vmem>>, vector<1x64x256xbf16>
    %216 = vector.shape_cast %215 : vector<1x64x256xbf16> to vector<64x256xbf16>
    %cst_238 = arith.constant dense<0.000000e+00> : vector<8x256xf32>
    %217 = tpu.matmul %214, %216, %cst_238 {dimension_numbers = #tpu.dot_dimension_numbers<[1], [0], [0], [1], [0, 0, 1, 1], [], []>} : vector<8x64xbf16>, vector<64x256xbf16>, vector<8x256xf32> -> vector<8x256xf32>
    %218 = arith.truncf %191 : vector<8x64xf32> to vector<8x64xbf16>
    %c1_239 = arith.constant 1 : index
    %c0_240 = arith.constant 0 : index
    %c0_241 = arith.constant 0 : index
    %219 = vector.load %arg13[%c1_239, %c0_240, %c0_241] : memref<4x64x256xbf16, #tpu.memory_space<vmem>>, vector<1x64x256xbf16>
    %220 = vector.shape_cast %219 : vector<1x64x256xbf16> to vector<64x256xbf16>
    %cst_242 = arith.constant dense<0.000000e+00> : vector<8x256xf32>
    %221 = tpu.matmul %218, %220, %cst_242 {dimension_numbers = #tpu.dot_dimension_numbers<[1], [0], [0], [1], [0, 0, 1, 1], [], []>} : vector<8x64xbf16>, vector<64x256xbf16>, vector<8x256xf32> -> vector<8x256xf32>
    %222 = arith.addf %217, %221 : vector<8x256xf32>
    %223 = arith.truncf %198 : vector<8x64xf32> to vector<8x64xbf16>
    %c2_243 = arith.constant 2 : index
    %c0_244 = arith.constant 0 : index
    %c0_245 = arith.constant 0 : index
    %224 = vector.load %arg13[%c2_243, %c0_244, %c0_245] : memref<4x64x256xbf16, #tpu.memory_space<vmem>>, vector<1x64x256xbf16>
    %225 = vector.shape_cast %224 : vector<1x64x256xbf16> to vector<64x256xbf16>
    %cst_246 = arith.constant dense<0.000000e+00> : vector<8x256xf32>
    %226 = tpu.matmul %223, %225, %cst_246 {dimension_numbers = #tpu.dot_dimension_numbers<[1], [0], [0], [1], [0, 0, 1, 1], [], []>} : vector<8x64xbf16>, vector<64x256xbf16>, vector<8x256xf32> -> vector<8x256xf32>
    %227 = arith.addf %222, %226 : vector<8x256xf32>
    %228 = arith.truncf %213 : vector<8x64xf32> to vector<8x64xbf16>
    %c3_247 = arith.constant 3 : index
    %c0_248 = arith.constant 0 : index
    %c0_249 = arith.constant 0 : index
    %229 = vector.load %arg13[%c3_247, %c0_248, %c0_249] : memref<4x64x256xbf16, #tpu.memory_space<vmem>>, vector<1x64x256xbf16>
    %230 = vector.shape_cast %229 : vector<1x64x256xbf16> to vector<64x256xbf16>
    %cst_250 = arith.constant dense<0.000000e+00> : vector<8x256xf32>
    %231 = tpu.matmul %228, %230, %cst_250 {dimension_numbers = #tpu.dot_dimension_numbers<[1], [0], [0], [1], [0, 0, 1, 1], [], []>} : vector<8x64xbf16>, vector<64x256xbf16>, vector<8x256xf32> -> vector<8x256xf32>
    %232 = arith.addf %227, %231 : vector<8x256xf32>
    %c0_251 = arith.constant 0 : index
    %c0_252 = arith.constant 0 : index
    %233 = vector.load %arg14[%c0_251, %c0_252] : memref<8x1xf32, #tpu.memory_space<vmem>>, vector<8x1xf32>
    %234 = vector.broadcast %233 : vector<8x1xf32> to vector<8x256xf32>
    %235 = arith.addf %232, %234 : vector<8x256xf32>
    %cst_253 = arith.constant 0.000000e+00 : f32
    %236 = vector.broadcast %cst_253 : f32 to vector<8x256xf32>
    %237 = arith.subf %236, %235 : vector<8x256xf32>
    %238 = math.exp %237 : vector<8x256xf32>
    %cst_254 = arith.constant 1.000000e+00 : f32
    %239 = vector.broadcast %cst_254 : f32 to vector<8x256xf32>
    %240 = arith.addf %239, %238 : vector<8x256xf32>
    %cst_255 = arith.constant 1.000000e+00 : f32
    %241 = vector.broadcast %cst_255 : f32 to vector<8x256xf32>
    %242 = arith.divf %241, %240 : vector<8x256xf32>
    %c0_256 = arith.constant 0 : index
    %c0_257 = arith.constant 0 : index
    %243 = vector.load %arg16[%c0_256, %c0_257] : memref<8x256xf32, #tpu.memory_space<vmem>>, vector<8x256xf32>
    tpu.vector_store %arg16[%c0_256, %c0_257], %242 {strides = array<i32>} : memref<8x256xf32, #tpu.memory_space<vmem>>, vector<8x256xf32>,
    return
  }
  func.func @transform_0(%arg0: i32) -> (i32, i32) {
    %c0_i32 = arith.constant 0 : i32
    %c0_i32_0 = arith.constant 0 : i32
    return %arg0, %c0_i32 : i32, i32
  }
  func.func @transform_1(%arg0: i32) -> (i32, i32, i32) {
    %c0_i32 = arith.constant 0 : i32
    %c0_i32_0 = arith.constant 0 : i32
    %c0_i32_1 = arith.constant 0 : i32
    %c0_i32_2 = arith.constant 0 : i32
    return %c0_i32, %c0_i32_0, %c0_i32_1 : i32, i32, i32
  }
  func.func @transform_2(%arg0: i32) -> (i32, i32) {
    %c0_i32 = arith.constant 0 : i32
    %c0_i32_0 = arith.constant 0 : i32
    %c0_i32_1 = arith.constant 0 : i32
    return %c0_i32, %c0_i32_0 : i32, i32
  }
  func.func @transform_3(%arg0: i32) -> (i32, i32) {
    %c0_i32 = arith.constant 0 : i32
    %c0_i32_0 = arith.constant 0 : i32
    %c0_i32_1 = arith.constant 0 : i32
    return %c0_i32, %c0_i32_0 : i32, i32
  }
  func.func @transform_4(%arg0: i32) -> (i32, i32, i32) {
    %c0_i32 = arith.constant 0 : i32
    %c0_i32_0 = arith.constant 0 : i32
    %c0_i32_1 = arith.constant 0 : i32
    %c0_i32_2 = arith.constant 0 : i32
    return %c0_i32, %c0_i32_0, %c0_i32_1 : i32, i32, i32
  }
  func.func @transform_5(%arg0: i32) -> (i32, i32) {
    %c0_i32 = arith.constant 0 : i32
    %c0_i32_0 = arith.constant 0 : i32
    %c0_i32_1 = arith.constant 0 : i32
    return %c0_i32, %c0_i32_0 : i32, i32
  }
  func.func @transform_6(%arg0: i32) -> (i32, i32) {
    %c0_i32 = arith.constant 0 : i32
    %c0_i32_0 = arith.constant 0 : i32
    %c0_i32_1 = arith.constant 0 : i32
    return %c0_i32, %c0_i32_0 : i32, i32
  }
  func.func @transform_7(%arg0: i32) -> (i32, i32, i32) {
    %c0_i32 = arith.constant 0 : i32
    %c0_i32_0 = arith.constant 0 : i32
    %c0_i32_1 = arith.constant 0 : i32
    %c0_i32_2 = arith.constant 0 : i32
    return %c0_i32, %c0_i32_0, %c0_i32_1 : i32, i32, i32
  }
  func.func @transform_8(%arg0: i32) -> (i32, i32, i32, i32) {
    %c0_i32 = arith.constant 0 : i32
    %c0_i32_0 = arith.constant 0 : i32
    %c0_i32_1 = arith.constant 0 : i32
    %c0_i32_2 = arith.constant 0 : i32
    %c0_i32_3 = arith.constant 0 : i32
    return %c0_i32, %c0_i32_0, %c0_i32_1, %c0_i32_2 : i32, i32, i32, i32
  }
  func.func @transform_9(%arg0: i32) -> (i32, i32) {
    %c0_i32 = arith.constant 0 : i32
    %c0_i32_0 = arith.constant 0 : i32
    %c0_i32_1 = arith.constant 0 : i32
    return %c0_i32, %c0_i32_0 : i32, i32
  }
  func.func @transform_10(%arg0: i32) -> (i32, i32, i32) {
    %c0_i32 = arith.constant 0 : i32
    %c0_i32_0 = arith.constant 0 : i32
    %c0_i32_1 = arith.constant 0 : i32
    %c0_i32_2 = arith.constant 0 : i32
    return %c0_i32, %c0_i32_0, %c0_i32_1 : i32, i32, i32
  }
  func.func @transform_11(%arg0: i32) -> (i32, i32, i32, i32) {
    %c0_i32 = arith.constant 0 : i32
    %c0_i32_0 = arith.constant 0 : i32
    %c0_i32_1 = arith.constant 0 : i32
    %c0_i32_2 = arith.constant 0 : i32
    %c0_i32_3 = arith.constant 0 : i32
    return %c0_i32, %c0_i32_0, %c0_i32_1, %c0_i32_2 : i32, i32, i32, i32
  }
  func.func @transform_12(%arg0: i32) -> (i32, i32, i32) {
    %c0_i32 = arith.constant 0 : i32
    %c0_i32_0 = arith.constant 0 : i32
    %c0_i32_1 = arith.constant 0 : i32
    %c0_i32_2 = arith.constant 0 : i32
    return %c0_i32, %c0_i32_0, %c0_i32_1 : i32, i32, i32
  }
  func.func @transform_13(%arg0: i32) -> (i32, i32) {
    %c0_i32 = arith.constant 0 : i32
    %c0_i32_0 = arith.constant 0 : i32
    %c0_i32_1 = arith.constant 0 : i32
    return %c0_i32, %c0_i32_0 : i32, i32
  }
  func.func @transform_14(%arg0: i32) -> (i32, i32) {
    %c0_i32 = arith.constant 0 : i32
    %c0_i32_0 = arith.constant 0 : i32
    return %arg0, %c0_i32 : i32, i32
  }
  func.func @transform_15(%arg0: i32) -> (i32, i32) {
    %c0_i32 = arith.constant 0 : i32
    %c0_i32_0 = arith.constant 0 : i32
    return %arg0, %c0_i32 : i32, i32
  }
}

</mosaic_0001>

<llo_original>
// kernel: tile.28
$region0: #{tile.28}
  #allocation0 [shape = 's32[1]{0}', space=sflag, size = 0x4, scoped, tag = 'scoped memory for tile.28']
  %s0 = inlined_call_operand.vmem [shape: f32[32], index: 0, kind: input, shape index: {}]
  %s1 = inlined_call_operand.vmem [shape: f32[2,32], index: 1, kind: output, shape index: {}]
  // Predicated region
  $region2: #{tile.28} parent=0 // pred_check
    _
  $region3: #{tile.28} parent=0 // pred_check_branch
    %3 = sbr.rel (0) target = $region5
  $region4: #{tile.28} parent=0 // pred_region
    _
  $region5: #{tile.28} parent=0 // pred_fallthru
    _
  %v4 = vld [vmem:[%s0] ss:$0 sm:$0xff]
  %5 = vst [vmem:[%s1] sm:$0x3] %v4

// kernel: tile.1
$region0: #{tile.1}
  %s0 = inlined_call_operand.vmem [shape: f32[2,32], index: 0, kind: input, shape index: {}]
  %s1 = inlined_call_operand.vmem [shape: f32[64,1], index: 1, kind: output, shape index: {}]
  $region1: #{tile.1} parent=0
    #allocation0 [shape = 'u8[4096]{0}', space=vmem, size = 0x1000, scoped, tag = 'scoped mem for input reshape']
    %s3 = sshllo.u32 0, 2
    %v4 = vld [vmem:[%s0] sm:%s3]
    %5 = vst [vmem:[#allocation0] sm:%s3] %v4
    %v6 = vld [vmem:[#allocation0] sm:$0x3]
    %vm7 = vcmask 7168
    %8 = vst.msk [vmem:[%s1] sm:$0x1] %vm7, %v6
    %s9 = scalar_lea.vmem %s1, 31
    %10 = vst.msk [vmem:[%s9] sm:$0x2] %vm7, %v6
    %v11 = vld [vmem:[#allocation0] sm:$0x3]
    %12 = vrot.lane.b32.xlu0 %v11, 127
    %v13 = vpop.permute.xlu0 %12
    %vm14 = vcmask 7168
    %s15 = scalar_lea.vmem %s1, 1
    %16 = vst.msk [vmem:[%s15] sm:$0x1] %vm14, %v13
    %s17 = scalar_lea.vmem %s1, 32
    %18 = vst.msk [vmem:[%s17] sm:$0x2] %vm14, %v13
    %v19 = vld [vmem:[#allocation0] sm:$0x3]
    %20 = vrot.lane.b32.xlu0 %v19, 126
    %v21 = vpop.permute.xlu0 %20
    %vm22 = vcmask 7168
    %s23 = scalar_lea.vmem %s1, 2
    %24 = vst.msk [vmem:[%s23] sm:$0x1] %vm22, %v21
    %s25 = scalar_lea.vmem %s1, 33
    %26 = vst.msk [vmem:[%s25] sm:$0x2] %vm22, %v21
    %v27 = vld [vmem:[#allocation0] sm:$0x3]
    %28 = vrot.lane.b32.xlu0 %v27, 125
    %v29 = vpop.permute.xlu0 %28
    %vm30 = vcmask 7168
    %s31 = scalar_lea.vmem %s1, 3
    %32 = vst.msk [vmem:[%s31] sm:$0x1] %vm30, %v29
    %s33 = scalar_lea.vmem %s1, 34
    %34 = vst.msk [vmem:[%s33] sm:$0x2] %vm30, %v29
    %v35 = vld [vmem:[#allocation0] sm:$0x3]
    %36 = vrot.lane.b32.xlu0 %v35, 124
    %v37 = vpop.permute.xlu0 %36
    %vm38 = vcmask 7168
    %s39 = scalar_lea.vmem %s1, 4
    %40 = vst.msk [vmem:[%s39] sm:$0x1] %vm38, %v37
    %s41 = scalar_lea.vmem %s1, 35
    %42 = vst.msk [vmem:[%s41] sm:$0x2] %vm38, %v37
    %v43 = vld [vmem:[#allocation0] sm:$0x3]
    %44 = vrot.lane.b32.xlu0 %v43, 123
    %v45 = vpop.permute.xlu0 %44
    %vm46 = vcmask 7168
    %s47 = scalar_lea.vmem %s1, 5
    %48 = vst.msk [vmem:[%s47] sm:$0x1] %vm46, %v45
    %s49 = scalar_lea.vmem %s1, 36
    %50 = vst.msk [vmem:[%s49] sm:$0x2] %vm46, %v45
    %v51 = vld [vmem:[#allocation0] sm:$0x3]
    %52 = vrot.lane.b32.xlu0 %v51, 122
    %v53 = vpop.permute.xlu0 %52
    %vm54 = vcmask 7168
    %s55 = scalar_lea.vmem %s1, 6
    %56 = vst.msk [vmem:[%s55] sm:$0x1] %vm54, %v53
    %s57 = scalar_lea.vmem %s1, 37
    %58 = vst.msk [vmem:[%s57] sm:$0x2] %vm54, %v53
    %v59 = vld [vmem:[#allocation0] sm:$0x3]
    %60 = vrot.lane.b32.xlu0 %v59, 121
    %v61 = vpop.permute.xlu0 %60
    %vm62 = vcmask 7168
    %s63 = scalar_lea.vmem %s1, 7
    %64 = vst.msk [vmem:[%s63] sm:$0x1] %vm62, %v61
    %s65 = scalar_lea.vmem %s1, 38
    %66 = vst.msk [vmem:[%s65] sm:$0x2] %vm62, %v61
    %v67 = vld [vmem:[#allocation0] sm:$0x3]
    %68 = vrot.lane.b32.xlu0 %v67, 120
    %v69 = vpop.permute.xlu0 %68
    %vm70 = vcmask 7168
    %s71 = scalar_lea.vmem %s1, 8
    %72 = vst.msk [vmem:[%s71] sm:$0x1] %vm70, %v69
    %s73 = scalar_lea.vmem %s1, 39
    %74 = vst.msk [vmem:[%s73] sm:$0x2] %vm70, %v69
    %v75 = vld [vmem:[#allocation0] sm:$0x3]
    %76 = vrot.lane.b32.xlu0 %v75, 119
    %v77 = vpop.permute.xlu0 %76
    %vm78 = vcmask 7168
    %s79 = scalar_lea.vmem %s1, 9
    %80 = vst.msk [vmem:[%s79] sm:$0x1] %vm78, %v77
    %s81 = scalar_lea.vmem %s1, 40
    %82 = vst.msk [vmem:[%s81] sm:$0x2] %vm78, %v77
    %v83 = vld [vmem:[#allocation0] sm:$0x3]
    %84 = vrot.lane.b32.xlu0 %v83, 118
    %v85 = vpop.permute.xlu0 %84
    %vm86 = vcmask 7168
    %s87 = scalar_lea.vmem %s1, 10
    %88 = vst.msk [vmem:[%s87] sm:$0x1] %vm86, %v85
    %s89 = scalar_lea.vmem %s1, 41
    %90 = vst.msk [vmem:[%s89] sm:$0x2] %vm86, %v85
    %v91 = vld [vmem:[#allocation0] sm:$0x3]
    %92 = vrot.lane.b32.xlu0 %v91, 117
    %v93 = vpop.permute.xlu0 %92
    %vm94 = vcmask 7168
    %s95 = scalar_lea.vmem %s1, 11
    %96 = vst.msk [vmem:[%s95] sm:$0x1] %vm94, %v93
    %s97 = scalar_lea.vmem %s1, 42
    %98 = vst.msk [vmem:[%s97] sm:$0x2] %vm94, %v93
    %v99 = vld [vmem:[#allocation0] sm:$0x3]
    %100 = vrot.lane.b32.xlu0 %v99, 116
    %v101 = vpop.permute.xlu0 %100
    %vm102 = vcmask 7168
    %s103 = scalar_lea.vmem %s1, 12
    %104 = vst.msk [vmem:[%s103] sm:$0x1] %vm102, %v101
    %s105 = scalar_lea.vmem %s1, 43
    %106 = vst.msk [vmem:[%s105] sm:$0x2] %vm102, %v101
    %v107 = vld [vmem:[#allocation0] sm:$0x3]
    %108 = vrot.lane.b32.xlu0 %v107, 115
    %v109 = vpop.permute.xlu0 %108
    %vm110 = vcmask 7168
    %s111 = scalar_lea.vmem %s1, 13
    %112 = vst.msk [vmem:[%s111] sm:$0x1] %vm110, %v109
    %s113 = scalar_lea.vmem %s1, 44
    %114 = vst.msk [vmem:[%s113] sm:$0x2] %vm110, %v109
    %v115 = vld [vmem:[#allocation0] sm:$0x3]
    %116 = vrot.lane.b32.xlu0 %v115, 114
    %v117 = vpop.permute.xlu0 %116
    %vm118 = vcmask 7168
    %s119 = scalar_lea.vmem %s1, 14
    %120 = vst.msk [vmem:[%s119] sm:$0x1] %vm118, %v117
    %s121 = scalar_lea.vmem %s1, 45
    %122 = vst.msk [vmem:[%s121] sm:$0x2] %vm118, %v117
    %v123 = vld [vmem:[#allocation0] sm:$0x3]
    %124 = vrot.lane.b32.xlu0 %v123, 113
    %v125 = vpop.permute.xlu0 %124
    %vm126 = vcmask 7168
    %s127 = scalar_lea.vmem %s1, 15
    %128 = vst.msk [vmem:[%s127] sm:$0x1] %vm126, %v125
    %s129 = scalar_lea.vmem %s1, 46
    %130 = vst.msk [vmem:[%s129] sm:$0x2] %vm126, %v125
    %v131 = vld [vmem:[#allocation0] sm:$0x3]
    %132 = vrot.lane.b32.xlu0 %v131, 112
    %v133 = vpop.permute.xlu0 %132
    %vm134 = vcmask 7168
    %s135 = scalar_lea.vmem %s1, 16
    %136 = vst.msk [vmem:[%s135] sm:$0x1] %vm134, %v133
    %s137 = scalar_lea.vmem %s1, 47
    %138 = vst.msk [vmem:[%s137] sm:$0x2] %vm134, %v133
    %v139 = vld [vmem:[#allocation0] sm:$0x3]
    %140 = vrot.lane.b32.xlu0 %v139, 111
    %v141 = vpop.permute.xlu0 %140
    %vm142 = vcmask 7168
    %s143 = scalar_lea.vmem %s1, 17
    %144 = vst.msk [vmem:[%s143] sm:$0x1] %vm142, %v141
    %s145 = scalar_lea.vmem %s1, 48
    %146 = vst.msk [vmem:[%s145] sm:$0x2] %vm142, %v141
    %v147 = vld [vmem:[#allocation0] sm:$0x3]
    %148 = vrot.lane.b32.xlu0 %v147, 110
    %v149 = vpop.permute.xlu0 %148
    %vm150 = vcmask 7168
    %s151 = scalar_lea.vmem %s1, 18
    %152 = vst.msk [vmem:[%s151] sm:$0x1] %vm150, %v149
    %s153 = scalar_lea.vmem %s1, 49
    %154 = vst.msk [vmem:[%s153] sm:$0x2] %vm150, %v149
    %v155 = vld [vmem:[#allocation0] sm:$0x3]
    %156 = vrot.lane.b32.xlu0 %v155, 109
    %v157 = vpop.permute.xlu0 %156
    %vm158 = vcmask 7168
    %s159 = scalar_lea.vmem %s1, 19
    %160 = vst.msk [vmem:[%s159] sm:$0x1] %vm158, %v157
    %s161 = scalar_lea.vmem %s1, 50
    %162 = vst.msk [vmem:[%s161] sm:$0x2] %vm158, %v157
    %v163 = vld [vmem:[#allocation0] sm:$0x3]
    %164 = vrot.lane.b32.xlu0 %v163, 108
    %v165 = vpop.permute.xlu0 %164
    %vm166 = vcmask 7168
    %s167 = scalar_lea.vmem %s1, 20
    %168 = vst.msk [vmem:[%s167] sm:$0x1] %vm166, %v165
    %s169 = scalar_lea.vmem %s1, 51
    %170 = vst.msk [vmem:[%s169] sm:$0x2] %vm166, %v165
    %v171 = vld [vmem:[#allocation0] sm:$0x3]
    %172 = vrot.lane.b32.xlu0 %v171, 107
    %v173 = vpop.permute.xlu0 %172
    %vm174 = vcmask 7168
    %s175 = scalar_lea.vmem %s1, 21
    %176 = vst.msk [vmem:[%s175] sm:$0x1] %vm174, %v173
    %s177 = scalar_lea.vmem %s1, 52
    %178 = vst.msk [vmem:[%s177] sm:$0x2] %vm174, %v173
    %v179 = vld [vmem:[#allocation0] sm:$0x3]
    %180 = vrot.lane.b32.xlu0 %v179, 106
    %v181 = vpop.permute.xlu0 %180
    %vm182 = vcmask 7168
    %s183 = scalar_lea.vmem %s1, 22
    %184 = vst.msk [vmem:[%s183] sm:$0x1] %vm182, %v181
    %s185 = scalar_lea.vmem %s1, 53
    %186 = vst.msk [vmem:[%s185] sm:$0x2] %vm182, %v181
    %v187 = vld [vmem:[#allocation0] sm:$0x3]
    %188 = vrot.lane.b32.xlu0 %v187, 105
    %v189 = vpop.permute.xlu0 %188
    %vm190 = vcmask 7168
    %s191 = scalar_lea.vmem %s1, 23
    %192 = vst.msk [vmem:[%s191] sm:$0x1] %vm190, %v189
    %s193 = scalar_lea.vmem %s1, 54
    %194 = vst.msk [vmem:[%s193] sm:$0x2] %vm190, %v189
    %v195 = vld [vmem:[#allocation0] sm:$0x3]
    %196 = vrot.lane.b32.xlu0 %v195, 104
    %v197 = vpop.permute.xlu0 %196
    %vm198 = vcmask 7168
    %s199 = scalar_lea.vmem %s1, 24
    %200 = vst.msk [vmem:[%s199] sm:$0x1] %vm198, %v197
    %s201 = scalar_lea.vmem %s1, 55
    %202 = vst.msk [vmem:[%s201] sm:$0x2] %vm198, %v197
    %v203 = vld [vmem:[#allocation0] sm:$0x3]
    %204 = vrot.lane.b32.xlu0 %v203, 103
    %v205 = vpop.permute.xlu0 %204
    %vm206 = vcmask 7168
    %s207 = scalar_lea.vmem %s1, 25
    %208 = vst.msk [vmem:[%s207] sm:$0x1] %vm206, %v205
    %s209 = scalar_lea.vmem %s1, 56
    %210 = vst.msk [vmem:[%s209] sm:$0x2] %vm206, %v205
    %v211 = vld [vmem:[#allocation0] sm:$0x3]
    %212 = vrot.lane.b32.xlu0 %v211, 102
    %v213 = vpop.permute.xlu0 %212
    %vm214 = vcmask 7168
    %s215 = scalar_lea.vmem %s1, 26
    %216 = vst.msk [vmem:[%s215] sm:$0x1] %vm214, %v213
    %s217 = scalar_lea.vmem %s1, 57
    %218 = vst.msk [vmem:[%s217] sm:$0x2] %vm214, %v213
    %v219 = vld [vmem:[#allocation0] sm:$0x3]
    %220 = vrot.lane.b32.xlu0 %v219, 101
    %v221 = vpop.permute.xlu0 %220
    %vm222 = vcmask 7168
    %s223 = scalar_lea.vmem %s1, 27
    %224 = vst.msk [vmem:[%s223] sm:$0x1] %vm222, %v221
    %s225 = scalar_lea.vmem %s1, 58
    %226 = vst.msk [vmem:[%s225] sm:$0x2] %vm222, %v221
    %v227 = vld [vmem:[#allocation0] sm:$0x3]
    %228 = vrot.lane.b32.xlu0 %v227, 100
    %v229 = vpop.permute.xlu0 %228
    %vm230 = vcmask 7168
    %s231 = scalar_lea.vmem %s1, 28
    %232 = vst.msk [vmem:[%s231] sm:$0x1] %vm230, %v229
    %s233 = scalar_lea.vmem %s1, 59
    %234 = vst.msk [vmem:[%s233] sm:$0x2] %vm230, %v229
    %v235 = vld [vmem:[#allocation0] sm:$0x3]
    %236 = vrot.lane.b32.xlu0 %v235, 99
    %v237 = vpop.permute.xlu0 %236
    %vm238 = vcmask 7168
    %s239 = scalar_lea.vmem %s1, 29
    %240 = vst.msk [vmem:[%s239] sm:$0x1] %vm238, %v237
    %s241 = scalar_lea.vmem %s1, 60
    %242 = vst.msk [vmem:[%s241] sm:$0x2] %vm238, %v237
    %v243 = vld [vmem:[#allocation0] sm:$0x3]
    %244 = vrot.lane.b32.xlu0 %v243, 98
    %v245 = vpop.permute.xlu0 %244
    %vm246 = vcmask 7168
    %s247 = scalar_lea.vmem %s1, 30
    %248 = vst.msk [vmem:[%s247] sm:$0x1] %vm246, %v245
    %s249 = scalar_lea.vmem %s1, 61
    %250 = vst.msk [vmem:[%s249] sm:$0x2] %vm246, %v245
    %v251 = vld [vmem:[#allocation0] sm:$0x3]
    %252 = vrot.lane.b32.xlu0 %v251, 97
    %v253 = vpop.permute.xlu0 %252
    %vm254 = vcmask 7168
    %s255 = scalar_lea.vmem %s1, 31
    %256 = vst.msk [vmem:[%s255] sm:$0x1] %vm254, %v253
    %s257 = scalar_lea.vmem %s1, 62
    %258 = vst.msk [vmem:[%s257] sm:$0x2] %vm254, %v253

// kernel: tile.23
$region0: #{tile.23}
  #allocation0 [shape = 's32[1]{0}', space=sflag, size = 0x4, scoped, tag = 'scoped memory for tile.23']
  %s0 = inlined_call_operand.vmem [shape: f32[16], index: 0, kind: input, shape index: {}]
  %s1 = inlined_call_operand.vmem [shape: f32[2,16], index: 1, kind: output, shape index: {}]
  // Predicated region
  $region2: #{tile.23} parent=0 // pred_check
    _
  $region3: #{tile.23} parent=0 // pred_check_branch
    %3 = sbr.rel (0) target = $region5
  $region4: #{tile.23} parent=0 // pred_region
    _
  $region5: #{tile.23} parent=0 // pred_fallthru
    _
  %v4 = vld [vmem:[%s0] ss:$0 sm:$0xff]
  %5 = vst [vmem:[%s1] sm:$0x3] %v4

// kernel: tile.38
$region0: #{tile.38}
  #allocation0 [shape = 's32[1]{0}', space=sflag, size = 0x4, scoped, tag = 'scoped memory for tile.38']
  %s0 = inlined_call_operand.vmem [shape: f32[4], index: 0, kind: input, shape index: {}]
  %s1 = inlined_call_operand.vmem [shape: f32[2,4], index: 1, kind: output, shape index: {}]
  // Predicated region
  $region2: #{tile.38} parent=0 // pred_check
    _
  $region3: #{tile.38} parent=0 // pred_check_branch
    %3 = sbr.rel (0) target = $region5
  $region4: #{tile.38} parent=0 // pred_region
    _
  $region5: #{tile.38} parent=0 // pred_fallthru
    _
  %v4 = vld [vmem:[%s0] ss:$0 sm:$0xff]
  %5 = vst [vmem:[%s1] sm:$0x3] %v4

// kernel: tile.0
$region0: #{tile.0}
  %s0 = inlined_call_operand.vmem [shape: f32[2,16], index: 0, kind: input, shape index: {}]
  %s1 = inlined_call_operand.vmem [shape: f32[32,1], index: 1, kind: output, shape index: {}]
  $region1: #{tile.0} parent=0
    #allocation0 [shape = 'u8[4096]{0}', space=vmem, size = 0x1000, scoped, tag = 'scoped mem for input reshape']
    %s3 = sshllo.u32 0, 2
    %v4 = vld [vmem:[%s0] sm:%s3]
    %5 = vst [vmem:[#allocation0] sm:%s3] %v4
    %v6 = vld [vmem:[#allocation0] sm:$0x3]
    %vm7 = vcmask 7168
    %8 = vst.msk [vmem:[%s1] ss:$16 sm:$0x3] %vm7, %v6
    %v9 = vld [vmem:[#allocation0] sm:$0x3]
    %10 = vrot.lane.b32.xlu0 %v9, 127
    %v11 = vpop.permute.xlu0 %10
    %vm12 = vcmask 7168
    %s13 = scalar_lea.vmem %s1, 1
    %14 = vst.msk [vmem:[%s13] ss:$16 sm:$0x3] %vm12, %v11
    %v15 = vld [vmem:[#allocation0] sm:$0x3]
    %16 = vrot.lane.b32.xlu0 %v15, 126
    %v17 = vpop.permute.xlu0 %16
    %vm18 = vcmask 7168
    %s19 = scalar_lea.vmem %s1, 2
    %20 = vst.msk [vmem:[%s19] ss:$16 sm:$0x3] %vm18, %v17
    %v21 = vld [vmem:[#allocation0] sm:$0x3]
    %22 = vrot.lane.b32.xlu0 %v21, 125
    %v23 = vpop.permute.xlu0 %22
    %vm24 = vcmask 7168
    %s25 = scalar_lea.vmem %s1, 3
    %26 = vst.msk [vmem:[%s25] ss:$16 sm:$0x3] %vm24, %v23
    %v27 = vld [vmem:[#allocation0] sm:$0x3]
    %28 = vrot.lane.b32.xlu0 %v27, 124
    %v29 = vpop.permute.xlu0 %28
    %vm30 = vcmask 7168
    %s31 = scalar_lea.vmem %s1, 4
    %32 = vst.msk [vmem:[%s31] ss:$16 sm:$0x3] %vm30, %v29
    %v33 = vld [vmem:[#allocation0] sm:$0x3]
    %34 = vrot.lane.b32.xlu0 %v33, 123
    %v35 = vpop.permute.xlu0 %34
    %vm36 = vcmask 7168
    %s37 = scalar_lea.vmem %s1, 5
    %38 = vst.msk [vmem:[%s37] ss:$16 sm:$0x3] %vm36, %v35
    %v39 = vld [vmem:[#allocation0] sm:$0x3]
    %40 = vrot.lane.b32.xlu0 %v39, 122
    %v41 = vpop.permute.xlu0 %40
    %vm42 = vcmask 7168
    %s43 = scalar_lea.vmem %s1, 6
    %44 = vst.msk [vmem:[%s43] ss:$16 sm:$0x3] %vm42, %v41
    %v45 = vld [vmem:[#allocation0] sm:$0x3]
    %46 = vrot.lane.b32.xlu0 %v45, 121
    %v47 = vpop.permute.xlu0 %46
    %vm48 = vcmask 7168
    %s49 = scalar_lea.vmem %s1, 7
    %50 = vst.msk [vmem:[%s49] ss:$16 sm:$0x3] %vm48, %v47
    %v51 = vld [vmem:[#allocation0] sm:$0x3]
    %52 = vrot.lane.b32.xlu0 %v51, 120
    %v53 = vpop.permute.xlu0 %52
    %vm54 = vcmask 7168
    %s55 = scalar_lea.vmem %s1, 8
    %56 = vst.msk [vmem:[%s55] ss:$16 sm:$0x3] %vm54, %v53
    %v57 = vld [vmem:[#allocation0] sm:$0x3]
    %58 = vrot.lane.b32.xlu0 %v57, 119
    %v59 = vpop.permute.xlu0 %58
    %vm60 = vcmask 7168
    %s61 = scalar_lea.vmem %s1, 9
    %62 = vst.msk [vmem:[%s61] ss:$16 sm:$0x3] %vm60, %v59
    %v63 = vld [vmem:[#allocation0] sm:$0x3]
    %64 = vrot.lane.b32.xlu0 %v63, 118
    %v65 = vpop.permute.xlu0 %64
    %vm66 = vcmask 7168
    %s67 = scalar_lea.vmem %s1, 10
    %68 = vst.msk [vmem:[%s67] ss:$16 sm:$0x3] %vm66, %v65
    %v69 = vld [vmem:[#allocation0] sm:$0x3]
    %70 = vrot.lane.b32.xlu0 %v69, 117
    %v71 = vpop.permute.xlu0 %70
    %vm72 = vcmask 7168
    %s73 = scalar_lea.vmem %s1, 11
    %74 = vst.msk [vmem:[%s73] ss:$16 sm:$0x3] %vm72, %v71
    %v75 = vld [vmem:[#allocation0] sm:$0x3]
    %76 = vrot.lane.b32.xlu0 %v75, 116
    %v77 = vpop.permute.xlu0 %76
    %vm78 = vcmask 7168
    %s79 = scalar_lea.vmem %s1, 12
    %80 = vst.msk [vmem:[%s79] ss:$16 sm:$0x3] %vm78, %v77
    %v81 = vld [vmem:[#allocation0] sm:$0x3]
    %82 = vrot.lane.b32.xlu0 %v81, 115
    %v83 = vpop.permute.xlu0 %82
    %vm84 = vcmask 7168
    %s85 = scalar_lea.vmem %s1, 13
    %86 = vst.msk [vmem:[%s85] ss:$16 sm:$0x3] %vm84, %v83
    %v87 = vld [vmem:[#allocation0] sm:$0x3]
    %88 = vrot.lane.b32.xlu0 %v87, 114
    %v89 = vpop.permute.xlu0 %88
    %vm90 = vcmask 7168
    %s91 = scalar_lea.vmem %s1, 14
    %92 = vst.msk [vmem:[%s91] ss:$16 sm:$0x3] %vm90, %v89
    %v93 = vld [vmem:[#allocation0] sm:$0x3]
    %94 = vrot.lane.b32.xlu0 %v93, 113
    %v95 = vpop.permute.xlu0 %94
    %vm96 = vcmask 7168
    %s97 = scalar_lea.vmem %s1, 15
    %98 = vst.msk [vmem:[%s97] ss:$16 sm:$0x3] %vm96, %v95

// kernel: tile.3
$region0: #{tile.3}
  %s0 = inlined_call_operand.vmem [shape: f32[2,4], index: 0, kind: input, shape index: {}]
  %s1 = inlined_call_operand.vmem [shape: f32[8,1], index: 1, kind: output, shape index: {}]
  $region1: #{tile.3} parent=0
    #allocation0 [shape = 'u8[4096]{0}', space=vmem, size = 0x1000, scoped, tag = 'scoped mem for input reshape']
    %s3 = sshllo.u32 0, 2
    %v4 = vld [vmem:[%s0] sm:%s3]
    %5 = vst [vmem:[#allocation0] sm:%s3] %v4
    %v6 = vld [vmem:[#allocation0] sm:$0x3]
    %vm7 = vcmask 7168
    %8 = vst.msk [vmem:[%s1] ss:$4 sm:$0x3] %vm7, %v6
    %v9 = vld [vmem:[#allocation0] sm:$0x3]
    %10 = vrot.lane.b32.xlu0 %v9, 127
    %v11 = vpop.permute.xlu0 %10
    %vm12 = vcmask 7168
    %s13 = scalar_lea.vmem %s1, 1
    %14 = vst.msk [vmem:[%s13] ss:$4 sm:$0x3] %vm12, %v11
    %v15 = vld [vmem:[#allocation0] sm:$0x3]
    %16 = vrot.lane.b32.xlu0 %v15, 126
    %v17 = vpop.permute.xlu0 %16
    %vm18 = vcmask 7168
    %s19 = scalar_lea.vmem %s1, 2
    %20 = vst.msk [vmem:[%s19] ss:$4 sm:$0x3] %vm18, %v17
    %v21 = vld [vmem:[#allocation0] sm:$0x3]
    %22 = vrot.lane.b32.xlu0 %v21, 125
    %v23 = vpop.permute.xlu0 %22
    %vm24 = vcmask 7168
    %s25 = scalar_lea.vmem %s1, 3
    %26 = vst.msk [vmem:[%s25] ss:$4 sm:$0x3] %vm24, %v23

// kernel: ae_forward.1
$region0: #{ae_forward.1}
  #allocation0 [shape = 'u32[]', space=smem, size = 0x4, offset = 0x4, fixed_abs, tag = 'smem constant byte address 0x4 - core index']
  #allocation1 [shape = 'u32[144,128]{1,0:T(1,128)}', space=vmem, size = 0x12000, scoped, tag = 'internal scratch']
  #allocation2 [shape = 'f32[72,64]{1,0:T(8,128)}', space=vmem, size = 0x9000, scoped, tag = 'scratch operand']
  #allocation3 [shape = 'f32[288,16]{1,0:T(8,128)}', space=vmem, size = 0x24000, scoped, tag = 'scratch operand']
  %s0 = inlined_call_operand.vmem [shape: bf16[8,256], index: 0, kind: input, shape index: {}]
  %s1 = inlined_call_operand.vmem [shape: bf16[9,256,64], index: 1, kind: input, shape index: {}]
  %s2 = inlined_call_operand.vmem [shape: bf16[32,72], index: 2, kind: input, shape index: {}]
  %s3 = inlined_call_operand.vmem [shape: f32[32,1], index: 3, kind: input, shape index: {}]
  %s4 = inlined_call_operand.vmem [shape: bf16[9,64,16], index: 4, kind: input, shape index: {}]
  %s5 = inlined_call_operand.vmem [shape: bf16[64,288], index: 5, kind: input, shape index: {}]
  %s6 = inlined_call_operand.vmem [shape: f32[64,1], index: 6, kind: input, shape index: {}]
  %s7 = inlined_call_operand.vmem [shape: bf16[3,16,16], index: 7, kind: input, shape index: {}]
  %s8 = inlined_call_operand.vmem [shape: bf16[3,3,32,64], index: 8, kind: input, shape index: {}]
  %s9 = inlined_call_operand.vmem [shape: f32[32,1], index: 9, kind: input, shape index: {}]
  %s10 = inlined_call_operand.vmem [shape: bf16[4,16,256], index: 10, kind: input, shape index: {}]
  %s11 = inlined_call_operand.vmem [shape: bf16[3,3,8,32], index: 11, kind: input, shape index: {}]
  %s12 = inlined_call_operand.vmem [shape: bf16[4,64,256], index: 12, kind: input, shape index: {}]
  %s13 = inlined_call_operand.vmem [shape: f32[8,1], index: 13, kind: input, shape index: {}]
  %s14 = inlined_call_operand.vmem [shape: f32[64,16], index: 14, kind: output, shape index: {0}]
  %s15 = inlined_call_operand.vmem [shape: f32[8,256], index: 15, kind: output, shape index: {1}]
  %16 = xla_tuple %s14, %s15
  %s17 = sld [smem:[#allocation0]]
  $region74: #{ae_forward.1} parent=0
    _
  %s19 = ssub.s32 1, %s17
  %s20 = scalar_select 0, %s19, %s17
  // Predicated region
  $region2: #{ae_forward.1} parent=0 // pred_check
    _
  $region3: #{ae_forward.1} parent=0 // pred_check_branch
    %22 = sbr.rel (0) target = $region5
  $region4: #{ae_forward.1} parent=0 // pred_region
    _
  $region5: #{ae_forward.1} parent=0 // pred_fallthru
    _
  // Predicated region
  $region6: #{ae_forward.1} parent=0 // pred_check
    _
  $region7: #{ae_forward.1} parent=0 // pred_check_branch
    %24 = sbr.rel (0) target = $region9
  $region8: #{ae_forward.1} parent=0 // pred_region
    _
  $region9: #{ae_forward.1} parent=0 // pred_fallthru
    _
  // Predicated region
  $region10: #{ae_forward.1} parent=0 // pred_check
    _
  $region11: #{ae_forward.1} parent=0 // pred_check_branch
    %26 = sbr.rel (0) target = $region13
  $region12: #{ae_forward.1} parent=0 // pred_region
    _
  $region13: #{ae_forward.1} parent=0 // pred_fallthru
    _
  // Predicated region
  $region14: #{ae_forward.1} parent=0 // pred_check
    _
  $region15: #{ae_forward.1} parent=0 // pred_check_branch
    %28 = sbr.rel (0) target = $region17
  $region16: #{ae_forward.1} parent=0 // pred_region
    _
  $region17: #{ae_forward.1} parent=0 // pred_fallthru
    _
  // Predicated region
  $region18: #{ae_forward.1} parent=0 // pred_check
    _
  $region19: #{ae_forward.1} parent=0 // pred_check_branch
    %30 = sbr.rel (0) target = $region21
  $region20: #{ae_forward.1} parent=0 // pred_region
    _
  $region21: #{ae_forward.1} parent=0 // pred_fallthru
    _
  // Predicated region
  $region22: #{ae_forward.1} parent=0 // pred_check
    _
  $region23: #{ae_forward.1} parent=0 // pred_check_branch
    %32 = sbr.rel (0) target = $region25
  $region24: #{ae_forward.1} parent=0 // pred_region
    _
  $region25: #{ae_forward.1} parent=0 // pred_fallthru
    _
  // Predicated region
  $region26: #{ae_forward.1} parent=0 // pred_check
    _
  $region27: #{ae_forward.1} parent=0 // pred_check_branch
    %34 = sbr.rel (0) target = $region29
  $region28: #{ae_forward.1} parent=0 // pred_region
    _
  $region29: #{ae_forward.1} parent=0 // pred_fallthru
    _
  // Predicated region
  $region30: #{ae_forward.1} parent=0 // pred_check
    _
  $region31: #{ae_forward.1} parent=0 // pred_check_branch
    %36 = sbr.rel (0) target = $region33
  $region32: #{ae_forward.1} parent=0 // pred_region
    _
  $region33: #{ae_forward.1} parent=0 // pred_fallthru
    _
  // Predicated region
  $region34: #{ae_forward.1} parent=0 // pred_check
    _
  $region35: #{ae_forward.1} parent=0 // pred_check_branch
    %38 = sbr.rel (0) target = $region37
  $region36: #{ae_forward.1} parent=0 // pred_region
    _
  $region37: #{ae_forward.1} parent=0 // pred_fallthru
    _
  // Predicated region
  $region38: #{ae_forward.1} parent=0 // pred_check
    _
  $region39: #{ae_forward.1} parent=0 // pred_check_branch
    %40 = sbr.rel (0) target = $region41
  $region40: #{ae_forward.1} parent=0 // pred_region
    _
  $region41: #{ae_forward.1} parent=0 // pred_fallthru
    _
  // Predicated region
  $region42: #{ae_forward.1} parent=0 // pred_check
    _
  $region43: #{ae_forward.1} parent=0 // pred_check_branch
    %42 = sbr.rel (0) target = $region45
  $region44: #{ae_forward.1} parent=0 // pred_region
    _
  $region45: #{ae_forward.1} parent=0 // pred_fallthru
    _
  // Predicated region
  $region46: #{ae_forward.1} parent=0 // pred_check
    _
  $region47: #{ae_forward.1} parent=0 // pred_check_branch
    %44 = sbr.rel (0) target = $region49
  $region48: #{ae_forward.1} parent=0 // pred_region
    _
  $region49: #{ae_forward.1} parent=0 // pred_fallthru
    _
  // Predicated region
  $region50: #{ae_forward.1} parent=0 // pred_check
    _
  $region51: #{ae_forward.1} parent=0 // pred_check_branch
    %46 = sbr.rel (0) target = $region53
  $region52: #{ae_forward.1} parent=0 // pred_region
    _
  $region53: #{ae_forward.1} parent=0 // pred_fallthru
    _
  // Predicated region
  $region54: #{ae_forward.1} parent=0 // pred_check
    _
  $region55: #{ae_forward.1} parent=0 // pred_check_branch
    %48 = sbr.rel (0) target = $region57
  $region56: #{ae_forward.1} parent=0 // pred_region
    _
  $region57: #{ae_forward.1} parent=0 // pred_fallthru
    _
  %v50 = vld [vmem:[%s0] sm:$0xff]
  %v51 = vld [vmem:[%s1] sm:$0xf]
  %v52 = vld [vmem:[%s1 + $0x4] sm:$0xf]
  %v53 = vld [vmem:[%s1 + $0x8] sm:$0xf]
  %v54 = vld [vmem:[%s1 + $0xc] sm:$0xf]
  %v55 = vld [vmem:[%s1 + $0x10] sm:$0xf]
  %v56 = vld [vmem:[%s1 + $0x14] sm:$0xf]
  %v57 = vld [vmem:[%s1 + $0x18] sm:$0xf]
  %v58 = vld [vmem:[%s1 + $0x1c] sm:$0xf]
  %v59 = vld [vmem:[%s1 + $0x20] sm:$0xf]
  %v60 = vld [vmem:[%s1 + $0x24] sm:$0xf]
  %v61 = vld [vmem:[%s1 + $0x28] sm:$0xf]
  %v62 = vld [vmem:[%s1 + $0x2c] sm:$0xf]
  %v63 = vld [vmem:[%s1 + $0x30] sm:$0xf]
  %v64 = vld [vmem:[%s1 + $0x34] sm:$0xf]
  %v65 = vld [vmem:[%s1 + $0x38] sm:$0xf]
  %v66 = vld [vmem:[%s1 + $0x3c] sm:$0xf]
  %v67 = vld [vmem:[%s1 + $0x40] sm:$0xf]
  %v68 = vld [vmem:[%s1 + $0x44] sm:$0xf]
  %v69 = vld [vmem:[%s1 + $0x48] sm:$0xf]
  %v70 = vld [vmem:[%s1 + $0x4c] sm:$0xf]
  %v71 = vld [vmem:[%s1 + $0x50] sm:$0xf]
  %v72 = vld [vmem:[%s1 + $0x54] sm:$0xf]
  %v73 = vld [vmem:[%s1 + $0x58] sm:$0xf]
  %v74 = vld [vmem:[%s1 + $0x5c] sm:$0xf]
  %v75 = vld [vmem:[%s1 + $0x60] sm:$0xf]
  %v76 = vld [vmem:[%s1 + $0x64] sm:$0xf]
  %v77 = vld [vmem:[%s1 + $0x68] sm:$0xf]
  %v78 = vld [vmem:[%s1 + $0x6c] sm:$0xf]
  %v79 = vld [vmem:[%s1 + $0x70] sm:$0xf]
  %v80 = vld [vmem:[%s1 + $0x74] sm:$0xf]
  %v81 = vld [vmem:[%s1 + $0x78] sm:$0xf]
  %v82 = vld [vmem:[%s1 + $0x7c] sm:$0xf]
  %v84 = vunpack.c.l.b16 %v50
  %v85 = vunpack.c.h.b16 %v50
  %v86 = vpack.c.b16 %v84, %v84
  %v87 = vpack.c.b16 %v85, %v85
  %v122 = vunpack.c.l.b16 %v51
  %v123 = vunpack.c.l.b16 %v52
  %v124 = vunpack.c.l.b16 %v53
  %v125 = vunpack.c.l.b16 %v54
  %v126 = vunpack.c.l.b16 %v55
  %v127 = vunpack.c.l.b16 %v56
  %v128 = vunpack.c.l.b16 %v57
  %v129 = vunpack.c.l.b16 %v58
  %v130 = vunpack.c.l.b16 %v59
  %v131 = vunpack.c.l.b16 %v60
  %v132 = vunpack.c.l.b16 %v61
  %v133 = vunpack.c.l.b16 %v62
  %v134 = vunpack.c.l.b16 %v63
  %v135 = vunpack.c.l.b16 %v64
  %v136 = vunpack.c.l.b16 %v65
  %v137 = vunpack.c.l.b16 %v66
  %v138 = vunpack.c.l.b16 %v67
  %v139 = vunpack.c.l.b16 %v68
  %v140 = vunpack.c.l.b16 %v69
  %v141 = vunpack.c.l.b16 %v70
  %v142 = vunpack.c.l.b16 %v71
  %v143 = vunpack.c.l.b16 %v72
  %v144 = vunpack.c.l.b16 %v73
  %v145 = vunpack.c.l.b16 %v74
  %v146 = vunpack.c.l.b16 %v75
  %v147 = vunpack.c.l.b16 %v76
  %v148 = vunpack.c.l.b16 %v77
  %v149 = vunpack.c.l.b16 %v78
  %v150 = vunpack.c.l.b16 %v79
  %v151 = vunpack.c.l.b16 %v80
  %v152 = vunpack.c.l.b16 %v81
  %v153 = vunpack.c.l.b16 %v82
  %v154 = vpack.c.b16 %v123, %v122
  %v155 = vpack.c.b16 %v125, %v124
  %v156 = vpack.c.b16 %v127, %v126
  %v157 = vpack.c.b16 %v129, %v128
  %v158 = vpack.c.b16 %v131, %v130
  %v159 = vpack.c.b16 %v133, %v132
  %v160 = vpack.c.b16 %v135, %v134
  %v161 = vpack.c.b16 %v137, %v136
  %v162 = vpack.c.b16 %v139, %v138
  %v163 = vpack.c.b16 %v141, %v140
  %v164 = vpack.c.b16 %v143, %v142
  %v165 = vpack.c.b16 %v145, %v144
  %v166 = vpack.c.b16 %v147, %v146
  %v167 = vpack.c.b16 %v149, %v148
  %v168 = vpack.c.b16 %v151, %v150
  %v169 = vpack.c.b16 %v153, %v152
  %186 = vmatprep.subr.bf16.mxu0 0
  %187 = vmatpush1.bf16.msra.mxu0 %v154
  %188 = vmatprep.subr.bf16.mxu0 0
  %189 = vmatpush1.bf16.msra.mxu0 %v155
  %190 = vmatprep.subr.bf16.mxu0 0
  %191 = vmatpush1.bf16.msra.mxu0 %v156
  %192 = vmatprep.subr.bf16.mxu0 0
  %193 = vmatpush1.bf16.msra.mxu0 %v157
  %194 = vmatprep.subr.bf16.mxu0 0
  %195 = vmatpush1.bf16.msra.mxu0 %v158
  %196 = vmatprep.subr.bf16.mxu0 0
  %197 = vmatpush1.bf16.msra.mxu0 %v159
  %198 = vmatprep.subr.bf16.mxu0 0
  %199 = vmatpush1.bf16.msra.mxu0 %v160
  %200 = vmatprep.subr.bf16.mxu0 0
  %201 = vmatpush1.bf16.msra.mxu0 %v161
  %202 = vmatprep.subr.bf16.mxu0 0
  %203 = vmatpush1.bf16.msra.mxu0 %v162
  %204 = vmatprep.subr.bf16.mxu0 0
  %205 = vmatpush1.bf16.msra.mxu0 %v163
  %206 = vmatprep.subr.bf16.mxu0 0
  %207 = vmatpush1.bf16.msra.mxu0 %v164
  %208 = vmatprep.subr.bf16.mxu0 0
  %209 = vmatpush1.bf16.msra.mxu0 %v165
  %210 = vmatprep.subr.bf16.mxu0 0
  %211 = vmatpush1.bf16.msra.mxu0 %v166
  %212 = vmatprep.subr.bf16.mxu0 0
  %213 = vmatpush1.bf16.msra.mxu0 %v167
  %214 = vmatprep.subr.bf16.mxu0 0
  %215 = vmatpush1.bf16.msra.mxu0 %v168
  %216 = vmatprep.subr.bf16.mxu0 0
  %217 = vmatpush1.bf16.msra.mxu0 %v169
  %218 = vmatprep.mubr.bf16.mxu0 %v87
  %219 = vmatmul.mubr.bf16.gmra.mrb[0].mxu0 %v86
  %v220 = vpop.f32.mrb[0].mxu0
  %v221 = vadd.f32 0.0, %v220
  %v222 = vpop.f32.mrb[0].mxu0
  %v223 = vpop.f32.mrb[0].mxu0
  %v224 = vpop.f32.mrb[0].mxu0
  %225 = vdwg.mxu0
  %vm226 = vcmask 523264
  %227 = vst.msk [vmem:[#allocation2] sm:$0xff] %vm226, %v221
  %s228 = scalar_lea.vmem %s1, 128
  %v229 = vld [vmem:[%s228] sm:$0xf]
  %v230 = vld [vmem:[%s228 + $0x4] sm:$0xf]
  %v231 = vld [vmem:[%s228 + $0x8] sm:$0xf]
  %v232 = vld [vmem:[%s228 + $0xc] sm:$0xf]
  %v233 = vld [vmem:[%s228 + $0x10] sm:$0xf]
  %v234 = vld [vmem:[%s228 + $0x14] sm:$0xf]
  %v235 = vld [vmem:[%s228 + $0x18] sm:$0xf]
  %v236 = vld [vmem:[%s228 + $0x1c] sm:$0xf]
  %v237 = vld [vmem:[%s228 + $0x20] sm:$0xf]
  %v238 = vld [vmem:[%s228 + $0x24] sm:$0xf]
  %v239 = vld [vmem:[%s228 + $0x28] sm:$0xf]
  %v240 = vld [vmem:[%s228 + $0x2c] sm:$0xf]
  %v241 = vld [vmem:[%s228 + $0x30] sm:$0xf]
  %v242 = vld [vmem:[%s228 + $0x34] sm:$0xf]
  %v243 = vld [vmem:[%s228 + $0x38] sm:$0xf]
  %v244 = vld [vmem:[%s228 + $0x3c] sm:$0xf]
  %v245 = vld [vmem:[%s228 + $0x40] sm:$0xf]
  %v246 = vld [vmem:[%s228 + $0x44] sm:$0xf]
  %v247 = vld [vmem:[%s228 + $0x48] sm:$0xf]
  %v248 = vld [vmem:[%s228 + $0x4c] sm:$0xf]
  %v249 = vld [vmem:[%s228 + $0x50] sm:$0xf]
  %v250 = vld [vmem:[%s228 + $0x54] sm:$0xf]
  %v251 = vld [vmem:[%s228 + $0x58] sm:$0xf]
  %v252 = vld [vmem:[%s228 + $0x5c] sm:$0xf]
  %v253 = vld [vmem:[%s228 + $0x60] sm:$0xf]
  %v254 = vld [vmem:[%s228 + $0x64] sm:$0xf]
  %v255 = vld [vmem:[%s228 + $0x68] sm:$0xf]
  %v256 = vld [vmem:[%s228 + $0x6c] sm:$0xf]
  %v257 = vld [vmem:[%s228 + $0x70] sm:$0xf]
  %v258 = vld [vmem:[%s228 + $0x74] sm:$0xf]
  %v259 = vld [vmem:[%s228 + $0x78] sm:$0xf]
  %v260 = vld [vmem:[%s228 + $0x7c] sm:$0xf]
  %v293 = vunpack.c.l.b16 %v229
  %v294 = vunpack.c.l.b16 %v230
  %v295 = vunpack.c.l.b16 %v231
  %v296 = vunpack.c.l.b16 %v232
  %v297 = vunpack.c.l.b16 %v233
  %v298 = vunpack.c.l.b16 %v234
  %v299 = vunpack.c.l.b16 %v235
  %v300 = vunpack.c.l.b16 %v236
  %v301 = vunpack.c.l.b16 %v237
  %v302 = vunpack.c.l.b16 %v238
  %v303 = vunpack.c.l.b16 %v239
  %v304 = vunpack.c.l.b16 %v240
  %v305 = vunpack.c.l.b16 %v241
  %v306 = vunpack.c.l.b16 %v242
  %v307 = vunpack.c.l.b16 %v243
  %v308 = vunpack.c.l.b16 %v244
  %v309 = vunpack.c.l.b16 %v245
  %v310 = vunpack.c.l.b16 %v246
  %v311 = vunpack.c.l.b16 %v247
  %v312 = vunpack.c.l.b16 %v248
  %v313 = vunpack.c.l.b16 %v249
  %v314 = vunpack.c.l.b16 %v250
  %v315 = vunpack.c.l.b16 %v251
  %v316 = vunpack.c.l.b16 %v252
  %v317 = vunpack.c.l.b16 %v253
  %v318 = vunpack.c.l.b16 %v254
  %v319 = vunpack.c.l.b16 %v255
  %v320 = vunpack.c.l.b16 %v256
  %v321 = vunpack.c.l.b16 %v257
  %v322 = vunpack.c.l.b16 %v258
  %v323 = vunpack.c.l.b16 %v259
  %v324 = vunpack.c.l.b16 %v260
  %v325 = vpack.c.b16 %v294, %v293
  %v326 = vpack.c.b16 %v296, %v295
  %v327 = vpack.c.b16 %v298, %v297
  %v328 = vpack.c.b16 %v300, %v299
  %v329 = vpack.c.b16 %v302, %v301
  %v330 = vpack.c.b16 %v304, %v303
  %v331 = vpack.c.b16 %v306, %v305
  %v332 = vpack.c.b16 %v308, %v307
  %v333 = vpack.c.b16 %v310, %v309
  %v334 = vpack.c.b16 %v312, %v311
  %v335 = vpack.c.b16 %v314, %v313
  %v336 = vpack.c.b16 %v316, %v315
  %v337 = vpack.c.b16 %v318, %v317
  %v338 = vpack.c.b16 %v320, %v319
  %v339 = vpack.c.b16 %v322, %v321
  %v340 = vpack.c.b16 %v324, %v323
  %357 = vmatprep.subr.bf16.mxu0 0
  %358 = vmatpush1.bf16.msra.mxu0 %v325
  %359 = vmatprep.subr.bf16.mxu0 0
  %360 = vmatpush1.bf16.msra.mxu0 %v326
  %361 = vmatprep.subr.bf16.mxu0 0
  %362 = vmatpush1.bf16.msra.mxu0 %v327
  %363 = vmatprep.subr.bf16.mxu0 0
  %364 = vmatpush1.bf16.msra.mxu0 %v328
  %365 = vmatprep.subr.bf16.mxu0 0
  %366 = vmatpush1.bf16.msra.mxu0 %v329
  %367 = vmatprep.subr.bf16.mxu0 0
  %368 = vmatpush1.bf16.msra.mxu0 %v330
  %369 = vmatprep.subr.bf16.mxu0 0
  %370 = vmatpush1.bf16.msra.mxu0 %v331
  %371 = vmatprep.subr.bf16.mxu0 0
  %372 = vmatpush1.bf16.msra.mxu0 %v332
  %373 = vmatprep.subr.bf16.mxu0 0
  %374 = vmatpush1.bf16.msra.mxu0 %v333
  %375 = vmatprep.subr.bf16.mxu0 0
  %376 = vmatpush1.bf16.msra.mxu0 %v334
  %377 = vmatprep.subr.bf16.mxu0 0
  %378 = vmatpush1.bf16.msra.mxu0 %v335
  %379 = vmatprep.subr.bf16.mxu0 0
  %380 = vmatpush1.bf16.msra.mxu0 %v336
  %381 = vmatprep.subr.bf16.mxu0 0
  %382 = vmatpush1.bf16.msra.mxu0 %v337
  %383 = vmatprep.subr.bf16.mxu0 0
  %384 = vmatpush1.bf16.msra.mxu0 %v338
  %385 = vmatprep.subr.bf16.mxu0 0
  %386 = vmatpush1.bf16.msra.mxu0 %v339
  %387 = vmatprep.subr.bf16.mxu0 0
  %388 = vmatpush1.bf16.msra.mxu0 %v340
  %389 = vmatprep.mubr.bf16.mxu0 %v87
  %390 = vmatmul.mubr.bf16.gmra.mrb[0].mxu0 %v86
  %v391 = vpop.f32.mrb[0].mxu0
  %v392 = vadd.f32 0.0, %v391
  %v393 = vpop.f32.mrb[0].mxu0
  %v394 = vpop.f32.mrb[0].mxu0
  %v395 = vpop.f32.mrb[0].mxu0
  %396 = vdwg.mxu0
  %397 = vst.msk [vmem:[#allocation2 + $0x8] sm:$0xff] %vm226, %v392
  %s398 = scalar_lea.vmem %s1, 256
  %v399 = vld [vmem:[%s398] sm:$0xf]
  %v400 = vld [vmem:[%s398 + $0x4] sm:$0xf]
  %v401 = vld [vmem:[%s398 + $0x8] sm:$0xf]
  %v402 = vld [vmem:[%s398 + $0xc] sm:$0xf]
  %v403 = vld [vmem:[%s398 + $0x10] sm:$0xf]
  %v404 = vld [vmem:[%s398 + $0x14] sm:$0xf]
  %v405 = vld [vmem:[%s398 + $0x18] sm:$0xf]
  %v406 = vld [vmem:[%s398 + $0x1c] sm:$0xf]
  %v407 = vld [vmem:[%s398 + $0x20] sm:$0xf]
  %v408 = vld [vmem:[%s398 + $0x24] sm:$0xf]
  %v409 = vld [vmem:[%s398 + $0x28] sm:$0xf]
  %v410 = vld [vmem:[%s398 + $0x2c] sm:$0xf]
  %v411 = vld [vmem:[%s398 + $0x30] sm:$0xf]
  %v412 = vld [vmem:[%s398 + $0x34] sm:$0xf]
  %v413 = vld [vmem:[%s398 + $0x38] sm:$0xf]
  %v414 = vld [vmem:[%s398 + $0x3c] sm:$0xf]
  %v415 = vld [vmem:[%s398 + $0x40] sm:$0xf]
  %v416 = vld [vmem:[%s398 + $0x44] sm:$0xf]
  %v417 = vld [vmem:[%s398 + $0x48] sm:$0xf]
  %v418 = vld [vmem:[%s398 + $0x4c] sm:$0xf]
  %v419 = vld [vmem:[%s398 + $0x50] sm:$0xf]
  %v420 = vld [vmem:[%s398 + $0x54] sm:$0xf]
  %v421 = vld [vmem:[%s398 + $0x58] sm:$0xf]
  %v422 = vld [vmem:[%s398 + $0x5c] sm:$0xf]
  %v423 = vld [vmem:[%s398 + $0x60] sm:$0xf]
  %v424 = vld [vmem:[%s398 + $0x64] sm:$0xf]
  %v425 = vld [vmem:[%s398 + $0x68] sm:$0xf]
  %v426 = vld [vmem:[%s398 + $0x6c] sm:$0xf]
  %v427 = vld [vmem:[%s398 + $0x70] sm:$0xf]
  %v428 = vld [vmem:[%s398 + $0x74] sm:$0xf]
  %v429 = vld [vmem:[%s398 + $0x78] sm:$0xf]
  %v430 = vld [vmem:[%s398 + $0x7c] sm:$0xf]
  %v463 = vunpack.c.l.b16 %v399
  %v464 = vunpack.c.l.b16 %v400
  %v465 = vunpack.c.l.b16 %v401
  %v466 = vunpack.c.l.b16 %v402
  %v467 = vunpack.c.l.b16 %v403
  %v468 = vunpack.c.l.b16 %v404
  %v469 = vunpack.c.l.b16 %v405
  %v470 = vunpack.c.l.b16 %v406
  %v471 = vunpack.c.l.b16 %v407
  %v472 = vunpack.c.l.b16 %v408
  %v473 = vunpack.c.l.b16 %v409
  %v474 = vunpack.c.l.b16 %v410
  %v475 = vunpack.c.l.b16 %v411
  %v476 = vunpack.c.l.b16 %v412
  %v477 = vunpack.c.l.b16 %v413
  %v478 = vunpack.c.l.b16 %v414
  %v479 = vunpack.c.l.b16 %v415
  %v480 = vunpack.c.l.b16 %v416
  %v481 = vunpack.c.l.b16 %v417
  %v482 = vunpack.c.l.b16 %v418
  %v483 = vunpack.c.l.b16 %v419
  %v484 = vunpack.c.l.b16 %v420
  %v485 = vunpack.c.l.b16 %v421
  %v486 = vunpack.c.l.b16 %v422
  %v487 = vunpack.c.l.b16 %v423
  %v488 = vunpack.c.l.b16 %v424
  %v489 = vunpack.c.l.b16 %v425
  %v490 = vunpack.c.l.b16 %v426
  %v491 = vunpack.c.l.b16 %v427
  %v492 = vunpack.c.l.b16 %v428
  %v493 = vunpack.c.l.b16 %v429
  %v494 = vunpack.c.l.b16 %v430
  %v495 = vpack.c.b16 %v464, %v463
  %v496 = vpack.c.b16 %v466, %v465
  %v497 = vpack.c.b16 %v468, %v467
  %v498 = vpack.c.b16 %v470, %v469
  %v499 = vpack.c.b16 %v472, %v471
  %v500 = vpack.c.b16 %v474, %v473
  %v501 = vpack.c.b16 %v476, %v475
  %v502 = vpack.c.b16 %v478, %v477
  %v503 = vpack.c.b16 %v480, %v479
  %v504 = vpack.c.b16 %v482, %v481
  %v505 = vpack.c.b16 %v484, %v483
  %v506 = vpack.c.b16 %v486, %v485
  %v507 = vpack.c.b16 %v488, %v487
  %v508 = vpack.c.b16 %v490, %v489
  %v509 = vpack.c.b16 %v492, %v491
  %v510 = vpack.c.b16 %v494, %v493
  %527 = vmatprep.subr.bf16.mxu0 0
  %528 = vmatpush1.bf16.msra.mxu0 %v495
  %529 = vmatprep.subr.bf16.mxu0 0
  %530 = vmatpush1.bf16.msra.mxu0 %v496
  %531 = vmatprep.subr.bf16.mxu0 0
  %532 = vmatpush1.bf16.msra.mxu0 %v497
  %533 = vmatprep.subr.bf16.mxu0 0
  %534 = vmatpush1.bf16.msra.mxu0 %v498
  %535 = vmatprep.subr.bf16.mxu0 0
  %536 = vmatpush1.bf16.msra.mxu0 %v499
  %537 = vmatprep.subr.bf16.mxu0 0
  %538 = vmatpush1.bf16.msra.mxu0 %v500
  %539 = vmatprep.subr.bf16.mxu0 0
  %540 = vmatpush1.bf16.msra.mxu0 %v501
  %541 = vmatprep.subr.bf16.mxu0 0
  %542 = vmatpush1.bf16.msra.mxu0 %v502
  %543 = vmatprep.subr.bf16.mxu0 0
  %544 = vmatpush1.bf16.msra.mxu0 %v503
  %545 = vmatprep.subr.bf16.mxu0 0
  %546 = vmatpush1.bf16.msra.mxu0 %v504
  %547 = vmatprep.subr.bf16.mxu0 0
  %548 = vmatpush1.bf16.msra.mxu0 %v505
  %549 = vmatprep.subr.bf16.mxu0 0
  %550 = vmatpush1.bf16.msra.mxu0 %v506
  %551 = vmatprep.subr.bf16.mxu0 0
  %552 = vmatpush1.bf16.msra.mxu0 %v507
  %553 = vmatprep.subr.bf16.mxu0 0
  %554 = vmatpush1.bf16.msra.mxu0 %v508
  %555 = vmatprep.subr.bf16.mxu0 0
  %556 = vmatpush1.bf16.msra.mxu0 %v509
  %557 = vmatprep.subr.bf16.mxu0 0
  %558 = vmatpush1.bf16.msra.mxu0 %v510
  %559 = vmatprep.mubr.bf16.mxu0 %v87
  %560 = vmatmul.mubr.bf16.gmra.mrb[0].mxu0 %v86
  %v561 = vpop.f32.mrb[0].mxu0
  %v562 = vadd.f32 0.0, %v561
  %v563 = vpop.f32.mrb[0].mxu0
  %v564 = vpop.f32.mrb[0].mxu0
  %v565 = vpop.f32.mrb[0].mxu0
  %566 = vdwg.mxu0
  %567 = vst.msk [vmem:[#allocation2 + $0x10] sm:$0xff] %vm226, %v562
  %s568 = scalar_lea.vmem %s1, 384
  %v569 = vld [vmem:[%s568] sm:$0xf]
  %v570 = vld [vmem:[%s568 + $0x4] sm:$0xf]
  %v571 = vld [vmem:[%s568 + $0x8] sm:$0xf]
  %v572 = vld [vmem:[%s568 + $0xc] sm:$0xf]
  %v573 = vld [vmem:[%s568 + $0x10] sm:$0xf]
  %v574 = vld [vmem:[%s568 + $0x14] sm:$0xf]
  %v575 = vld [vmem:[%s568 + $0x18] sm:$0xf]
  %v576 = vld [vmem:[%s568 + $0x1c] sm:$0xf]
  %v577 = vld [vmem:[%s568 + $0x20] sm:$0xf]
  %v578 = vld [vmem:[%s568 + $0x24] sm:$0xf]
  %v579 = vld [vmem:[%s568 + $0x28] sm:$0xf]
  %v580 = vld [vmem:[%s568 + $0x2c] sm:$0xf]
  %v581 = vld [vmem:[%s568 + $0x30] sm:$0xf]
  %v582 = vld [vmem:[%s568 + $0x34] sm:$0xf]
  %v583 = vld [vmem:[%s568 + $0x38] sm:$0xf]
  %v584 = vld [vmem:[%s568 + $0x3c] sm:$0xf]
  %v585 = vld [vmem:[%s568 + $0x40] sm:$0xf]
  %v586 = vld [vmem:[%s568 + $0x44] sm:$0xf]
  %v587 = vld [vmem:[%s568 + $0x48] sm:$0xf]
  %v588 = vld [vmem:[%s568 + $0x4c] sm:$0xf]
  %v589 = vld [vmem:[%s568 + $0x50] sm:$0xf]
  %v590 = vld [vmem:[%s568 + $0x54] sm:$0xf]
  %v591 = vld [vmem:[%s568 + $0x58] sm:$0xf]
  %v592 = vld [vmem:[%s568 + $0x5c] sm:$0xf]
  %v593 = vld [vmem:[%s568 + $0x60] sm:$0xf]
  %v594 = vld [vmem:[%s568 + $0x64] sm:$0xf]
  %v595 = vld [vmem:[%s568 + $0x68] sm:$0xf]
  %v596 = vld [vmem:[%s568 + $0x6c] sm:$0xf]
  %v597 = vld [vmem:[%s568 + $0x70] sm:$0xf]
  %v598 = vld [vmem:[%s568 + $0x74] sm:$0xf]
  %v599 = vld [vmem:[%s568 + $0x78] sm:$0xf]
  %v600 = vld [vmem:[%s568 + $0x7c] sm:$0xf]
  %v633 = vunpack.c.l.b16 %v569
  %v634 = vunpack.c.l.b16 %v570
  %v635 = vunpack.c.l.b16 %v571
  %v636 = vunpack.c.l.b16 %v572
  %v637 = vunpack.c.l.b16 %v573
  %v638 = vunpack.c.l.b16 %v574
  %v639 = vunpack.c.l.b16 %v575
  %v640 = vunpack.c.l.b16 %v576
  %v641 = vunpack.c.l.b16 %v577
  %v642 = vunpack.c.l.b16 %v578
  %v643 = vunpack.c.l.b16 %v579
  %v644 = vunpack.c.l.b16 %v580
  %v645 = vunpack.c.l.b16 %v581
  %v646 = vunpack.c.l.b16 %v582
  %v647 = vunpack.c.l.b16 %v583
  %v648 = vunpack.c.l.b16 %v584
  %v649 = vunpack.c.l.b16 %v585
  %v650 = vunpack.c.l.b16 %v586
  %v651 = vunpack.c.l.b16 %v587
  %v652 = vunpack.c.l.b16 %v588
  %v653 = vunpack.c.l.b16 %v589
  %v654 = vunpack.c.l.b16 %v590
  %v655 = vunpack.c.l.b16 %v591
  %v656 = vunpack.c.l.b16 %v592
  %v657 = vunpack.c.l.b16 %v593
  %v658 = vunpack.c.l.b16 %v594
  %v659 = vunpack.c.l.b16 %v595
  %v660 = vunpack.c.l.b16 %v596
  %v661 = vunpack.c.l.b16 %v597
  %v662 = vunpack.c.l.b16 %v598
  %v663 = vunpack.c.l.b16 %v599
  %v664 = vunpack.c.l.b16 %v600
  %v665 = vpack.c.b16 %v634, %v633
  %v666 = vpack.c.b16 %v636, %v635
  %v667 = vpack.c.b16 %v638, %v637
  %v668 = vpack.c.b16 %v640, %v639
  %v669 = vpack.c.b16 %v642, %v641
  %v670 = vpack.c.b16 %v644, %v643
  %v671 = vpack.c.b16 %v646, %v645
  %v672 = vpack.c.b16 %v648, %v647
  %v673 = vpack.c.b16 %v650, %v649
  %v674 = vpack.c.b16 %v652, %v651
  %v675 = vpack.c.b16 %v654, %v653
  %v676 = vpack.c.b16 %v656, %v655
  %v677 = vpack.c.b16 %v658, %v657
  %v678 = vpack.c.b16 %v660, %v659
  %v679 = vpack.c.b16 %v662, %v661
  %v680 = vpack.c.b16 %v664, %v663
  %697 = vmatprep.subr.bf16.mxu0 0
  %698 = vmatpush1.bf16.msra.mxu0 %v665
  %699 = vmatprep.subr.bf16.mxu0 0
  %700 = vmatpush1.bf16.msra.mxu0 %v666
  %701 = vmatprep.subr.bf16.mxu0 0
  %702 = vmatpush1.bf16.msra.mxu0 %v667
  %703 = vmatprep.subr.bf16.mxu0 0
  %704 = vmatpush1.bf16.msra.mxu0 %v668
  %705 = vmatprep.subr.bf16.mxu0 0
  %706 = vmatpush1.bf16.msra.mxu0 %v669
  %707 = vmatprep.subr.bf16.mxu0 0
  %708 = vmatpush1.bf16.msra.mxu0 %v670
  %709 = vmatprep.subr.bf16.mxu0 0
  %710 = vmatpush1.bf16.msra.mxu0 %v671
  %711 = vmatprep.subr.bf16.mxu0 0
  %712 = vmatpush1.bf16.msra.mxu0 %v672
  %713 = vmatprep.subr.bf16.mxu0 0
  %714 = vmatpush1.bf16.msra.mxu0 %v673
  %715 = vmatprep.subr.bf16.mxu0 0
  %716 = vmatpush1.bf16.msra.mxu0 %v674
  %717 = vmatprep.subr.bf16.mxu0 0
  %718 = vmatpush1.bf16.msra.mxu0 %v675
  %719 = vmatprep.subr.bf16.mxu0 0
  %720 = vmatpush1.bf16.msra.mxu0 %v676
  %721 = vmatprep.subr.bf16.mxu0 0
  %722 = vmatpush1.bf16.msra.mxu0 %v677
  %723 = vmatprep.subr.bf16.mxu0 0
  %724 = vmatpush1.bf16.msra.mxu0 %v678
  %725 = vmatprep.subr.bf16.mxu0 0
  %726 = vmatpush1.bf16.msra.mxu0 %v679
  %727 = vmatprep.subr.bf16.mxu0 0
  %728 = vmatpush1.bf16.msra.mxu0 %v680
  %729 = vmatprep.mubr.bf16.mxu0 %v87
  %730 = vmatmul.mubr.bf16.gmra.mrb[0].mxu0 %v86
  %v731 = vpop.f32.mrb[0].mxu0
  %v732 = vadd.f32 0.0, %v731
  %v733 = vpop.f32.mrb[0].mxu0
  %v734 = vpop.f32.mrb[0].mxu0
  %v735 = vpop.f32.mrb[0].mxu0
  %736 = vdwg.mxu0
  %737 = vst.msk [vmem:[#allocation2 + $0x18] sm:$0xff] %vm226, %v732
  %s738 = scalar_lea.vmem %s1, 512
  %v739 = vld [vmem:[%s738] sm:$0xf]
  %v740 = vld [vmem:[%s738 + $0x4] sm:$0xf]
  %v741 = vld [vmem:[%s738 + $0x8] sm:$0xf]
  %v742 = vld [vmem:[%s738 + $0xc] sm:$0xf]
  %v743 = vld [vmem:[%s738 + $0x10] sm:$0xf]
  %v744 = vld [vmem:[%s738 + $0x14] sm:$0xf]
  %v745 = vld [vmem:[%s738 + $0x18] sm:$0xf]
  %v746 = vld [vmem:[%s738 + $0x1c] sm:$0xf]
  %v747 = vld [vmem:[%s738 + $0x20] sm:$0xf]
  %v748 = vld [vmem:[%s738 + $0x24] sm:$0xf]
  %v749 = vld [vmem:[%s738 + $0x28] sm:$0xf]
  %v750 = vld [vmem:[%s738 + $0x2c] sm:$0xf]
  %v751 = vld [vmem:[%s738 + $0x30] sm:$0xf]
  %v752 = vld [vmem:[%s738 + $0x34] sm:$0xf]
  %v753 = vld [vmem:[%s738 + $0x38] sm:$0xf]
  %v754 = vld [vmem:[%s738 + $0x3c] sm:$0xf]
  %v755 = vld [vmem:[%s738 + $0x40] sm:$0xf]
  %v756 = vld [vmem:[%s738 + $0x44] sm:$0xf]
  %v757 = vld [vmem:[%s738 + $0x48] sm:$0xf]
  %v758 = vld [vmem:[%s738 + $0x4c] sm:$0xf]
  %v759 = vld [vmem:[%s738 + $0x50] sm:$0xf]
  %v760 = vld [vmem:[%s738 + $0x54] sm:$0xf]
  %v761 = vld [vmem:[%s738 + $0x58] sm:$0xf]
  %v762 = vld [vmem:[%s738 + $0x5c] sm:$0xf]
  %v763 = vld [vmem:[%s738 + $0x60] sm:$0xf]
  %v764 = vld [vmem:[%s738 + $0x64] sm:$0xf]
  %v765 = vld [vmem:[%s738 + $0x68] sm:$0xf]
  %v766 = vld [vmem:[%s738 + $0x6c] sm:$0xf]
  %v767 = vld [vmem:[%s738 + $0x70] sm:$0xf]
  %v768 = vld [vmem:[%s738 + $0x74] sm:$0xf]
  %v769 = vld [vmem:[%s738 + $0x78] sm:$0xf]
  %v770 = vld [vmem:[%s738 + $0x7c] sm:$0xf]
  %v803 = vunpack.c.l.b16 %v739
  %v804 = vunpack.c.l.b16 %v740
  %v805 = vunpack.c.l.b16 %v741
  %v806 = vunpack.c.l.b16 %v742
  %v807 = vunpack.c.l.b16 %v743
  %v808 = vunpack.c.l.b16 %v744
  %v809 = vunpack.c.l.b16 %v745
  %v810 = vunpack.c.l.b16 %v746
  %v811 = vunpack.c.l.b16 %v747
  %v812 = vunpack.c.l.b16 %v748
  %v813 = vunpack.c.l.b16 %v749
  %v814 = vunpack.c.l.b16 %v750
  %v815 = vunpack.c.l.b16 %v751
  %v816 = vunpack.c.l.b16 %v752
  %v817 = vunpack.c.l.b16 %v753
  %v818 = vunpack.c.l.b16 %v754
  %v819 = vunpack.c.l.b16 %v755
  %v820 = vunpack.c.l.b16 %v756
  %v821 = vunpack.c.l.b16 %v757
  %v822 = vunpack.c.l.b16 %v758
  %v823 = vunpack.c.l.b16 %v759
  %v824 = vunpack.c.l.b16 %v760
  %v825 = vunpack.c.l.b16 %v761
  %v826 = vunpack.c.l.b16 %v762
  %v827 = vunpack.c.l.b16 %v763
  %v828 = vunpack.c.l.b16 %v764
  %v829 = vunpack.c.l.b16 %v765
  %v830 = vunpack.c.l.b16 %v766
  %v831 = vunpack.c.l.b16 %v767
  %v832 = vunpack.c.l.b16 %v768
  %v833 = vunpack.c.l.b16 %v769
  %v834 = vunpack.c.l.b16 %v770
  %v835 = vpack.c.b16 %v804, %v803
  %v836 = vpack.c.b16 %v806, %v805
  %v837 = vpack.c.b16 %v808, %v807
  %v838 = vpack.c.b16 %v810, %v809
  %v839 = vpack.c.b16 %v812, %v811
  %v840 = vpack.c.b16 %v814, %v813
  %v841 = vpack.c.b16 %v816, %v815
  %v842 = vpack.c.b16 %v818, %v817
  %v843 = vpack.c.b16 %v820, %v819
  %v844 = vpack.c.b16 %v822, %v821
  %v845 = vpack.c.b16 %v824, %v823
  %v846 = vpack.c.b16 %v826, %v825
  %v847 = vpack.c.b16 %v828, %v827
  %v848 = vpack.c.b16 %v830, %v829
  %v849 = vpack.c.b16 %v832, %v831
  %v850 = vpack.c.b16 %v834, %v833
  %867 = vmatprep.subr.bf16.mxu0 0
  %868 = vmatpush1.bf16.msra.mxu0 %v835
  %869 = vmatprep.subr.bf16.mxu0 0
  %870 = vmatpush1.bf16.msra.mxu0 %v836
  %871 = vmatprep.subr.bf16.mxu0 0
  %872 = vmatpush1.bf16.msra.mxu0 %v837
  %873 = vmatprep.subr.bf16.mxu0 0
  %874 = vmatpush1.bf16.msra.mxu0 %v838
  %875 = vmatprep.subr.bf16.mxu0 0
  %876 = vmatpush1.bf16.msra.mxu0 %v839
  %877 = vmatprep.subr.bf16.mxu0 0
  %878 = vmatpush1.bf16.msra.mxu0 %v840
  %879 = vmatprep.subr.bf16.mxu0 0
  %880 = vmatpush1.bf16.msra.mxu0 %v841
  %881 = vmatprep.subr.bf16.mxu0 0
  %882 = vmatpush1.bf16.msra.mxu0 %v842
  %883 = vmatprep.subr.bf16.mxu0 0
  %884 = vmatpush1.bf16.msra.mxu0 %v843
  %885 = vmatprep.subr.bf16.mxu0 0
  %886 = vmatpush1.bf16.msra.mxu0 %v844
  %887 = vmatprep.subr.bf16.mxu0 0
  %888 = vmatpush1.bf16.msra.mxu0 %v845
  %889 = vmatprep.subr.bf16.mxu0 0
  %890 = vmatpush1.bf16.msra.mxu0 %v846
  %891 = vmatprep.subr.bf16.mxu0 0
  %892 = vmatpush1.bf16.msra.mxu0 %v847
  %893 = vmatprep.subr.bf16.mxu0 0
  %894 = vmatpush1.bf16.msra.mxu0 %v848
  %895 = vmatprep.subr.bf16.mxu0 0
  %896 = vmatpush1.bf16.msra.mxu0 %v849
  %897 = vmatprep.subr.bf16.mxu0 0
  %898 = vmatpush1.bf16.msra.mxu0 %v850
  %899 = vmatprep.mubr.bf16.mxu0 %v87
  %900 = vmatmul.mubr.bf16.gmra.mrb[0].mxu0 %v86
  %v901 = vpop.f32.mrb[0].mxu0
  %v902 = vadd.f32 0.0, %v901
  %v903 = vpop.f32.mrb[0].mxu0
  %v904 = vpop.f32.mrb[0].mxu0
  %v905 = vpop.f32.mrb[0].mxu0
  %906 = vdwg.mxu0
  %907 = vst.msk [vmem:[#allocation2 + $0x20] sm:$0xff] %vm226, %v902
  %s908 = scalar_lea.vmem %s1, 640
  %v909 = vld [vmem:[%s908] sm:$0xf]
  %v910 = vld [vmem:[%s908 + $0x4] sm:$0xf]
  %v911 = vld [vmem:[%s908 + $0x8] sm:$0xf]
  %v912 = vld [vmem:[%s908 + $0xc] sm:$0xf]
  %v913 = vld [vmem:[%s908 + $0x10] sm:$0xf]
  %v914 = vld [vmem:[%s908 + $0x14] sm:$0xf]
  %v915 = vld [vmem:[%s908 + $0x18] sm:$0xf]
  %v916 = vld [vmem:[%s908 + $0x1c] sm:$0xf]
  %v917 = vld [vmem:[%s908 + $0x20] sm:$0xf]
  %v918 = vld [vmem:[%s908 + $0x24] sm:$0xf]
  %v919 = vld [vmem:[%s908 + $0x28] sm:$0xf]
  %v920 = vld [vmem:[%s908 + $0x2c] sm:$0xf]
  %v921 = vld [vmem:[%s908 + $0x30] sm:$0xf]
  %v922 = vld [vmem:[%s908 + $0x34] sm:$0xf]
  %v923 = vld [vmem:[%s908 + $0x38] sm:$0xf]
  %v924 = vld [vmem:[%s908 + $0x3c] sm:$0xf]
  %v925 = vld [vmem:[%s908 + $0x40] sm:$0xf]
  %v926 = vld [vmem:[%s908 + $0x44] sm:$0xf]
  %v927 = vld [vmem:[%s908 + $0x48] sm:$0xf]
  %v928 = vld [vmem:[%s908 + $0x4c] sm:$0xf]
  %v929 = vld [vmem:[%s908 + $0x50] sm:$0xf]
  %v930 = vld [vmem:[%s908 + $0x54] sm:$0xf]
  %v931 = vld [vmem:[%s908 + $0x58] sm:$0xf]
  %v932 = vld [vmem:[%s908 + $0x5c] sm:$0xf]
  %v933 = vld [vmem:[%s908 + $0x60] sm:$0xf]
  %v934 = vld [vmem:[%s908 + $0x64] sm:$0xf]
  %v935 = vld [vmem:[%s908 + $0x68] sm:$0xf]
  %v936 = vld [vmem:[%s908 + $0x6c] sm:$0xf]
  %v937 = vld [vmem:[%s908 + $0x70] sm:$0xf]
  %v938 = vld [vmem:[%s908 + $0x74] sm:$0xf]
  %v939 = vld [vmem:[%s908 + $0x78] sm:$0xf]
  %v940 = vld [vmem:[%s908 + $0x7c] sm:$0xf]
  %v973 = vunpack.c.l.b16 %v909
  %v974 = vunpack.c.l.b16 %v910
  %v975 = vunpack.c.l.b16 %v911
  %v976 = vunpack.c.l.b16 %v912
  %v977 = vunpack.c.l.b16 %v913
  %v978 = vunpack.c.l.b16 %v914
  %v979 = vunpack.c.l.b16 %v915
  %v980 = vunpack.c.l.b16 %v916
  %v981 = vunpack.c.l.b16 %v917
  %v982 = vunpack.c.l.b16 %v918
  %v983 = vunpack.c.l.b16 %v919
  %v984 = vunpack.c.l.b16 %v920
  %v985 = vunpack.c.l.b16 %v921
  %v986 = vunpack.c.l.b16 %v922
  %v987 = vunpack.c.l.b16 %v923
  %v988 = vunpack.c.l.b16 %v924
  %v989 = vunpack.c.l.b16 %v925
  %v990 = vunpack.c.l.b16 %v926
  %v991 = vunpack.c.l.b16 %v927
  %v992 = vunpack.c.l.b16 %v928
  %v993 = vunpack.c.l.b16 %v929
  %v994 = vunpack.c.l.b16 %v930
  %v995 = vunpack.c.l.b16 %v931
  %v996 = vunpack.c.l.b16 %v932
  %v997 = vunpack.c.l.b16 %v933
  %v998 = vunpack.c.l.b16 %v934
  %v999 = vunpack.c.l.b16 %v935
  %v1000 = vunpack.c.l.b16 %v936
  %v1001 = vunpack.c.l.b16 %v937
  %v1002 = vunpack.c.l.b16 %v938
  %v1003 = vunpack.c.l.b16 %v939
  %v1004 = vunpack.c.l.b16 %v940
  %v1005 = vpack.c.b16 %v974, %v973
  %v1006 = vpack.c.b16 %v976, %v975
  %v1007 = vpack.c.b16 %v978, %v977
  %v1008 = vpack.c.b16 %v980, %v979
  %v1009 = vpack.c.b16 %v982, %v981
  %v1010 = vpack.c.b16 %v984, %v983
  %v1011 = vpack.c.b16 %v986, %v985
  %v1012 = vpack.c.b16 %v988, %v987
  %v1013 = vpack.c.b16 %v990, %v989
  %v1014 = vpack.c.b16 %v992, %v991
  %v1015 = vpack.c.b16 %v994, %v993
  %v1016 = vpack.c.b16 %v996, %v995
  %v1017 = vpack.c.b16 %v998, %v997
  %v1018 = vpack.c.b16 %v1000, %v999
  %v1019 = vpack.c.b16 %v1002, %v1001
  %v1020 = vpack.c.b16 %v1004, %v1003
  %1037 = vmatprep.subr.bf16.mxu0 0
  %1038 = vmatpush1.bf16.msra.mxu0 %v1005
  %1039 = vmatprep.subr.bf16.mxu0 0
  %1040 = vmatpush1.bf16.msra.mxu0 %v1006
  %1041 = vmatprep.subr.bf16.mxu0 0
  %1042 = vmatpush1.bf16.msra.mxu0 %v1007
  %1043 = vmatprep.subr.bf16.mxu0 0
  %1044 = vmatpush1.bf16.msra.mxu0 %v1008
  %1045 = vmatprep.subr.bf16.mxu0 0
  %1046 = vmatpush1.bf16.msra.mxu0 %v1009
  %1047 = vmatprep.subr.bf16.mxu0 0
  %1048 = vmatpush1.bf16.msra.mxu0 %v1010
  %1049 = vmatprep.subr.bf16.mxu0 0
  %1050 = vmatpush1.bf16.msra.mxu0 %v1011
  %1051 = vmatprep.subr.bf16.mxu0 0
  %1052 = vmatpush1.bf16.msra.mxu0 %v1012
  %1053 = vmatprep.subr.bf16.mxu0 0
  %1054 = vmatpush1.bf16.msra.mxu0 %v1013
  %1055 = vmatprep.subr.bf16.mxu0 0
  %1056 = vmatpush1.bf16.msra.mxu0 %v1014
  %1057 = vmatprep.subr.bf16.mxu0 0
  %1058 = vmatpush1.bf16.msra.mxu0 %v1015
  %1059 = vmatprep.subr.bf16.mxu0 0
  %1060 = vmatpush1.bf16.msra.mxu0 %v1016
  %1061 = vmatprep.subr.bf16.mxu0 0
  %1062 = vmatpush1.bf16.msra.mxu0 %v1017
  %1063 = vmatprep.subr.bf16.mxu0 0
  %1064 = vmatpush1.bf16.msra.mxu0 %v1018
  %1065 = vmatprep.subr.bf16.mxu0 0
  %1066 = vmatpush1.bf16.msra.mxu0 %v1019
  %1067 = vmatprep.subr.bf16.mxu0 0
  %1068 = vmatpush1.bf16.msra.mxu0 %v1020
  %1069 = vmatprep.mubr.bf16.mxu0 %v87
  %1070 = vmatmul.mubr.bf16.gmra.mrb[0].mxu0 %v86
  %v1071 = vpop.f32.mrb[0].mxu0
  %v1072 = vadd.f32 0.0, %v1071
  %v1073 = vpop.f32.mrb[0].mxu0
  %v1074 = vpop.f32.mrb[0].mxu0
  %v1075 = vpop.f32.mrb[0].mxu0
  %1076 = vdwg.mxu0
  %1077 = vst.msk [vmem:[#allocation2 + $0x28] sm:$0xff] %vm226, %v1072
  %s1078 = scalar_lea.vmem %s1, 768
  %v1079 = vld [vmem:[%s1078] sm:$0xf]
  %v1080 = vld [vmem:[%s1078 + $0x4] sm:$0xf]
  %v1081 = vld [vmem:[%s1078 + $0x8] sm:$0xf]
  %v1082 = vld [vmem:[%s1078 + $0xc] sm:$0xf]
  %v1083 = vld [vmem:[%s1078 + $0x10] sm:$0xf]
  %v1084 = vld [vmem:[%s1078 + $0x14] sm:$0xf]
  %v1085 = vld [vmem:[%s1078 + $0x18] sm:$0xf]
  %v1086 = vld [vmem:[%s1078 + $0x1c] sm:$0xf]
  %v1087 = vld [vmem:[%s1078 + $0x20] sm:$0xf]
  %v1088 = vld [vmem:[%s1078 + $0x24] sm:$0xf]
  %v1089 = vld [vmem:[%s1078 + $0x28] sm:$0xf]
  %v1090 = vld [vmem:[%s1078 + $0x2c] sm:$0xf]
  %v1091 = vld [vmem:[%s1078 + $0x30] sm:$0xf]
  %v1092 = vld [vmem:[%s1078 + $0x34] sm:$0xf]
  %v1093 = vld [vmem:[%s1078 + $0x38] sm:$0xf]
  %v1094 = vld [vmem:[%s1078 + $0x3c] sm:$0xf]
  %v1095 = vld [vmem:[%s1078 + $0x40] sm:$0xf]
  %v1096 = vld [vmem:[%s1078 + $0x44] sm:$0xf]
  %v1097 = vld [vmem:[%s1078 + $0x48] sm:$0xf]
  %v1098 = vld [vmem:[%s1078 + $0x4c] sm:$0xf]
  %v1099 = vld [vmem:[%s1078 + $0x50] sm:$0xf]
  %v1100 = vld [vmem:[%s1078 + $0x54] sm:$0xf]
  %v1101 = vld [vmem:[%s1078 + $0x58] sm:$0xf]
  %v1102 = vld [vmem:[%s1078 + $0x5c] sm:$0xf]
  %v1103 = vld [vmem:[%s1078 + $0x60] sm:$0xf]
  %v1104 = vld [vmem:[%s1078 + $0x64] sm:$0xf]
  %v1105 = vld [vmem:[%s1078 + $0x68] sm:$0xf]
  %v1106 = vld [vmem:[%s1078 + $0x6c] sm:$0xf]
  %v1107 = vld [vmem:[%s1078 + $0x70] sm:$0xf]
  %v1108 = vld [vmem:[%s1078 + $0x74] sm:$0xf]
  %v1109 = vld [vmem:[%s1078 + $0x78] sm:$0xf]
  %v1110 = vld [vmem:[%s1078 + $0x7c] sm:$0xf]
  %v1143 = vunpack.c.l.b16 %v1079
  %v1144 = vunpack.c.l.b16 %v1080
  %v1145 = vunpack.c.l.b16 %v1081
  %v1146 = vunpack.c.l.b16 %v1082
  %v1147 = vunpack.c.l.b16 %v1083
  %v1148 = vunpack.c.l.b16 %v1084
  %v1149 = vunpack.c.l.b16 %v1085
  %v1150 = vunpack.c.l.b16 %v1086
  %v1151 = vunpack.c.l.b16 %v1087
  %v1152 = vunpack.c.l.b16 %v1088
  %v1153 = vunpack.c.l.b16 %v1089
  %v1154 = vunpack.c.l.b16 %v1090
  %v1155 = vunpack.c.l.b16 %v1091
  %v1156 = vunpack.c.l.b16 %v1092
  %v1157 = vunpack.c.l.b16 %v1093
  %v1158 = vunpack.c.l.b16 %v1094
  %v1159 = vunpack.c.l.b16 %v1095
  %v1160 = vunpack.c.l.b16 %v1096
  %v1161 = vunpack.c.l.b16 %v1097
  %v1162 = vunpack.c.l.b16 %v1098
  %v1163 = vunpack.c.l.b16 %v1099
  %v1164 = vunpack.c.l.b16 %v1100
  %v1165 = vunpack.c.l.b16 %v1101
  %v1166 = vunpack.c.l.b16 %v1102
  %v1167 = vunpack.c.l.b16 %v1103
  %v1168 = vunpack.c.l.b16 %v1104
  %v1169 = vunpack.c.l.b16 %v1105
  %v1170 = vunpack.c.l.b16 %v1106
  %v1171 = vunpack.c.l.b16 %v1107
  %v1172 = vunpack.c.l.b16 %v1108
  %v1173 = vunpack.c.l.b16 %v1109
  %v1174 = vunpack.c.l.b16 %v1110
  %v1175 = vpack.c.b16 %v1144, %v1143
  %v1176 = vpack.c.b16 %v1146, %v1145
  %v1177 = vpack.c.b16 %v1148, %v1147
  %v1178 = vpack.c.b16 %v1150, %v1149
  %v1179 = vpack.c.b16 %v1152, %v1151
  %v1180 = vpack.c.b16 %v1154, %v1153
  %v1181 = vpack.c.b16 %v1156, %v1155
  %v1182 = vpack.c.b16 %v1158, %v1157
  %v1183 = vpack.c.b16 %v1160, %v1159
  %v1184 = vpack.c.b16 %v1162, %v1161
  %v1185 = vpack.c.b16 %v1164, %v1163
  %v1186 = vpack.c.b16 %v1166, %v1165
  %v1187 = vpack.c.b16 %v1168, %v1167
  %v1188 = vpack.c.b16 %v1170, %v1169
  %v1189 = vpack.c.b16 %v1172, %v1171
  %v1190 = vpack.c.b16 %v1174, %v1173
  %1207 = vmatprep.subr.bf16.mxu0 0
  %1208 = vmatpush1.bf16.msra.mxu0 %v1175
  %1209 = vmatprep.subr.bf16.mxu0 0
  %1210 = vmatpush1.bf16.msra.mxu0 %v1176
  %1211 = vmatprep.subr.bf16.mxu0 0
  %1212 = vmatpush1.bf16.msra.mxu0 %v1177
  %1213 = vmatprep.subr.bf16.mxu0 0
  %1214 = vmatpush1.bf16.msra.mxu0 %v1178
  %1215 = vmatprep.subr.bf16.mxu0 0
  %1216 = vmatpush1.bf16.msra.mxu0 %v1179
  %1217 = vmatprep.subr.bf16.mxu0 0
  %1218 = vmatpush1.bf16.msra.mxu0 %v1180
  %1219 = vmatprep.subr.bf16.mxu0 0
  %1220 = vmatpush1.bf16.msra.mxu0 %v1181
  %1221 = vmatprep.subr.bf16.mxu0 0
  %1222 = vmatpush1.bf16.msra.mxu0 %v1182
  %1223 = vmatprep.subr.bf16.mxu0 0
  %1224 = vmatpush1.bf16.msra.mxu0 %v1183
  %1225 = vmatprep.subr.bf16.mxu0 0
  %1226 = vmatpush1.bf16.msra.mxu0 %v1184
  %1227 = vmatprep.subr.bf16.mxu0 0
  %1228 = vmatpush1.bf16.msra.mxu0 %v1185
  %1229 = vmatprep.subr.bf16.mxu0 0
  %1230 = vmatpush1.bf16.msra.mxu0 %v1186
  %1231 = vmatprep.subr.bf16.mxu0 0
  %1232 = vmatpush1.bf16.msra.mxu0 %v1187
  %1233 = vmatprep.subr.bf16.mxu0 0
  %1234 = vmatpush1.bf16.msra.mxu0 %v1188
  %1235 = vmatprep.subr.bf16.mxu0 0
  %1236 = vmatpush1.bf16.msra.mxu0 %v1189
  %1237 = vmatprep.subr.bf16.mxu0 0
  %1238 = vmatpush1.bf16.msra.mxu0 %v1190
  %1239 = vmatprep.mubr.bf16.mxu0 %v87
  %1240 = vmatmul.mubr.bf16.gmra.mrb[0].mxu0 %v86
  %v1241 = vpop.f32.mrb[0].mxu0
  %v1242 = vadd.f32 0.0, %v1241
  %v1243 = vpop.f32.mrb[0].mxu0
  %v1244 = vpop.f32.mrb[0].mxu0
  %v1245 = vpop.f32.mrb[0].mxu0
  %1246 = vdwg.mxu0
  %1247 = vst.msk [vmem:[#allocation2 + $0x30] sm:$0xff] %vm226, %v1242
  %s1248 = scalar_lea.vmem %s1, 896
  %v1249 = vld [vmem:[%s1248] sm:$0xf]
  %v1250 = vld [vmem:[%s1248 + $0x4] sm:$0xf]
  %v1251 = vld [vmem:[%s1248 + $0x8] sm:$0xf]
  %v1252 = vld [vmem:[%s1248 + $0xc] sm:$0xf]
  %v1253 = vld [vmem:[%s1248 + $0x10] sm:$0xf]
  %v1254 = vld [vmem:[%s1248 + $0x14] sm:$0xf]
  %v1255 = vld [vmem:[%s1248 + $0x18] sm:$0xf]
  %v1256 = vld [vmem:[%s1248 + $0x1c] sm:$0xf]
  %v1257 = vld [vmem:[%s1248 + $0x20] sm:$0xf]
  %v1258 = vld [vmem:[%s1248 + $0x24] sm:$0xf]
  %v1259 = vld [vmem:[%s1248 + $0x28] sm:$0xf]
  %v1260 = vld [vmem:[%s1248 + $0x2c] sm:$0xf]
  %v1261 = vld [vmem:[%s1248 + $0x30] sm:$0xf]
  %v1262 = vld [vmem:[%s1248 + $0x34] sm:$0xf]
  %v1263 = vld [vmem:[%s1248 + $0x38] sm:$0xf]
  %v1264 = vld [vmem:[%s1248 + $0x3c] sm:$0xf]
  %v1265 = vld [vmem:[%s1248 + $0x40] sm:$0xf]
  %v1266 = vld [vmem:[%s1248 + $0x44] sm:$0xf]
  %v1267 = vld [vmem:[%s1248 + $0x48] sm:$0xf]
  %v1268 = vld [vmem:[%s1248 + $0x4c] sm:$0xf]
  %v1269 = vld [vmem:[%s1248 + $0x50] sm:$0xf]
  %v1270 = vld [vmem:[%s1248 + $0x54] sm:$0xf]
  %v1271 = vld [vmem:[%s1248 + $0x58] sm:$0xf]
  %v1272 = vld [vmem:[%s1248 + $0x5c] sm:$0xf]
  %v1273 = vld [vmem:[%s1248 + $0x60] sm:$0xf]
  %v1274 = vld [vmem:[%s1248 + $0x64] sm:$0xf]
  %v1275 = vld [vmem:[%s1248 + $0x68] sm:$0xf]
  %v1276 = vld [vmem:[%s1248 + $0x6c] sm:$0xf]
  %v1277 = vld [vmem:[%s1248 + $0x70] sm:$0xf]
  %v1278 = vld [vmem:[%s1248 + $0x74] sm:$0xf]
  %v1279 = vld [vmem:[%s1248 + $0x78] sm:$0xf]
  %v1280 = vld [vmem:[%s1248 + $0x7c] sm:$0xf]
  %v1313 = vunpack.c.l.b16 %v1249
  %v1314 = vunpack.c.l.b16 %v1250
  %v1315 = vunpack.c.l.b16 %v1251
  %v1316 = vunpack.c.l.b16 %v1252
  %v1317 = vunpack.c.l.b16 %v1253
  %v1318 = vunpack.c.l.b16 %v1254
  %v1319 = vunpack.c.l.b16 %v1255
  %v1320 = vunpack.c.l.b16 %v1256
  %v1321 = vunpack.c.l.b16 %v1257
  %v1322 = vunpack.c.l.b16 %v1258
  %v1323 = vunpack.c.l.b16 %v1259
  %v1324 = vunpack.c.l.b16 %v1260
  %v1325 = vunpack.c.l.b16 %v1261
  %v1326 = vunpack.c.l.b16 %v1262
  %v1327 = vunpack.c.l.b16 %v1263
  %v1328 = vunpack.c.l.b16 %v1264
  %v1329 = vunpack.c.l.b16 %v1265
  %v1330 = vunpack.c.l.b16 %v1266
  %v1331 = vunpack.c.l.b16 %v1267
  %v1332 = vunpack.c.l.b16 %v1268
  %v1333 = vunpack.c.l.b16 %v1269
  %v1334 = vunpack.c.l.b16 %v1270
  %v1335 = vunpack.c.l.b16 %v1271
  %v1336 = vunpack.c.l.b16 %v1272
  %v1337 = vunpack.c.l.b16 %v1273
  %v1338 = vunpack.c.l.b16 %v1274
  %v1339 = vunpack.c.l.b16 %v1275
  %v1340 = vunpack.c.l.b16 %v1276
  %v1341 = vunpack.c.l.b16 %v1277
  %v1342 = vunpack.c.l.b16 %v1278
  %v1343 = vunpack.c.l.b16 %v1279
  %v1344 = vunpack.c.l.b16 %v1280
  %v1345 = vpack.c.b16 %v1314, %v1313
  %v1346 = vpack.c.b16 %v1316, %v1315
  %v1347 = vpack.c.b16 %v1318, %v1317
  %v1348 = vpack.c.b16 %v1320, %v1319
  %v1349 = vpack.c.b16 %v1322, %v1321
  %v1350 = vpack.c.b16 %v1324, %v1323
  %v1351 = vpack.c.b16 %v1326, %v1325
  %v1352 = vpack.c.b16 %v1328, %v1327
  %v1353 = vpack.c.b16 %v1330, %v1329
  %v1354 = vpack.c.b16 %v1332, %v1331
  %v1355 = vpack.c.b16 %v1334, %v1333
  %v1356 = vpack.c.b16 %v1336, %v1335
  %v1357 = vpack.c.b16 %v1338, %v1337
  %v1358 = vpack.c.b16 %v1340, %v1339
  %v1359 = vpack.c.b16 %v1342, %v1341
  %v1360 = vpack.c.b16 %v1344, %v1343
  %1377 = vmatprep.subr.bf16.mxu0 0
  %1378 = vmatpush1.bf16.msra.mxu0 %v1345
  %1379 = vmatprep.subr.bf16.mxu0 0
  %1380 = vmatpush1.bf16.msra.mxu0 %v1346
  %1381 = vmatprep.subr.bf16.mxu0 0
  %1382 = vmatpush1.bf16.msra.mxu0 %v1347
  %1383 = vmatprep.subr.bf16.mxu0 0
  %1384 = vmatpush1.bf16.msra.mxu0 %v1348
  %1385 = vmatprep.subr.bf16.mxu0 0
  %1386 = vmatpush1.bf16.msra.mxu0 %v1349
  %1387 = vmatprep.subr.bf16.mxu0 0
  %1388 = vmatpush1.bf16.msra.mxu0 %v1350
  %1389 = vmatprep.subr.bf16.mxu0 0
  %1390 = vmatpush1.bf16.msra.mxu0 %v1351
  %1391 = vmatprep.subr.bf16.mxu0 0
  %1392 = vmatpush1.bf16.msra.mxu0 %v1352
  %1393 = vmatprep.subr.bf16.mxu0 0
  %1394 = vmatpush1.bf16.msra.mxu0 %v1353
  %1395 = vmatprep.subr.bf16.mxu0 0
  %1396 = vmatpush1.bf16.msra.mxu0 %v1354
  %1397 = vmatprep.subr.bf16.mxu0 0
  %1398 = vmatpush1.bf16.msra.mxu0 %v1355
  %1399 = vmatprep.subr.bf16.mxu0 0
  %1400 = vmatpush1.bf16.msra.mxu0 %v1356
  %1401 = vmatprep.subr.bf16.mxu0 0
  %1402 = vmatpush1.bf16.msra.mxu0 %v1357
  %1403 = vmatprep.subr.bf16.mxu0 0
  %1404 = vmatpush1.bf16.msra.mxu0 %v1358
  %1405 = vmatprep.subr.bf16.mxu0 0
  %1406 = vmatpush1.bf16.msra.mxu0 %v1359
  %1407 = vmatprep.subr.bf16.mxu0 0
  %1408 = vmatpush1.bf16.msra.mxu0 %v1360
  %1409 = vmatprep.mubr.bf16.mxu0 %v87
  %1410 = vmatmul.mubr.bf16.gmra.mrb[0].mxu0 %v86
  %v1411 = vpop.f32.mrb[0].mxu0
  %v1412 = vadd.f32 0.0, %v1411
  %v1413 = vpop.f32.mrb[0].mxu0
  %v1414 = vpop.f32.mrb[0].mxu0
  %v1415 = vpop.f32.mrb[0].mxu0
  %1416 = vdwg.mxu0
  %1417 = vst.msk [vmem:[#allocation2 + $0x38] sm:$0xff] %vm226, %v1412
  %s1418 = scalar_lea.vmem %s1, 1024
  %v1419 = vld [vmem:[%s1418] sm:$0xf]
  %v1420 = vld [vmem:[%s1418 + $0x4] sm:$0xf]
  %v1421 = vld [vmem:[%s1418 + $0x8] sm:$0xf]
  %v1422 = vld [vmem:[%s1418 + $0xc] sm:$0xf]
  %v1423 = vld [vmem:[%s1418 + $0x10] sm:$0xf]
  %v1424 = vld [vmem:[%s1418 + $0x14] sm:$0xf]
  %v1425 = vld [vmem:[%s1418 + $0x18] sm:$0xf]
  %v1426 = vld [vmem:[%s1418 + $0x1c] sm:$0xf]
  %v1427 = vld [vmem:[%s1418 + $0x20] sm:$0xf]
  %v1428 = vld [vmem:[%s1418 + $0x24] sm:$0xf]
  %v1429 = vld [vmem:[%s1418 + $0x28] sm:$0xf]
  %v1430 = vld [vmem:[%s1418 + $0x2c] sm:$0xf]
  %v1431 = vld [vmem:[%s1418 + $0x30] sm:$0xf]
  %v1432 = vld [vmem:[%s1418 + $0x34] sm:$0xf]
  %v1433 = vld [vmem:[%s1418 + $0x38] sm:$0xf]
  %v1434 = vld [vmem:[%s1418 + $0x3c] sm:$0xf]
  %v1435 = vld [vmem:[%s1418 + $0x40] sm:$0xf]
  %v1436 = vld [vmem:[%s1418 + $0x44] sm:$0xf]
  %v1437 = vld [vmem:[%s1418 + $0x48] sm:$0xf]
  %v1438 = vld [vmem:[%s1418 + $0x4c] sm:$0xf]
  %v1439 = vld [vmem:[%s1418 + $0x50] sm:$0xf]
  %v1440 = vld [vmem:[%s1418 + $0x54] sm:$0xf]
  %v1441 = vld [vmem:[%s1418 + $0x58] sm:$0xf]
  %v1442 = vld [vmem:[%s1418 + $0x5c] sm:$0xf]
  %v1443 = vld [vmem:[%s1418 + $0x60] sm:$0xf]
  %v1444 = vld [vmem:[%s1418 + $0x64] sm:$0xf]
  %v1445 = vld [vmem:[%s1418 + $0x68] sm:$0xf]
  %v1446 = vld [vmem:[%s1418 + $0x6c] sm:$0xf]
  %v1447 = vld [vmem:[%s1418 + $0x70] sm:$0xf]
  %v1448 = vld [vmem:[%s1418 + $0x74] sm:$0xf]
  %v1449 = vld [vmem:[%s1418 + $0x78] sm:$0xf]
  %v1450 = vld [vmem:[%s1418 + $0x7c] sm:$0xf]
  %v1483 = vunpack.c.l.b16 %v1419
  %v1484 = vunpack.c.l.b16 %v1420
  %v1485 = vunpack.c.l.b16 %v1421
  %v1486 = vunpack.c.l.b16 %v1422
  %v1487 = vunpack.c.l.b16 %v1423
  %v1488 = vunpack.c.l.b16 %v1424
  %v1489 = vunpack.c.l.b16 %v1425
  %v1490 = vunpack.c.l.b16 %v1426
  %v1491 = vunpack.c.l.b16 %v1427
  %v1492 = vunpack.c.l.b16 %v1428
  %v1493 = vunpack.c.l.b16 %v1429
  %v1494 = vunpack.c.l.b16 %v1430
  %v1495 = vunpack.c.l.b16 %v1431
  %v1496 = vunpack.c.l.b16 %v1432
  %v1497 = vunpack.c.l.b16 %v1433
  %v1498 = vunpack.c.l.b16 %v1434
  %v1499 = vunpack.c.l.b16 %v1435
  %v1500 = vunpack.c.l.b16 %v1436
  %v1501 = vunpack.c.l.b16 %v1437
  %v1502 = vunpack.c.l.b16 %v1438
  %v1503 = vunpack.c.l.b16 %v1439
  %v1504 = vunpack.c.l.b16 %v1440
  %v1505 = vunpack.c.l.b16 %v1441
  %v1506 = vunpack.c.l.b16 %v1442
  %v1507 = vunpack.c.l.b16 %v1443
  %v1508 = vunpack.c.l.b16 %v1444
  %v1509 = vunpack.c.l.b16 %v1445
  %v1510 = vunpack.c.l.b16 %v1446
  %v1511 = vunpack.c.l.b16 %v1447
  %v1512 = vunpack.c.l.b16 %v1448
  %v1513 = vunpack.c.l.b16 %v1449
  %v1514 = vunpack.c.l.b16 %v1450
  %v1515 = vpack.c.b16 %v1484, %v1483
  %v1516 = vpack.c.b16 %v1486, %v1485
  %v1517 = vpack.c.b16 %v1488, %v1487
  %v1518 = vpack.c.b16 %v1490, %v1489
  %v1519 = vpack.c.b16 %v1492, %v1491
  %v1520 = vpack.c.b16 %v1494, %v1493
  %v1521 = vpack.c.b16 %v1496, %v1495
  %v1522 = vpack.c.b16 %v1498, %v1497
  %v1523 = vpack.c.b16 %v1500, %v1499
  %v1524 = vpack.c.b16 %v1502, %v1501
  %v1525 = vpack.c.b16 %v1504, %v1503
  %v1526 = vpack.c.b16 %v1506, %v1505
  %v1527 = vpack.c.b16 %v1508, %v1507
  %v1528 = vpack.c.b16 %v1510, %v1509
  %v1529 = vpack.c.b16 %v1512, %v1511
  %v1530 = vpack.c.b16 %v1514, %v1513
  %1547 = vmatprep.subr.bf16.mxu0 0
  %1548 = vmatpush1.bf16.msra.mxu0 %v1515
  %1549 = vmatprep.subr.bf16.mxu0 0
  %1550 = vmatpush1.bf16.msra.mxu0 %v1516
  %1551 = vmatprep.subr.bf16.mxu0 0
  %1552 = vmatpush1.bf16.msra.mxu0 %v1517
  %1553 = vmatprep.subr.bf16.mxu0 0
  %1554 = vmatpush1.bf16.msra.mxu0 %v1518
  %1555 = vmatprep.subr.bf16.mxu0 0
  %1556 = vmatpush1.bf16.msra.mxu0 %v1519
  %1557 = vmatprep.subr.bf16.mxu0 0
  %1558 = vmatpush1.bf16.msra.mxu0 %v1520
  %1559 = vmatprep.subr.bf16.mxu0 0
  %1560 = vmatpush1.bf16.msra.mxu0 %v1521
  %1561 = vmatprep.subr.bf16.mxu0 0
  %1562 = vmatpush1.bf16.msra.mxu0 %v1522
  %1563 = vmatprep.subr.bf16.mxu0 0
  %1564 = vmatpush1.bf16.msra.mxu0 %v1523
  %1565 = vmatprep.subr.bf16.mxu0 0
  %1566 = vmatpush1.bf16.msra.mxu0 %v1524
  %1567 = vmatprep.subr.bf16.mxu0 0
  %1568 = vmatpush1.bf16.msra.mxu0 %v1525
  %1569 = vmatprep.subr.bf16.mxu0 0
  %1570 = vmatpush1.bf16.msra.mxu0 %v1526
  %1571 = vmatprep.subr.bf16.mxu0 0
  %1572 = vmatpush1.bf16.msra.mxu0 %v1527
  %1573 = vmatprep.subr.bf16.mxu0 0
  %1574 = vmatpush1.bf16.msra.mxu0 %v1528
  %1575 = vmatprep.subr.bf16.mxu0 0
  %1576 = vmatpush1.bf16.msra.mxu0 %v1529
  %1577 = vmatprep.subr.bf16.mxu0 0
  %1578 = vmatpush1.bf16.msra.mxu0 %v1530
  %1579 = vmatprep.mubr.bf16.mxu0 %v87
  %1580 = vmatmul.mubr.bf16.gmra.mrb[0].mxu0 %v86
  %v1581 = vpop.f32.mrb[0].mxu0
  %v1582 = vadd.f32 0.0, %v1581
  %v1583 = vpop.f32.mrb[0].mxu0
  %v1584 = vpop.f32.mrb[0].mxu0
  %v1585 = vpop.f32.mrb[0].mxu0
  %1586 = vdwg.mxu0
  %1587 = vst.msk [vmem:[#allocation2 + $0x40] sm:$0xff] %vm226, %v1582
  %v1588 = vld [vmem:[%s2] sm:$0xf]
  %v1589 = vld [vmem:[%s2 + $0x4] sm:$0xf]
  %v1590 = vld [vmem:[%s2 + $0x8] sm:$0xf]
  %v1591 = vld [vmem:[%s2 + $0xc] sm:$0xf]
  %v1592 = vld [vmem:[#allocation2] sm:$0xff]
  %v1593 = vld [vmem:[#allocation2 + $0x8] sm:$0xff]
  %v1594 = vld [vmem:[#allocation2 + $0x10] sm:$0xff]
  %v1595 = vld [vmem:[#allocation2 + $0x18] sm:$0xff]
  %v1596 = vld [vmem:[#allocation2 + $0x20] sm:$0xff]
  %v1597 = vld [vmem:[#allocation2 + $0x28] sm:$0xff]
  %v1598 = vld [vmem:[#allocation2 + $0x30] sm:$0xff]
  %v1599 = vld [vmem:[#allocation2 + $0x38] sm:$0xff]
  %v1600 = vld [vmem:[#allocation2 + $0x40] sm:$0xff]
  %v1601 = vpack.c.bf16 %v1593, %v1592
  %v1602 = vpack.c.bf16 %v1595, %v1594
  %v1603 = vpack.c.bf16 %v1597, %v1596
  %v1604 = vpack.c.bf16 %v1599, %v1598
  %v1605 = vpack.c.bf16 %v1600, %v1600
  %v1606 = vld [vmem:[%s3] sm:$0xff]
  %v1607 = vld [vmem:[%s3 + $0x8] sm:$0xff]
  %v1608 = vld [vmem:[%s3 + $0x10] sm:$0xff]
  %v1609 = vld [vmem:[%s3 + $0x18] sm:$0xff]
  %1611 = vset.pattern.permute.xlu0 0
  %1612 = vperm.xlu0 %1611, %v1606
  %v1613 = vpop.permute.xlu0 %1612
  %1616 = vset.pattern.permute.xlu0 0
  %1617 = vperm.xlu0 %1616, %v1607
  %v1618 = vpop.permute.xlu0 %1617
  %1621 = vset.pattern.permute.xlu0 0
  %1622 = vperm.xlu0 %1621, %v1608
  %v1623 = vpop.permute.xlu0 %1622
  %1626 = vset.pattern.permute.xlu0 0
  %1627 = vperm.xlu0 %1626, %v1609
  %v1628 = vpop.permute.xlu0 %1627
  %v1634 = vunpack.c.l.b16 %v1588
  %v1635 = vunpack.c.l.b16 %v1589
  %v1636 = vunpack.c.l.b16 %v1590
  %v1637 = vunpack.c.l.b16 %v1591
  %v1638 = vpack.c.b16 %v1635, %v1634
  %v1639 = vpack.c.b16 %v1637, %v1636
  %vm1640 = vcmask 588800
  %v1642 = vsel %vm1640, %v1638, 0
  %v1645 = vsel %vm1640, %v1639, 0
  %vm1647 = vcmask 1043456
  %v1649 = vsel %vm1647, %v1605, 0
  %1651 = vmatprep.subr.bf16.mxu0 0
  %1652 = vmatpush1.bf16.msra.mxu0 %v1601
  %1653 = vmatprep.subr.bf16.mxu0 0
  %1654 = vmatpush1.bf16.msra.mxu0 %v1602
  %1655 = vmatprep.subr.bf16.mxu0 0
  %1656 = vmatpush1.bf16.msra.mxu0 %v1603
  %1657 = vmatprep.subr.bf16.mxu0 0
  %1658 = vmatpush1.bf16.msra.mxu0 %v1604
  %1659 = vmatprep.subr.bf16.mxu0 0
  %1660 = vmatpush1.bf16.msra.mxu0 %v1649
  %1661 = vmatprep.subr.bf16.mxu0 0
  %1662 = vmatpush1.bf16.msra.mxu0 0
  %1663 = vmatprep.subr.bf16.mxu0 0
  %1664 = vmatpush1.bf16.msra.mxu0 0
  %1665 = vmatprep.subr.bf16.mxu0 0
  %1666 = vmatpush1.bf16.msra.mxu0 0
  %1667 = vmatprep.subr.bf16.mxu0 0
  %1668 = vmatpush1.bf16.msra.mxu0 0
  %1669 = vmatprep.subr.bf16.mxu0 0
  %1670 = vmatpush1.bf16.msra.mxu0 0
  %1671 = vmatprep.subr.bf16.mxu0 0
  %1672 = vmatpush1.bf16.msra.mxu0 0
  %1673 = vmatprep.subr.bf16.mxu0 0
  %1674 = vmatpush1.bf16.msra.mxu0 0
  %1675 = vmatprep.subr.bf16.mxu0 0
  %1676 = vmatpush1.bf16.msra.mxu0 0
  %1677 = vmatprep.subr.bf16.mxu0 0
  %1678 = vmatpush1.bf16.msra.mxu0 0
  %1679 = vmatprep.subr.bf16.mxu0 0
  %1680 = vmatpush1.bf16.msra.mxu0 0
  %1681 = vmatprep.subr.bf16.mxu0 0
  %1682 = vmatpush1.bf16.msra.mxu0 0
  %1683 = vmatprep.mubr.bf16.mxu0 0
  %1684 = vmatmul.mubr.bf16.gmra.mrb[0].mxu0 %v1642
  %v1685 = vpop.f32.mrb[0].mxu0
  %v1686 = vadd.f32 %v1613, %v1685
  %v1687 = vpop.f32.mrb[0].mxu0
  %v1688 = vpop.f32.mrb[0].mxu0
  %v1689 = vadd.f32 %v1618, %v1688
  %v1690 = vpop.f32.mrb[0].mxu0
  %1691 = vmatprep.mubr.bf16.mxu0 0
  %1692 = vmatmul.mubr.bf16.gmra.mrb[0].mxu0 %v1645
  %v1693 = vpop.f32.mrb[0].mxu0
  %v1694 = vadd.f32 %v1623, %v1693
  %v1695 = vpop.f32.mrb[0].mxu0
  %v1696 = vpop.f32.mrb[0].mxu0
  %v1697 = vadd.f32 %v1628, %v1696
  %v1698 = vpop.f32.mrb[0].mxu0
  %1699 = vdwg.mxu0
  %v1700 = vmax.f32 %v1686, 0.0
  %v1701 = vmax.f32 %v1689, 0.0
  %v1702 = vmax.f32 %v1694, 0.0
  %v1703 = vmax.f32 %v1697, 0.0
  %v1704 = vpack.c.bf16 %v1701, %v1700
  %v1705 = vpack.c.bf16 %v1703, %v1702
  %v1706 = vld [vmem:[%s4] sm:$0xf]
  %v1707 = vld [vmem:[%s4 + $0x4] sm:$0xf]
  %v1708 = vld [vmem:[%s4 + $0x8] sm:$0xf]
  %v1709 = vld [vmem:[%s4 + $0xc] sm:$0xf]
  %v1710 = vld [vmem:[%s4 + $0x10] sm:$0xf]
  %v1711 = vld [vmem:[%s4 + $0x14] sm:$0xf]
  %v1712 = vld [vmem:[%s4 + $0x18] sm:$0xf]
  %v1713 = vld [vmem:[%s4 + $0x1c] sm:$0xf]
  %v1722 = vunpack.c.l.b16 %v1706
  %v1723 = vunpack.c.l.b16 %v1707
  %v1724 = vunpack.c.l.b16 %v1708
  %v1725 = vunpack.c.l.b16 %v1709
  %v1726 = vunpack.c.l.b16 %v1710
  %v1727 = vunpack.c.l.b16 %v1711
  %v1728 = vunpack.c.l.b16 %v1712
  %v1729 = vunpack.c.l.b16 %v1713
  %v1730 = vpack.c.b16 %v1723, %v1722
  %v1731 = vpack.c.b16 %v1725, %v1724
  %v1732 = vpack.c.b16 %v1727, %v1726
  %v1733 = vpack.c.b16 %v1729, %v1728
  %v1739 = vsel %vm226, %v1704, 0
  %v1742 = vsel %vm226, %v1705, 0
  %1744 = vmatprep.subr.bf16.mxu0 0
  %1745 = vmatpush1.bf16.msra.mxu0 %v1730
  %1746 = vmatprep.subr.bf16.mxu0 0
  %1747 = vmatpush1.bf16.msra.mxu0 %v1731
  %1748 = vmatprep.subr.bf16.mxu0 0
  %1749 = vmatpush1.bf16.msra.mxu0 %v1732
  %1750 = vmatprep.subr.bf16.mxu0 0
  %1751 = vmatpush1.bf16.msra.mxu0 %v1733
  %1752 = vmatprep.subr.bf16.mxu0 0
  %1753 = vmatpush1.bf16.msra.mxu0 0
  %1754 = vmatprep.subr.bf16.mxu0 0
  %1755 = vmatpush1.bf16.msra.mxu0 0
  %1756 = vmatprep.subr.bf16.mxu0 0
  %1757 = vmatpush1.bf16.msra.mxu0 0
  %1758 = vmatprep.subr.bf16.mxu0 0
  %1759 = vmatpush1.bf16.msra.mxu0 0
  %1760 = vmatprep.subr.bf16.mxu0 0
  %1761 = vmatpush1.bf16.msra.mxu0 0
  %1762 = vmatprep.subr.bf16.mxu0 0
  %1763 = vmatpush1.bf16.msra.mxu0 0
  %1764 = vmatprep.subr.bf16.mxu0 0
  %1765 = vmatpush1.bf16.msra.mxu0 0
  %1766 = vmatprep.subr.bf16.mxu0 0
  %1767 = vmatpush1.bf16.msra.mxu0 0
  %1768 = vmatprep.subr.bf16.mxu0 0
  %1769 = vmatpush1.bf16.msra.mxu0 0
  %1770 = vmatprep.subr.bf16.mxu0 0
  %1771 = vmatpush1.bf16.msra.mxu0 0
  %1772 = vmatprep.subr.bf16.mxu0 0
  %1773 = vmatpush1.bf16.msra.mxu0 0
  %1774 = vmatprep.subr.bf16.mxu0 0
  %1775 = vmatpush1.bf16.msra.mxu0 0
  %1776 = vmatprep.mubr.bf16.mxu0 0
  %1777 = vmatmul.mubr.bf16.gmra.mrb[0].mxu0 %v1739
  %v1778 = vpop.f32.mrb[0].mxu0
  %v1779 = vadd.f32 0.0, %v1778
  %v1780 = vpop.f32.mrb[0].mxu0
  %v1781 = vpop.f32.mrb[0].mxu0
  %v1782 = vadd.f32 0.0, %v1781
  %v1783 = vpop.f32.mrb[0].mxu0
  %1784 = vmatprep.mubr.bf16.mxu0 0
  %1785 = vmatmul.mubr.bf16.gmra.mrb[0].mxu0 %v1742
  %v1786 = vpop.f32.mrb[0].mxu0
  %v1787 = vadd.f32 0.0, %v1786
  %v1788 = vpop.f32.mrb[0].mxu0
  %v1789 = vpop.f32.mrb[0].mxu0
  %v1790 = vadd.f32 0.0, %v1789
  %v1791 = vpop.f32.mrb[0].mxu0
  %1792 = vdwg.mxu0
  %vm1793 = vcmask 130048
  %1794 = vst.msk [vmem:[#allocation3] sm:$0xff] %vm1793, %v1779
  %1795 = vst.msk [vmem:[#allocation3 + $0x8] sm:$0xff] %vm1793, %v1782
  %1796 = vst.msk [vmem:[#allocation3 + $0x10] sm:$0xff] %vm1793, %v1787
  %1797 = vst.msk [vmem:[#allocation3 + $0x18] sm:$0xff] %vm1793, %v1790
  %s1798 = scalar_lea.vmem %s4, 32
  %v1799 = vld [vmem:[%s1798] sm:$0xf]
  %v1800 = vld [vmem:[%s1798 + $0x4] sm:$0xf]
  %v1801 = vld [vmem:[%s1798 + $0x8] sm:$0xf]
  %v1802 = vld [vmem:[%s1798 + $0xc] sm:$0xf]
  %v1803 = vld [vmem:[%s1798 + $0x10] sm:$0xf]
  %v1804 = vld [vmem:[%s1798 + $0x14] sm:$0xf]
  %v1805 = vld [vmem:[%s1798 + $0x18] sm:$0xf]
  %v1806 = vld [vmem:[%s1798 + $0x1c] sm:$0xf]
  %v1815 = vunpack.c.l.b16 %v1799
  %v1816 = vunpack.c.l.b16 %v1800
  %v1817 = vunpack.c.l.b16 %v1801
  %v1818 = vunpack.c.l.b16 %v1802
  %v1819 = vunpack.c.l.b16 %v1803
  %v1820 = vunpack.c.l.b16 %v1804
  %v1821 = vunpack.c.l.b16 %v1805
  %v1822 = vunpack.c.l.b16 %v1806
  %v1823 = vpack.c.b16 %v1816, %v1815
  %v1824 = vpack.c.b16 %v1818, %v1817
  %v1825 = vpack.c.b16 %v1820, %v1819
  %v1826 = vpack.c.b16 %v1822, %v1821
  %1831 = vmatprep.subr.bf16.mxu0 0
  %1832 = vmatpush1.bf16.msra.mxu0 %v1823
  %1833 = vmatprep.subr.bf16.mxu0 0
  %1834 = vmatpush1.bf16.msra.mxu0 %v1824
  %1835 = vmatprep.subr.bf16.mxu0 0
  %1836 = vmatpush1.bf16.msra.mxu0 %v1825
  %1837 = vmatprep.subr.bf16.mxu0 0
  %1838 = vmatpush1.bf16.msra.mxu0 %v1826
  %1839 = vmatprep.subr.bf16.mxu0 0
  %1840 = vmatpush1.bf16.msra.mxu0 0
  %1841 = vmatprep.subr.bf16.mxu0 0
  %1842 = vmatpush1.bf16.msra.mxu0 0
  %1843 = vmatprep.subr.bf16.mxu0 0
  %1844 = vmatpush1.bf16.msra.mxu0 0
  %1845 = vmatprep.subr.bf16.mxu0 0
  %1846 = vmatpush1.bf16.msra.mxu0 0
  %1847 = vmatprep.subr.bf16.mxu0 0
  %1848 = vmatpush1.bf16.msra.mxu0 0
  %1849 = vmatprep.subr.bf16.mxu0 0
  %1850 = vmatpush1.bf16.msra.mxu0 0
  %1851 = vmatprep.subr.bf16.mxu0 0
  %1852 = vmatpush1.bf16.msra.mxu0 0
  %1853 = vmatprep.subr.bf16.mxu0 0
  %1854 = vmatpush1.bf16.msra.mxu0 0
  %1855 = vmatprep.subr.bf16.mxu0 0
  %1856 = vmatpush1.bf16.msra.mxu0 0
  %1857 = vmatprep.subr.bf16.mxu0 0
  %1858 = vmatpush1.bf16.msra.mxu0 0
  %1859 = vmatprep.subr.bf16.mxu0 0
  %1860 = vmatpush1.bf16.msra.mxu0 0
  %1861 = vmatprep.subr.bf16.mxu0 0
  %1862 = vmatpush1.bf16.msra.mxu0 0
  %1863 = vmatprep.mubr.bf16.mxu0 0
  %1864 = vmatmul.mubr.bf16.gmra.mrb[0].mxu0 %v1739
  %v1865 = vpop.f32.mrb[0].mxu0
  %v1866 = vadd.f32 0.0, %v1865
  %v1867 = vpop.f32.mrb[0].mxu0
  %v1868 = vpop.f32.mrb[0].mxu0
  %v1869 = vadd.f32 0.0, %v1868
  %v1870 = vpop.f32.mrb[0].mxu0
  %1871 = vmatprep.mubr.bf16.mxu0 0
  %1872 = vmatmul.mubr.bf16.gmra.mrb[0].mxu0 %v1742
  %v1873 = vpop.f32.mrb[0].mxu0
  %v1874 = vadd.f32 0.0, %v1873
  %v1875 = vpop.f32.mrb[0].mxu0
  %v1876 = vpop.f32.mrb[0].mxu0
  %v1877 = vadd.f32 0.0, %v1876
  %v1878 = vpop.f32.mrb[0].mxu0
  %1879 = vdwg.mxu0
  %1880 = vst.msk [vmem:[#allocation3 + $0x20] sm:$0xff] %vm1793, %v1866
  %1881 = vst.msk [vmem:[#allocation3 + $0x28] sm:$0xff] %vm1793, %v1869
  %1882 = vst.msk [vmem:[#allocation3 + $0x30] sm:$0xff] %vm1793, %v1874
  %1883 = vst.msk [vmem:[#allocation3 + $0x38] sm:$0xff] %vm1793, %v1877
  %s1884 = scalar_lea.vmem %s4, 64
  %v1885 = vld [vmem:[%s1884] sm:$0xf]
  %v1886 = vld [vmem:[%s1884 + $0x4] sm:$0xf]
  %v1887 = vld [vmem:[%s1884 + $0x8] sm:$0xf]
  %v1888 = vld [vmem:[%s1884 + $0xc] sm:$0xf]
  %v1889 = vld [vmem:[%s1884 + $0x10] sm:$0xf]
  %v1890 = vld [vmem:[%s1884 + $0x14] sm:$0xf]
  %v1891 = vld [vmem:[%s1884 + $0x18] sm:$0xf]
  %v1892 = vld [vmem:[%s1884 + $0x1c] sm:$0xf]
  %v1901 = vunpack.c.l.b16 %v1885
  %v1902 = vunpack.c.l.b16 %v1886
  %v1903 = vunpack.c.l.b16 %v1887
  %v1904 = vunpack.c.l.b16 %v1888
  %v1905 = vunpack.c.l.b16 %v1889
  %v1906 = vunpack.c.l.b16 %v1890
  %v1907 = vunpack.c.l.b16 %v1891
  %v1908 = vunpack.c.l.b16 %v1892
  %v1909 = vpack.c.b16 %v1902, %v1901
  %v1910 = vpack.c.b16 %v1904, %v1903
  %v1911 = vpack.c.b16 %v1906, %v1905
  %v1912 = vpack.c.b16 %v1908, %v1907
  %1917 = vmatprep.subr.bf16.mxu0 0
  %1918 = vmatpush1.bf16.msra.mxu0 %v1909
  %1919 = vmatprep.subr.bf16.mxu0 0
  %1920 = vmatpush1.bf16.msra.mxu0 %v1910
  %1921 = vmatprep.subr.bf16.mxu0 0
  %1922 = vmatpush1.bf16.msra.mxu0 %v1911
  %1923 = vmatprep.subr.bf16.mxu0 0
  %1924 = vmatpush1.bf16.msra.mxu0 %v1912
  %1925 = vmatprep.subr.bf16.mxu0 0
  %1926 = vmatpush1.bf16.msra.mxu0 0
  %1927 = vmatprep.subr.bf16.mxu0 0
  %1928 = vmatpush1.bf16.msra.mxu0 0
  %1929 = vmatprep.subr.bf16.mxu0 0
  %1930 = vmatpush1.bf16.msra.mxu0 0
  %1931 = vmatprep.subr.bf16.mxu0 0
  %1932 = vmatpush1.bf16.msra.mxu0 0
  %1933 = vmatprep.subr.bf16.mxu0 0
  %1934 = vmatpush1.bf16.msra.mxu0 0
  %1935 = vmatprep.subr.bf16.mxu0 0
  %1936 = vmatpush1.bf16.msra.mxu0 0
  %1937 = vmatprep.subr.bf16.mxu0 0
  %1938 = vmatpush1.bf16.msra.mxu0 0
  %1939 = vmatprep.subr.bf16.mxu0 0
  %1940 = vmatpush1.bf16.msra.mxu0 0
  %1941 = vmatprep.subr.bf16.mxu0 0
  %1942 = vmatpush1.bf16.msra.mxu0 0
  %1943 = vmatprep.subr.bf16.mxu0 0
  %1944 = vmatpush1.bf16.msra.mxu0 0
  %1945 = vmatprep.subr.bf16.mxu0 0
  %1946 = vmatpush1.bf16.msra.mxu0 0
  %1947 = vmatprep.subr.bf16.mxu0 0
  %1948 = vmatpush1.bf16.msra.mxu0 0
  %1949 = vmatprep.mubr.bf16.mxu0 0
  %1950 = vmatmul.mubr.bf16.gmra.mrb[0].mxu0 %v1739
  %v1951 = vpop.f32.mrb[0].mxu0
  %v1952 = vadd.f32 0.0, %v1951
  %v1953 = vpop.f32.mrb[0].mxu0
  %v1954 = vpop.f32.mrb[0].mxu0
  %v1955 = vadd.f32 0.0, %v1954
  %v1956 = vpop.f32.mrb[0].mxu0
  %1957 = vmatprep.mubr.bf16.mxu0 0
  %1958 = vmatmul.mubr.bf16.gmra.mrb[0].mxu0 %v1742
  %v1959 = vpop.f32.mrb[0].mxu0
  %v1960 = vadd.f32 0.0, %v1959
  %v1961 = vpop.f32.mrb[0].mxu0
  %v1962 = vpop.f32.mrb[0].mxu0
  %v1963 = vadd.f32 0.0, %v1962
  %v1964 = vpop.f32.mrb[0].mxu0
  %1965 = vdwg.mxu0
  %1966 = vst.msk [vmem:[#allocation3 + $0x40] sm:$0xff] %vm1793, %v1952
  %1967 = vst.msk [vmem:[#allocation3 + $0x48] sm:$0xff] %vm1793, %v1955
  %1968 = vst.msk [vmem:[#allocation3 + $0x50] sm:$0xff] %vm1793, %v1960
  %1969 = vst.msk [vmem:[#allocation3 + $0x58] sm:$0xff] %vm1793, %v1963
  %s1970 = scalar_lea.vmem %s4, 96
  %v1971 = vld [vmem:[%s1970] sm:$0xf]
  %v1972 = vld [vmem:[%s1970 + $0x4] sm:$0xf]
  %v1973 = vld [vmem:[%s1970 + $0x8] sm:$0xf]
  %v1974 = vld [vmem:[%s1970 + $0xc] sm:$0xf]
  %v1975 = vld [vmem:[%s1970 + $0x10] sm:$0xf]
  %v1976 = vld [vmem:[%s1970 + $0x14] sm:$0xf]
  %v1977 = vld [vmem:[%s1970 + $0x18] sm:$0xf]
  %v1978 = vld [vmem:[%s1970 + $0x1c] sm:$0xf]
  %v1987 = vunpack.c.l.b16 %v1971
  %v1988 = vunpack.c.l.b16 %v1972
  %v1989 = vunpack.c.l.b16 %v1973
  %v1990 = vunpack.c.l.b16 %v1974
  %v1991 = vunpack.c.l.b16 %v1975
  %v1992 = vunpack.c.l.b16 %v1976
  %v1993 = vunpack.c.l.b16 %v1977
  %v1994 = vunpack.c.l.b16 %v1978
  %v1995 = vpack.c.b16 %v1988, %v1987
  %v1996 = vpack.c.b16 %v1990, %v1989
  %v1997 = vpack.c.b16 %v1992, %v1991
  %v1998 = vpack.c.b16 %v1994, %v1993
  %2003 = vmatprep.subr.bf16.mxu0 0
  %2004 = vmatpush1.bf16.msra.mxu0 %v1995
  %2005 = vmatprep.subr.bf16.mxu0 0
  %2006 = vmatpush1.bf16.msra.mxu0 %v1996
  %2007 = vmatprep.subr.bf16.mxu0 0
  %2008 = vmatpush1.bf16.msra.mxu0 %v1997
  %2009 = vmatprep.subr.bf16.mxu0 0
  %2010 = vmatpush1.bf16.msra.mxu0 %v1998
  %2011 = vmatprep.subr.bf16.mxu0 0
  %2012 = vmatpush1.bf16.msra.mxu0 0
  %2013 = vmatprep.subr.bf16.mxu0 0
  %2014 = vmatpush1.bf16.msra.mxu0 0
  %2015 = vmatprep.subr.bf16.mxu0 0
  %2016 = vmatpush1.bf16.msra.mxu0 0
  %2017 = vmatprep.subr.bf16.mxu0 0
  %2018 = vmatpush1.bf16.msra.mxu0 0
  %2019 = vmatprep.subr.bf16.mxu0 0
  %2020 = vmatpush1.bf16.msra.mxu0 0
  %2021 = vmatprep.subr.bf16.mxu0 0
  %2022 = vmatpush1.bf16.msra.mxu0 0
  %2023 = vmatprep.subr.bf16.mxu0 0
  %2024 = vmatpush1.bf16.msra.mxu0 0
  %2025 = vmatprep.subr.bf16.mxu0 0
  %2026 = vmatpush1.bf16.msra.mxu0 0
  %2027 = vmatprep.subr.bf16.mxu0 0
  %2028 = vmatpush1.bf16.msra.mxu0 0
  %2029 = vmatprep.subr.bf16.mxu0 0
  %2030 = vmatpush1.bf16.msra.mxu0 0
  %2031 = vmatprep.subr.bf16.mxu0 0
  %2032 = vmatpush1.bf16.msra.mxu0 0
  %2033 = vmatprep.subr.bf16.mxu0 0
  %2034 = vmatpush1.bf16.msra.mxu0 0
  %2035 = vmatprep.mubr.bf16.mxu0 0
  %2036 = vmatmul.mubr.bf16.gmra.mrb[0].mxu0 %v1739
  %v2037 = vpop.f32.mrb[0].mxu0
  %v2038 = vadd.f32 0.0, %v2037
  %v2039 = vpop.f32.mrb[0].mxu0
  %v2040 = vpop.f32.mrb[0].mxu0
  %v2041 = vadd.f32 0.0, %v2040
  %v2042 = vpop.f32.mrb[0].mxu0
  %2043 = vmatprep.mubr.bf16.mxu0 0
  %2044 = vmatmul.mubr.bf16.gmra.mrb[0].mxu0 %v1742
  %v2045 = vpop.f32.mrb[0].mxu0
  %v2046 = vadd.f32 0.0, %v2045
  %v2047 = vpop.f32.mrb[0].mxu0
  %v2048 = vpop.f32.mrb[0].mxu0
  %v2049 = vadd.f32 0.0, %v2048
  %v2050 = vpop.f32.mrb[0].mxu0
  %2051 = vdwg.mxu0
  %2052 = vst.msk [vmem:[#allocation3 + $0x60] sm:$0xff] %vm1793, %v2038
  %2053 = vst.msk [vmem:[#allocation3 + $0x68] sm:$0xff] %vm1793, %v2041
  %2054 = vst.msk [vmem:[#allocation3 + $0x70] sm:$0xff] %vm1793, %v2046
  %2055 = vst.msk [vmem:[#allocation3 + $0x78] sm:$0xff] %vm1793, %v2049
  %s2056 = scalar_lea.vmem %s4, 128
  %v2057 = vld [vmem:[%s2056] sm:$0xf]
  %v2058 = vld [vmem:[%s2056 + $0x4] sm:$0xf]
  %v2059 = vld [vmem:[%s2056 + $0x8] sm:$0xf]
  %v2060 = vld [vmem:[%s2056 + $0xc] sm:$0xf]
  %v2061 = vld [vmem:[%s2056 + $0x10] sm:$0xf]
  %v2062 = vld [vmem:[%s2056 + $0x14] sm:$0xf]
  %v2063 = vld [vmem:[%s2056 + $0x18] sm:$0xf]
  %v2064 = vld [vmem:[%s2056 + $0x1c] sm:$0xf]
  %v2073 = vunpack.c.l.b16 %v2057
  %v2074 = vunpack.c.l.b16 %v2058
  %v2075 = vunpack.c.l.b16 %v2059
  %v2076 = vunpack.c.l.b16 %v2060
  %v2077 = vunpack.c.l.b16 %v2061
  %v2078 = vunpack.c.l.b16 %v2062
  %v2079 = vunpack.c.l.b16 %v2063
  %v2080 = vunpack.c.l.b16 %v2064
  %v2081 = vpack.c.b16 %v2074, %v2073
  %v2082 = vpack.c.b16 %v2076, %v2075
  %v2083 = vpack.c.b16 %v2078, %v2077
  %v2084 = vpack.c.b16 %v2080, %v2079
  %2089 = vmatprep.subr.bf16.mxu0 0
  %2090 = vmatpush1.bf16.msra.mxu0 %v2081
  %2091 = vmatprep.subr.bf16.mxu0 0
  %2092 = vmatpush1.bf16.msra.mxu0 %v2082
  %2093 = vmatprep.subr.bf16.mxu0 0
  %2094 = vmatpush1.bf16.msra.mxu0 %v2083
  %2095 = vmatprep.subr.bf16.mxu0 0
  %2096 = vmatpush1.bf16.msra.mxu0 %v2084
  %2097 = vmatprep.subr.bf16.mxu0 0
  %2098 = vmatpush1.bf16.msra.mxu0 0
  %2099 = vmatprep.subr.bf16.mxu0 0
  %2100 = vmatpush1.bf16.msra.mxu0 0
  %2101 = vmatprep.subr.bf16.mxu0 0
  %2102 = vmatpush1.bf16.msra.mxu0 0
  %2103 = vmatprep.subr.bf16.mxu0 0
  %2104 = vmatpush1.bf16.msra.mxu0 0
  %2105 = vmatprep.subr.bf16.mxu0 0
  %2106 = vmatpush1.bf16.msra.mxu0 0
  %2107 = vmatprep.subr.bf16.mxu0 0
  %2108 = vmatpush1.bf16.msra.mxu0 0
  %2109 = vmatprep.subr.bf16.mxu0 0
  %2110 = vmatpush1.bf16.msra.mxu0 0
  %2111 = vmatprep.subr.bf16.mxu0 0
  %2112 = vmatpush1.bf16.msra.mxu0 0
  %2113 = vmatprep.subr.bf16.mxu0 0
  %2114 = vmatpush1.bf16.msra.mxu0 0
  %2115 = vmatprep.subr.bf16.mxu0 0
  %2116 = vmatpush1.bf16.msra.mxu0 0
  %2117 = vmatprep.subr.bf16.mxu0 0
  %2118 = vmatpush1.bf16.msra.mxu0 0
  %2119 = vmatprep.subr.bf16.mxu0 0
  %2120 = vmatpush1.bf16.msra.mxu0 0
  %2121 = vmatprep.mubr.bf16.mxu0 0
  %2122 = vmatmul.mubr.bf16.gmra.mrb[0].mxu0 %v1739
  %v2123 = vpop.f32.mrb[0].mxu0
  %v2124 = vadd.f32 0.0, %v2123
  %v2125 = vpop.f32.mrb[0].mxu0
  %v2126 = vpop.f32.mrb[0].mxu0
  %v2127 = vadd.f32 0.0, %v2126
  %v2128 = vpop.f32.mrb[0].mxu0
  %2129 = vmatprep.mubr.bf16.mxu0 0
  %2130 = vmatmul.mubr.bf16.gmra.mrb[0].mxu0 %v1742
  %v2131 = vpop.f32.mrb[0].mxu0
  %v2132 = vadd.f32 0.0, %v2131
  %v2133 = vpop.f32.mrb[0].mxu0
  %v2134 = vpop.f32.mrb[0].mxu0
  %v2135 = vadd.f32 0.0, %v2134
  %v2136 = vpop.f32.mrb[0].mxu0
  %2137 = vdwg.mxu0
  %2138 = vst.msk [vmem:[#allocation3 + $0x80] sm:$0xff] %vm1793, %v2124
  %2139 = vst.msk [vmem:[#allocation3 + $0x88] sm:$0xff] %vm1793, %v2127
  %2140 = vst.msk [vmem:[#allocation3 + $0x90] sm:$0xff] %vm1793, %v2132
  %2141 = vst.msk [vmem:[#allocation3 + $0x98] sm:$0xff] %vm1793, %v2135
  %s2142 = scalar_lea.vmem %s4, 160
  %v2143 = vld [vmem:[%s2142] sm:$0xf]
  %v2144 = vld [vmem:[%s2142 + $0x4] sm:$0xf]
  %v2145 = vld [vmem:[%s2142 + $0x8] sm:$0xf]
  %v2146 = vld [vmem:[%s2142 + $0xc] sm:$0xf]
  %v2147 = vld [vmem:[%s2142 + $0x10] sm:$0xf]
  %v2148 = vld [vmem:[%s2142 + $0x14] sm:$0xf]
  %v2149 = vld [vmem:[%s2142 + $0x18] sm:$0xf]
  %v2150 = vld [vmem:[%s2142 + $0x1c] sm:$0xf]
  %v2159 = vunpack.c.l.b16 %v2143
  %v2160 = vunpack.c.l.b16 %v2144
  %v2161 = vunpack.c.l.b16 %v2145
  %v2162 = vunpack.c.l.b16 %v2146
  %v2163 = vunpack.c.l.b16 %v2147
  %v2164 = vunpack.c.l.b16 %v2148
  %v2165 = vunpack.c.l.b16 %v2149
  %v2166 = vunpack.c.l.b16 %v2150
  %v2167 = vpack.c.b16 %v2160, %v2159
  %v2168 = vpack.c.b16 %v2162, %v2161
  %v2169 = vpack.c.b16 %v2164, %v2163
  %v2170 = vpack.c.b16 %v2166, %v2165
  %2175 = vmatprep.subr.bf16.mxu0 0
  %2176 = vmatpush1.bf16.msra.mxu0 %v2167
  %2177 = vmatprep.subr.bf16.mxu0 0
  %2178 = vmatpush1.bf16.msra.mxu0 %v2168
  %2179 = vmatprep.subr.bf16.mxu0 0
  %2180 = vmatpush1.bf16.msra.mxu0 %v2169
  %2181 = vmatprep.subr.bf16.mxu0 0
  %2182 = vmatpush1.bf16.msra.mxu0 %v2170
  %2183 = vmatprep.subr.bf16.mxu0 0
  %2184 = vmatpush1.bf16.msra.mxu0 0
  %2185 = vmatprep.subr.bf16.mxu0 0
  %2186 = vmatpush1.bf16.msra.mxu0 0
  %2187 = vmatprep.subr.bf16.mxu0 0
  %2188 = vmatpush1.bf16.msra.mxu0 0
  %2189 = vmatprep.subr.bf16.mxu0 0
  %2190 = vmatpush1.bf16.msra.mxu0 0
  %2191 = vmatprep.subr.bf16.mxu0 0
  %2192 = vmatpush1.bf16.msra.mxu0 0
  %2193 = vmatprep.subr.bf16.mxu0 0
  %2194 = vmatpush1.bf16.msra.mxu0 0
  %2195 = vmatprep.subr.bf16.mxu0 0
  %2196 = vmatpush1.bf16.msra.mxu0 0
  %2197 = vmatprep.subr.bf16.mxu0 0
  %2198 = vmatpush1.bf16.msra.mxu0 0
  %2199 = vmatprep.subr.bf16.mxu0 0
  %2200 = vmatpush1.bf16.msra.mxu0 0
  %2201 = vmatprep.subr.bf16.mxu0 0
  %2202 = vmatpush1.bf16.msra.mxu0 0
  %2203 = vmatprep.subr.bf16.mxu0 0
  %2204 = vmatpush1.bf16.msra.mxu0 0
  %2205 = vmatprep.subr.bf16.mxu0 0
  %2206 = vmatpush1.bf16.msra.mxu0 0
  %2207 = vmatprep.mubr.bf16.mxu0 0
  %2208 = vmatmul.mubr.bf16.gmra.mrb[0].mxu0 %v1739
  %v2209 = vpop.f32.mrb[0].mxu0
  %v2210 = vadd.f32 0.0, %v2209
  %v2211 = vpop.f32.mrb[0].mxu0
  %v2212 = vpop.f32.mrb[0].mxu0
  %v2213 = vadd.f32 0.0, %v2212
  %v2214 = vpop.f32.mrb[0].mxu0
  %2215 = vmatprep.mubr.bf16.mxu0 0
  %2216 = vmatmul.mubr.bf16.gmra.mrb[0].mxu0 %v1742
  %v2217 = vpop.f32.mrb[0].mxu0
  %v2218 = vadd.f32 0.0, %v2217
  %v2219 = vpop.f32.mrb[0].mxu0
  %v2220 = vpop.f32.mrb[0].mxu0
  %v2221 = vadd.f32 0.0, %v2220
  %v2222 = vpop.f32.mrb[0].mxu0
  %2223 = vdwg.mxu0
  %2224 = vst.msk [vmem:[#allocation3 + $0xa0] sm:$0xff] %vm1793, %v2210
  %2225 = vst.msk [vmem:[#allocation3 + $0xa8] sm:$0xff] %vm1793, %v2213
  %2226 = vst.msk [vmem:[#allocation3 + $0xb0] sm:$0xff] %vm1793, %v2218
  %2227 = vst.msk [vmem:[#allocation3 + $0xb8] sm:$0xff] %vm1793, %v2221
  %s2228 = scalar_lea.vmem %s4, 192
  %v2229 = vld [vmem:[%s2228] sm:$0xf]
  %v2230 = vld [vmem:[%s2228 + $0x4] sm:$0xf]
  %v2231 = vld [vmem:[%s2228 + $0x8] sm:$0xf]
  %v2232 = vld [vmem:[%s2228 + $0xc] sm:$0xf]
  %v2233 = vld [vmem:[%s2228 + $0x10] sm:$0xf]
  %v2234 = vld [vmem:[%s2228 + $0x14] sm:$0xf]
  %v2235 = vld [vmem:[%s2228 + $0x18] sm:$0xf]
  %v2236 = vld [vmem:[%s2228 + $0x1c] sm:$0xf]
  %v2245 = vunpack.c.l.b16 %v2229
  %v2246 = vunpack.c.l.b16 %v2230
  %v2247 = vunpack.c.l.b16 %v2231
  %v2248 = vunpack.c.l.b16 %v2232
  %v2249 = vunpack.c.l.b16 %v2233
  %v2250 = vunpack.c.l.b16 %v2234
  %v2251 = vunpack.c.l.b16 %v2235
  %v2252 = vunpack.c.l.b16 %v2236
  %v2253 = vpack.c.b16 %v2246, %v2245
  %v2254 = vpack.c.b16 %v2248, %v2247
  %v2255 = vpack.c.b16 %v2250, %v2249
  %v2256 = vpack.c.b16 %v2252, %v2251
  %2261 = vmatprep.subr.bf16.mxu0 0
  %2262 = vmatpush1.bf16.msra.mxu0 %v2253
  %2263 = vmatprep.subr.bf16.mxu0 0
  %2264 = vmatpush1.bf16.msra.mxu0 %v2254
  %2265 = vmatprep.subr.bf16.mxu0 0
  %2266 = vmatpush1.bf16.msra.mxu0 %v2255
  %2267 = vmatprep.subr.bf16.mxu0 0
  %2268 = vmatpush1.bf16.msra.mxu0 %v2256
  %2269 = vmatprep.subr.bf16.mxu0 0
  %2270 = vmatpush1.bf16.msra.mxu0 0
  %2271 = vmatprep.subr.bf16.mxu0 0
  %2272 = vmatpush1.bf16.msra.mxu0 0
  %2273 = vmatprep.subr.bf16.mxu0 0
  %2274 = vmatpush1.bf16.msra.mxu0 0
  %2275 = vmatprep.subr.bf16.mxu0 0
  %2276 = vmatpush1.bf16.msra.mxu0 0
  %2277 = vmatprep.subr.bf16.mxu0 0
  %2278 = vmatpush1.bf16.msra.mxu0 0
  %2279 = vmatprep.subr.bf16.mxu0 0
  %2280 = vmatpush1.bf16.msra.mxu0 0
  %2281 = vmatprep.subr.bf16.mxu0 0
  %2282 = vmatpush1.bf16.msra.mxu0 0
  %2283 = vmatprep.subr.bf16.mxu0 0
  %2284 = vmatpush1.bf16.msra.mxu0 0
  %2285 = vmatprep.subr.bf16.mxu0 0
  %2286 = vmatpush1.bf16.msra.mxu0 0
  %2287 = vmatprep.subr.bf16.mxu0 0
  %2288 = vmatpush1.bf16.msra.mxu0 0
  %2289 = vmatprep.subr.bf16.mxu0 0
  %2290 = vmatpush1.bf16.msra.mxu0 0
  %2291 = vmatprep.subr.bf16.mxu0 0
  %2292 = vmatpush1.bf16.msra.mxu0 0
  %2293 = vmatprep.mubr.bf16.mxu0 0
  %2294 = vmatmul.mubr.bf16.gmra.mrb[0].mxu0 %v1739
  %v2295 = vpop.f32.mrb[0].mxu0
  %v2296 = vadd.f32 0.0, %v2295
  %v2297 = vpop.f32.mrb[0].mxu0
  %v2298 = vpop.f32.mrb[0].mxu0
  %v2299 = vadd.f32 0.0, %v2298
  %v2300 = vpop.f32.mrb[0].mxu0
  %2301 = vmatprep.mubr.bf16.mxu0 0
  %2302 = vmatmul.mubr.bf16.gmra.mrb[0].mxu0 %v1742
  %v2303 = vpop.f32.mrb[0].mxu0
  %v2304 = vadd.f32 0.0, %v2303
  %v2305 = vpop.f32.mrb[0].mxu0
  %v2306 = vpop.f32.mrb[0].mxu0
  %v2307 = vadd.f32 0.0, %v2306
  %v2308 = vpop.f32.mrb[0].mxu0
  %2309 = vdwg.mxu0
  %2310 = vst.msk [vmem:[#allocation3 + $0xc0] sm:$0xff] %vm1793, %v2296
  %2311 = vst.msk [vmem:[#allocation3 + $0xc8] sm:$0xff] %vm1793, %v2299
  %2312 = vst.msk [vmem:[#allocation3 + $0xd0] sm:$0xff] %vm1793, %v2304
  %2313 = vst.msk [vmem:[#allocation3 + $0xd8] sm:$0xff] %vm1793, %v2307
  %s2314 = scalar_lea.vmem %s4, 224
  %v2315 = vld [vmem:[%s2314] sm:$0xf]
  %v2316 = vld [vmem:[%s2314 + $0x4] sm:$0xf]
  %v2317 = vld [vmem:[%s2314 + $0x8] sm:$0xf]
  %v2318 = vld [vmem:[%s2314 + $0xc] sm:$0xf]
  %v2319 = vld [vmem:[%s2314 + $0x10] sm:$0xf]
  %v2320 = vld [vmem:[%s2314 + $0x14] sm:$0xf]
  %v2321 = vld [vmem:[%s2314 + $0x18] sm:$0xf]
  %v2322 = vld [vmem:[%s2314 + $0x1c] sm:$0xf]
  %v2331 = vunpack.c.l.b16 %v2315
  %v2332 = vunpack.c.l.b16 %v2316
  %v2333 = vunpack.c.l.b16 %v2317
  %v2334 = vunpack.c.l.b16 %v2318
  %v2335 = vunpack.c.l.b16 %v2319
  %v2336 = vunpack.c.l.b16 %v2320
  %v2337 = vunpack.c.l.b16 %v2321
  %v2338 = vunpack.c.l.b16 %v2322
  %v2339 = vpack.c.b16 %v2332, %v2331
  %v2340 = vpack.c.b16 %v2334, %v2333
  %v2341 = vpack.c.b16 %v2336, %v2335
  %v2342 = vpack.c.b16 %v2338, %v2337
  %2347 = vmatprep.subr.bf16.mxu0 0
  %2348 = vmatpush1.bf16.msra.mxu0 %v2339
  %2349 = vmatprep.subr.bf16.mxu0 0
  %2350 = vmatpush1.bf16.msra.mxu0 %v2340
  %2351 = vmatprep.subr.bf16.mxu0 0
  %2352 = vmatpush1.bf16.msra.mxu0 %v2341
  %2353 = vmatprep.subr.bf16.mxu0 0
  %2354 = vmatpush1.bf16.msra.mxu0 %v2342
  %2355 = vmatprep.subr.bf16.mxu0 0
  %2356 = vmatpush1.bf16.msra.mxu0 0
  %2357 = vmatprep.subr.bf16.mxu0 0
  %2358 = vmatpush1.bf16.msra.mxu0 0
  %2359 = vmatprep.subr.bf16.mxu0 0
  %2360 = vmatpush1.bf16.msra.mxu0 0
  %2361 = vmatprep.subr.bf16.mxu0 0
  %2362 = vmatpush1.bf16.msra.mxu0 0
  %2363 = vmatprep.subr.bf16.mxu0 0
  %2364 = vmatpush1.bf16.msra.mxu0 0
  %2365 = vmatprep.subr.bf16.mxu0 0
  %2366 = vmatpush1.bf16.msra.mxu0 0
  %2367 = vmatprep.subr.bf16.mxu0 0
  %2368 = vmatpush1.bf16.msra.mxu0 0
  %2369 = vmatprep.subr.bf16.mxu0 0
  %2370 = vmatpush1.bf16.msra.mxu0 0
  %2371 = vmatprep.subr.bf16.mxu0 0
  %2372 = vmatpush1.bf16.msra.mxu0 0
  %2373 = vmatprep.subr.bf16.mxu0 0
  %2374 = vmatpush1.bf16.msra.mxu0 0
  %2375 = vmatprep.subr.bf16.mxu0 0
  %2376 = vmatpush1.bf16.msra.mxu0 0
  %2377 = vmatprep.subr.bf16.mxu0 0
  %2378 = vmatpush1.bf16.msra.mxu0 0
  %2379 = vmatprep.mubr.bf16.mxu0 0
  %2380 = vmatmul.mubr.bf16.gmra.mrb[0].mxu0 %v1739
  %v2381 = vpop.f32.mrb[0].mxu0
  %v2382 = vadd.f32 0.0, %v2381
  %v2383 = vpop.f32.mrb[0].mxu0
  %v2384 = vpop.f32.mrb[0].mxu0
  %v2385 = vadd.f32 0.0, %v2384
  %v2386 = vpop.f32.mrb[0].mxu0
  %2387 = vmatprep.mubr.bf16.mxu0 0
  %2388 = vmatmul.mubr.bf16.gmra.mrb[0].mxu0 %v1742
  %v2389 = vpop.f32.mrb[0].mxu0
  %v2390 = vadd.f32 0.0, %v2389
  %v2391 = vpop.f32.mrb[0].mxu0
  %v2392 = vpop.f32.mrb[0].mxu0
  %v2393 = vadd.f32 0.0, %v2392
  %v2394 = vpop.f32.mrb[0].mxu0
  %2395 = vdwg.mxu0
  %2396 = vst.msk [vmem:[#allocation3 + $0xe0] sm:$0xff] %vm1793, %v2382
  %2397 = vst.msk [vmem:[#allocation3 + $0xe8] sm:$0xff] %vm1793, %v2385
  %2398 = vst.msk [vmem:[#allocation3 + $0xf0] sm:$0xff] %vm1793, %v2390
  %2399 = vst.msk [vmem:[#allocation3 + $0xf8] sm:$0xff] %vm1793, %v2393
  %s2400 = scalar_lea.vmem %s4, 256
  %v2401 = vld [vmem:[%s2400] sm:$0xf]
  %v2402 = vld [vmem:[%s2400 + $0x4] sm:$0xf]
  %v2403 = vld [vmem:[%s2400 + $0x8] sm:$0xf]
  %v2404 = vld [vmem:[%s2400 + $0xc] sm:$0xf]
  %v2405 = vld [vmem:[%s2400 + $0x10] sm:$0xf]
  %v2406 = vld [vmem:[%s2400 + $0x14] sm:$0xf]
  %v2407 = vld [vmem:[%s2400 + $0x18] sm:$0xf]
  %v2408 = vld [vmem:[%s2400 + $0x1c] sm:$0xf]
  %v2417 = vunpack.c.l.b16 %v2401
  %v2418 = vunpack.c.l.b16 %v2402
  %v2419 = vunpack.c.l.b16 %v2403
  %v2420 = vunpack.c.l.b16 %v2404
  %v2421 = vunpack.c.l.b16 %v2405
  %v2422 = vunpack.c.l.b16 %v2406
  %v2423 = vunpack.c.l.b16 %v2407
  %v2424 = vunpack.c.l.b16 %v2408
  %v2425 = vpack.c.b16 %v2418, %v2417
  %v2426 = vpack.c.b16 %v2420, %v2419
  %v2427 = vpack.c.b16 %v2422, %v2421
  %v2428 = vpack.c.b16 %v2424, %v2423
  %2433 = vmatprep.subr.bf16.mxu0 0
  %2434 = vmatpush1.bf16.msra.mxu0 %v2425
  %2435 = vmatprep.subr.bf16.mxu0 0
  %2436 = vmatpush1.bf16.msra.mxu0 %v2426
  %2437 = vmatprep.subr.bf16.mxu0 0
  %2438 = vmatpush1.bf16.msra.mxu0 %v2427
  %2439 = vmatprep.subr.bf16.mxu0 0
  %2440 = vmatpush1.bf16.msra.mxu0 %v2428
  %2441 = vmatprep.subr.bf16.mxu0 0
  %2442 = vmatpush1.bf16.msra.mxu0 0
  %2443 = vmatprep.subr.bf16.mxu0 0
  %2444 = vmatpush1.bf16.msra.mxu0 0
  %2445 = vmatprep.subr.bf16.mxu0 0
  %2446 = vmatpush1.bf16.msra.mxu0 0
  %2447 = vmatprep.subr.bf16.mxu0 0
  %2448 = vmatpush1.bf16.msra.mxu0 0
  %2449 = vmatprep.subr.bf16.mxu0 0
  %2450 = vmatpush1.bf16.msra.mxu0 0
  %2451 = vmatprep.subr.bf16.mxu0 0
  %2452 = vmatpush1.bf16.msra.mxu0 0
  %2453 = vmatprep.subr.bf16.mxu0 0
  %2454 = vmatpush1.bf16.msra.mxu0 0
  %2455 = vmatprep.subr.bf16.mxu0 0
  %2456 = vmatpush1.bf16.msra.mxu0 0
  %2457 = vmatprep.subr.bf16.mxu0 0
  %2458 = vmatpush1.bf16.msra.mxu0 0
  %2459 = vmatprep.subr.bf16.mxu0 0
  %2460 = vmatpush1.bf16.msra.mxu0 0
  %2461 = vmatprep.subr.bf16.mxu0 0
  %2462 = vmatpush1.bf16.msra.mxu0 0
  %2463 = vmatprep.subr.bf16.mxu0 0
  %2464 = vmatpush1.bf16.msra.mxu0 0
  %2465 = vmatprep.mubr.bf16.mxu0 0
  %2466 = vmatmul.mubr.bf16.gmra.mrb[0].mxu0 %v1739
  %v2467 = vpop.f32.mrb[0].mxu0
  %v2468 = vadd.f32 0.0, %v2467
  %v2469 = vpop.f32.mrb[0].mxu0
  %v2470 = vpop.f32.mrb[0].mxu0
  %v2471 = vadd.f32 0.0, %v2470
  %v2472 = vpop.f32.mrb[0].mxu0
  %2473 = vmatprep.mubr.bf16.mxu0 0
  %2474 = vmatmul.mubr.bf16.gmra.mrb[0].mxu0 %v1742
  %v2475 = vpop.f32.mrb[0].mxu0
  %v2476 = vadd.f32 0.0, %v2475
  %v2477 = vpop.f32.mrb[0].mxu0
  %v2478 = vpop.f32.mrb[0].mxu0
  %v2479 = vadd.f32 0.0, %v2478
  %v2480 = vpop.f32.mrb[0].mxu0
  %2481 = vdwg.mxu0
  %2482 = vst.msk [vmem:[#allocation3 + $0x100] sm:$0xff] %vm1793, %v2468
  %2483 = vst.msk [vmem:[#allocation3 + $0x108] sm:$0xff] %vm1793, %v2471
  %2484 = vst.msk [vmem:[#allocation3 + $0x110] sm:$0xff] %vm1793, %v2476
  %2485 = vst.msk [vmem:[#allocation3 + $0x118] sm:$0xff] %vm1793, %v2479
  %v2486 = vld [vmem:[%s5] sm:$0xff]
  %v2487 = vld [vmem:[%s5 + $0x8] sm:$0xf]
  %v2488 = vld [vmem:[%s5 + $0xc] sm:$0xff]
  %v2489 = vld [vmem:[%s5 + $0x14] sm:$0xf]
  %v2490 = vld [vmem:[%s5 + $0x18] sm:$0xff]
  %v2491 = vld [vmem:[%s5 + $0x20] sm:$0xf]
  %v2492 = vld [vmem:[%s5 + $0x24] sm:$0xff]
  %v2493 = vld [vmem:[%s5 + $0x2c] sm:$0xf]
  %v2494 = vld [vmem:[%s5 + $0x30] sm:$0xff]
  %v2495 = vld [vmem:[%s5 + $0x38] sm:$0xf]
  %v2496 = vld [vmem:[%s5 + $0x3c] sm:$0xff]
  %v2497 = vld [vmem:[%s5 + $0x44] sm:$0xf]
  %v2498 = vld [vmem:[%s5 + $0x48] sm:$0xff]
  %v2499 = vld [vmem:[%s5 + $0x50] sm:$0xf]
  %v2500 = vld [vmem:[%s5 + $0x54] sm:$0xff]
  %v2501 = vld [vmem:[%s5 + $0x5c] sm:$0xf]
  %v2502 = vld [vmem:[#allocation3] sm:$0xff]
  %v2503 = vld [vmem:[#allocation3 + $0x8] sm:$0xff]
  %v2504 = vld [vmem:[#allocation3 + $0x10] sm:$0xff]
  %v2505 = vld [vmem:[#allocation3 + $0x18] sm:$0xff]
  %v2506 = vld [vmem:[#allocation3 + $0x20] sm:$0xff]
  %v2507 = vld [vmem:[#allocation3 + $0x28] sm:$0xff]
  %v2508 = vld [vmem:[#allocation3 + $0x30] sm:$0xff]
  %v2509 = vld [vmem:[#allocation3 + $0x38] sm:$0xff]
  %v2510 = vld [vmem:[#allocation3 + $0x40] sm:$0xff]
  %v2511 = vld [vmem:[#allocation3 + $0x48] sm:$0xff]
  %v2512 = vld [vmem:[#allocation3 + $0x50] sm:$0xff]
  %v2513 = vld [vmem:[#allocation3 + $0x58] sm:$0xff]
  %v2514 = vld [vmem:[#allocation3 + $0x60] sm:$0xff]
  %v2515 = vld [vmem:[#allocation3 + $0x68] sm:$0xff]
  %v2516 = vld [vmem:[#allocation3 + $0x70] sm:$0xff]
  %v2517 = vld [vmem:[#allocation3 + $0x78] sm:$0xff]
  %v2518 = vld [vmem:[#allocation3 + $0x80] sm:$0xff]
  %v2519 = vld [vmem:[#allocation3 + $0x88] sm:$0xff]
  %v2520 = vld [vmem:[#allocation3 + $0x90] sm:$0xff]
  %v2521 = vld [vmem:[#allocation3 + $0x98] sm:$0xff]
  %v2522 = vld [vmem:[#allocation3 + $0xa0] sm:$0xff]
  %v2523 = vld [vmem:[#allocation3 + $0xa8] sm:$0xff]
  %v2524 = vld [vmem:[#allocation3 + $0xb0] sm:$0xff]
  %v2525 = vld [vmem:[#allocation3 + $0xb8] sm:$0xff]
  %v2526 = vld [vmem:[#allocation3 + $0xc0] sm:$0xff]
  %v2527 = vld [vmem:[#allocation3 + $0xc8] sm:$0xff]
  %v2528 = vld [vmem:[#allocation3 + $0xd0] sm:$0xff]
  %v2529 = vld [vmem:[#allocation3 + $0xd8] sm:$0xff]
  %v2530 = vld [vmem:[#allocation3 + $0xe0] sm:$0xff]
  %v2531 = vld [vmem:[#allocation3 + $0xe8] sm:$0xff]
  %v2532 = vld [vmem:[#allocation3 + $0xf0] sm:$0xff]
  %v2533 = vld [vmem:[#allocation3 + $0xf8] sm:$0xff]
  %v2534 = vld [vmem:[#allocation3 + $0x100] sm:$0xff]
  %v2535 = vld [vmem:[#allocation3 + $0x108] sm:$0xff]
  %v2536 = vld [vmem:[#allocation3 + $0x110] sm:$0xff]
  %v2537 = vld [vmem:[#allocation3 + $0x118] sm:$0xff]
  %v2538 = vpack.c.bf16 %v2503, %v2502
  %v2539 = vpack.c.bf16 %v2505, %v2504
  %v2540 = vpack.c.bf16 %v2507, %v2506
  %v2541 = vpack.c.bf16 %v2509, %v2508
  %v2542 = vpack.c.bf16 %v2511, %v2510
  %v2543 = vpack.c.bf16 %v2513, %v2512
  %v2544 = vpack.c.bf16 %v2515, %v2514
  %v2545 = vpack.c.bf16 %v2517, %v2516
  %v2546 = vpack.c.bf16 %v2519, %v2518
  %v2547 = vpack.c.bf16 %v2521, %v2520
  %v2548 = vpack.c.bf16 %v2523, %v2522
  %v2549 = vpack.c.bf16 %v2525, %v2524
  %v2550 = vpack.c.bf16 %v2527, %v2526
  %v2551 = vpack.c.bf16 %v2529, %v2528
  %v2552 = vpack.c.bf16 %v2531, %v2530
  %v2553 = vpack.c.bf16 %v2533, %v2532
  %v2554 = vpack.c.bf16 %v2535, %v2534
  %v2555 = vpack.c.bf16 %v2537, %v2536
  %v2556 = vld [vmem:[%s6] sm:$0xff]
  %v2557 = vld [vmem:[%s6 + $0x8] sm:$0xff]
  %v2558 = vld [vmem:[%s6 + $0x10] sm:$0xff]
  %v2559 = vld [vmem:[%s6 + $0x18] sm:$0xff]
  %v2560 = vld [vmem:[%s6 + $0x20] sm:$0xff]
  %v2561 = vld [vmem:[%s6 + $0x28] sm:$0xff]
  %v2562 = vld [vmem:[%s6 + $0x30] sm:$0xff]
  %v2563 = vld [vmem:[%s6 + $0x38] sm:$0xff]
  %2565 = vset.pattern.permute.xlu0 0
  %2566 = vperm.xlu0 %2565, %v2556
  %v2567 = vpop.permute.xlu0 %2566
  %2570 = vset.pattern.permute.xlu0 0
  %2571 = vperm.xlu0 %2570, %v2557
  %v2572 = vpop.permute.xlu0 %2571
  %2575 = vset.pattern.permute.xlu0 0
  %2576 = vperm.xlu0 %2575, %v2558
  %v2577 = vpop.permute.xlu0 %2576
  %2580 = vset.pattern.permute.xlu0 0
  %2581 = vperm.xlu0 %2580, %v2559
  %v2582 = vpop.permute.xlu0 %2581
  %2585 = vset.pattern.permute.xlu0 0
  %2586 = vperm.xlu0 %2585, %v2560
  %v2587 = vpop.permute.xlu0 %2586
  %2590 = vset.pattern.permute.xlu0 0
  %2591 = vperm.xlu0 %2590, %v2561
  %v2592 = vpop.permute.xlu0 %2591
  %2595 = vset.pattern.permute.xlu0 0
  %2596 = vperm.xlu0 %2595, %v2562
  %v2597 = vpop.permute.xlu0 %2596
  %2600 = vset.pattern.permute.xlu0 0
  %2601 = vperm.xlu0 %2600, %v2563
  %v2602 = vpop.permute.xlu0 %2601
  %v2620 = vunpack.c.l.b16 %v2486
  %v2621 = vunpack.c.h.b16 %v2486
  %v2622 = vunpack.c.l.b16 %v2487
  %v2623 = vunpack.c.l.b16 %v2488
  %v2624 = vunpack.c.h.b16 %v2488
  %v2625 = vunpack.c.l.b16 %v2489
  %v2626 = vunpack.c.l.b16 %v2490
  %v2627 = vunpack.c.h.b16 %v2490
  %v2628 = vunpack.c.l.b16 %v2491
  %v2629 = vunpack.c.l.b16 %v2492
  %v2630 = vunpack.c.h.b16 %v2492
  %v2631 = vunpack.c.l.b16 %v2493
  %v2632 = vunpack.c.l.b16 %v2494
  %v2633 = vunpack.c.h.b16 %v2494
  %v2634 = vunpack.c.l.b16 %v2495
  %v2635 = vunpack.c.l.b16 %v2496
  %v2636 = vunpack.c.h.b16 %v2496
  %v2637 = vunpack.c.l.b16 %v2497
  %v2638 = vunpack.c.l.b16 %v2498
  %v2639 = vunpack.c.h.b16 %v2498
  %v2640 = vunpack.c.l.b16 %v2499
  %v2641 = vunpack.c.l.b16 %v2500
  %v2642 = vunpack.c.h.b16 %v2500
  %v2643 = vunpack.c.l.b16 %v2501
  %v2644 = vpack.c.b16 %v2623, %v2620
  %v2645 = vpack.c.b16 %v2624, %v2621
  %v2646 = vpack.c.b16 %v2625, %v2622
  %v2647 = vpack.c.b16 %v2629, %v2626
  %v2648 = vpack.c.b16 %v2630, %v2627
  %v2649 = vpack.c.b16 %v2631, %v2628
  %v2650 = vpack.c.b16 %v2635, %v2632
  %v2651 = vpack.c.b16 %v2636, %v2633
  %v2652 = vpack.c.b16 %v2637, %v2634
  %v2653 = vpack.c.b16 %v2641, %v2638
  %v2654 = vpack.c.b16 %v2642, %v2639
  %v2655 = vpack.c.b16 %v2643, %v2640
  %vm2664 = vcmask 261120
  %v2666 = vsel %vm2664, %v2646, 0
  %v2669 = vsel %vm2664, %v2649, 0
  %v2672 = vsel %vm2664, %v2652, 0
  %v2675 = vsel %vm2664, %v2655, 0
  %2677 = vmatprep.subr.bf16.mxu0 0
  %2678 = vmatpush1.bf16.msra.mxu0 %v2538
  %2679 = vmatprep.subr.bf16.mxu0 0
  %2680 = vmatpush1.bf16.msra.mxu0 %v2539
  %2681 = vmatprep.subr.bf16.mxu0 0
  %2682 = vmatpush1.bf16.msra.mxu0 %v2540
  %2683 = vmatprep.subr.bf16.mxu0 0
  %2684 = vmatpush1.bf16.msra.mxu0 %v2541
  %2685 = vmatprep.subr.bf16.mxu0 0
  %2686 = vmatpush1.bf16.msra.mxu0 %v2542
  %2687 = vmatprep.subr.bf16.mxu0 0
  %2688 = vmatpush1.bf16.msra.mxu0 %v2543
  %2689 = vmatprep.subr.bf16.mxu0 0
  %2690 = vmatpush1.bf16.msra.mxu0 %v2544
  %2691 = vmatprep.subr.bf16.mxu0 0
  %2692 = vmatpush1.bf16.msra.mxu0 %v2545
  %2693 = vmatprep.subr.bf16.mxu0 0
  %2694 = vmatpush1.bf16.msra.mxu0 %v2546
  %2695 = vmatprep.subr.bf16.mxu0 0
  %2696 = vmatpush1.bf16.msra.mxu0 %v2547
  %2697 = vmatprep.subr.bf16.mxu0 0
  %2698 = vmatpush1.bf16.msra.mxu0 %v2548
  %2699 = vmatprep.subr.bf16.mxu0 0
  %2700 = vmatpush1.bf16.msra.mxu0 %v2549
  %2701 = vmatprep.subr.bf16.mxu0 0
  %2702 = vmatpush1.bf16.msra.mxu0 %v2550
  %2703 = vmatprep.subr.bf16.mxu0 0
  %2704 = vmatpush1.bf16.msra.mxu0 %v2551
  %2705 = vmatprep.subr.bf16.mxu0 0
  %2706 = vmatpush1.bf16.msra.mxu0 %v2552
  %2707 = vmatprep.subr.bf16.mxu0 0
  %2708 = vmatpush1.bf16.msra.mxu0 %v2553
  %2709 = vmatprep.mubr.bf16.mxu0 %v2645
  %2710 = vmatmul.mubr.bf16.gmra.mrb[0].mxu0 %v2644
  %v2711 = vpop.f32.mrb[0].mxu0
  %v2712 = vadd.f32 %v2567, %v2711
  %v2713 = vpop.f32.mrb[0].mxu0
  %v2714 = vpop.f32.mrb[0].mxu0
  %v2715 = vadd.f32 %v2572, %v2714
  %v2716 = vpop.f32.mrb[0].mxu0
  %2717 = vmatprep.mubr.bf16.mxu0 %v2648
  %2718 = vmatmul.mubr.bf16.gmra.mrb[0].mxu0 %v2647
  %v2719 = vpop.f32.mrb[0].mxu0
  %v2720 = vadd.f32 %v2577, %v2719
  %v2721 = vpop.f32.mrb[0].mxu0
  %v2722 = vpop.f32.mrb[0].mxu0
  %v2723 = vadd.f32 %v2582, %v2722
  %v2724 = vpop.f32.mrb[0].mxu0
  %2725 = vmatprep.mubr.bf16.mxu0 %v2651
  %2726 = vmatmul.mubr.bf16.gmra.mrb[0].mxu0 %v2650
  %v2727 = vpop.f32.mrb[0].mxu0
  %v2728 = vadd.f32 %v2587, %v2727
  %v2729 = vpop.f32.mrb[0].mxu0
  %v2730 = vpop.f32.mrb[0].mxu0
  %v2731 = vadd.f32 %v2592, %v2730
  %v2732 = vpop.f32.mrb[0].mxu0
  %2733 = vmatprep.mubr.bf16.mxu0 %v2654
  %2734 = vmatmul.mubr.bf16.gmra.mrb[0].mxu0 %v2653
  %v2735 = vpop.f32.mrb[0].mxu0
  %v2736 = vadd.f32 %v2597, %v2735
  %v2737 = vpop.f32.mrb[0].mxu0
  %v2738 = vpop.f32.mrb[0].mxu0
  %v2739 = vadd.f32 %v2602, %v2738
  %v2740 = vpop.f32.mrb[0].mxu0
  %2741 = vdwg.mxu0
  %2742 = vmatprep.subr.bf16.mxu0 0
  %2743 = vmatpush1.bf16.msra.mxu0 %v2554
  %2744 = vmatprep.subr.bf16.mxu0 0
  %2745 = vmatpush1.bf16.msra.mxu0 %v2555
  %2746 = vmatprep.subr.bf16.mxu0 0
  %2747 = vmatpush1.bf16.msra.mxu0 0
  %2748 = vmatprep.subr.bf16.mxu0 0
  %2749 = vmatpush1.bf16.msra.mxu0 0
  %2750 = vmatprep.subr.bf16.mxu0 0
  %2751 = vmatpush1.bf16.msra.mxu0 0
  %2752 = vmatprep.subr.bf16.mxu0 0
  %2753 = vmatpush1.bf16.msra.mxu0 0
  %2754 = vmatprep.subr.bf16.mxu0 0
  %2755 = vmatpush1.bf16.msra.mxu0 0
  %2756 = vmatprep.subr.bf16.mxu0 0
  %2757 = vmatpush1.bf16.msra.mxu0 0
  %2758 = vmatprep.subr.bf16.mxu0 0
  %2759 = vmatpush1.bf16.msra.mxu0 0
  %2760 = vmatprep.subr.bf16.mxu0 0
  %2761 = vmatpush1.bf16.msra.mxu0 0
  %2762 = vmatprep.subr.bf16.mxu0 0
  %2763 = vmatpush1.bf16.msra.mxu0 0
  %2764 = vmatprep.subr.bf16.mxu0 0
  %2765 = vmatpush1.bf16.msra.mxu0 0
  %2766 = vmatprep.subr.bf16.mxu0 0
  %2767 = vmatpush1.bf16.msra.mxu0 0
  %2768 = vmatprep.subr.bf16.mxu0 0
  %2769 = vmatpush1.bf16.msra.mxu0 0
  %2770 = vmatprep.subr.bf16.mxu0 0
  %2771 = vmatpush1.bf16.msra.mxu0 0
  %2772 = vmatprep.subr.bf16.mxu0 0
  %2773 = vmatpush1.bf16.msra.mxu0 0
  %2774 = vmatprep.mubr.bf16.mxu0 0
  %2775 = vmatmul.mubr.bf16.gmra.mrb[0].mxu0 %v2666
  %v2776 = vpop.f32.mrb[0].mxu0
  %v2777 = vadd.f32 %v2712, %v2776
  %v2778 = vpop.f32.mrb[0].mxu0
  %v2779 = vpop.f32.mrb[0].mxu0
  %v2780 = vadd.f32 %v2715, %v2779
  %v2781 = vpop.f32.mrb[0].mxu0
  %2782 = vmatprep.mubr.bf16.mxu0 0
  %2783 = vmatmul.mubr.bf16.gmra.mrb[0].mxu0 %v2669
  %v2784 = vpop.f32.mrb[0].mxu0
  %v2785 = vadd.f32 %v2720, %v2784
  %v2786 = vpop.f32.mrb[0].mxu0
  %v2787 = vpop.f32.mrb[0].mxu0
  %v2788 = vadd.f32 %v2723, %v2787
  %v2789 = vpop.f32.mrb[0].mxu0
  %2790 = vmatprep.mubr.bf16.mxu0 0
  %2791 = vmatmul.mubr.bf16.gmra.mrb[0].mxu0 %v2672
  %v2792 = vpop.f32.mrb[0].mxu0
  %v2793 = vadd.f32 %v2728, %v2792
  %v2794 = vpop.f32.mrb[0].mxu0
  %v2795 = vpop.f32.mrb[0].mxu0
  %v2796 = vadd.f32 %v2731, %v2795
  %v2797 = vpop.f32.mrb[0].mxu0
  %2798 = vmatprep.mubr.bf16.mxu0 0
  %2799 = vmatmul.mubr.bf16.gmra.mrb[0].mxu0 %v2675
  %v2800 = vpop.f32.mrb[0].mxu0
  %v2801 = vadd.f32 %v2736, %v2800
  %v2802 = vpop.f32.mrb[0].mxu0
  %v2803 = vpop.f32.mrb[0].mxu0
  %v2804 = vadd.f32 %v2739, %v2803
  %v2805 = vpop.f32.mrb[0].mxu0
  %2806 = vdwg.mxu0
  %v2807 = vmax.f32 %v2777, 0.0
  %v2808 = vmax.f32 %v2780, 0.0
  %v2809 = vmax.f32 %v2785, 0.0
  %v2810 = vmax.f32 %v2788, 0.0
  %v2811 = vmax.f32 %v2793, 0.0
  %v2812 = vmax.f32 %v2796, 0.0
  %v2813 = vmax.f32 %v2801, 0.0
  %v2814 = vmax.f32 %v2804, 0.0
  %2815 = vst.msk [vmem:[%s14] sm:$0xff] %vm1793, %v2807
  %2816 = vst.msk [vmem:[%s14 + $0x8] sm:$0xff] %vm1793, %v2808
  %2817 = vst.msk [vmem:[%s14 + $0x10] sm:$0xff] %vm1793, %v2809
  %2818 = vst.msk [vmem:[%s14 + $0x18] sm:$0xff] %vm1793, %v2810
  %2819 = vst.msk [vmem:[%s14 + $0x20] sm:$0xff] %vm1793, %v2811
  %2820 = vst.msk [vmem:[%s14 + $0x28] sm:$0xff] %vm1793, %v2812
  %2821 = vst.msk [vmem:[%s14 + $0x30] sm:$0xff] %vm1793, %v2813
  %2822 = vst.msk [vmem:[%s14 + $0x38] sm:$0xff] %vm1793, %v2814
  %v2823 = vpack.c.bf16 %v2808, %v2807
  %v2824 = vpack.c.bf16 %v2810, %v2809
  %v2825 = vpack.c.bf16 %v2812, %v2811
  %v2826 = vpack.c.bf16 %v2814, %v2813
  %v2827 = vld [vmem:[%s7] sm:$0xf]
  %v2828 = vld [vmem:[%s7 + $0x4] sm:$0xf]
  %v2831 = vunpack.c.l.b16 %v2827
  %v2832 = vunpack.c.l.b16 %v2828
  %v2833 = vpack.c.b16 %v2832, %v2831
  %v2836 = vsel %vm1793, %v2823, 0
  %v2839 = vsel %vm1793, %v2824, 0
  %v2842 = vsel %vm1793, %v2825, 0
  %v2845 = vsel %vm1793, %v2826, 0
  %2847 = vmatprep.subr.bf16.mxu0 0
  %2848 = vmatpush1.bf16.msra.mxu0 %v2833
  %2849 = vmatprep.subr.bf16.mxu0 0
  %2850 = vmatpush1.bf16.msra.mxu0 0
  %2851 = vmatprep.subr.bf16.mxu0 0
  %2852 = vmatpush1.bf16.msra.mxu0 0
  %2853 = vmatprep.subr.bf16.mxu0 0
  %2854 = vmatpush1.bf16.msra.mxu0 0
  %2855 = vmatprep.subr.bf16.mxu0 0
  %2856 = vmatpush1.bf16.msra.mxu0 0
  %2857 = vmatprep.subr.bf16.mxu0 0
  %2858 = vmatpush1.bf16.msra.mxu0 0
  %2859 = vmatprep.subr.bf16.mxu0 0
  %2860 = vmatpush1.bf16.msra.mxu0 0
  %2861 = vmatprep.subr.bf16.mxu0 0
  %2862 = vmatpush1.bf16.msra.mxu0 0
  %2863 = vmatprep.subr.bf16.mxu0 0
  %2864 = vmatpush1.bf16.msra.mxu0 0
  %2865 = vmatprep.subr.bf16.mxu0 0
  %2866 = vmatpush1.bf16.msra.mxu0 0
  %2867 = vmatprep.subr.bf16.mxu0 0
  %2868 = vmatpush1.bf16.msra.mxu0 0
  %2869 = vmatprep.subr.bf16.mxu0 0
  %2870 = vmatpush1.bf16.msra.mxu0 0
  %2871 = vmatprep.subr.bf16.mxu0 0
  %2872 = vmatpush1.bf16.msra.mxu0 0
  %2873 = vmatprep.subr.bf16.mxu0 0
  %2874 = vmatpush1.bf16.msra.mxu0 0
  %2875 = vmatprep.subr.bf16.mxu0 0
  %2876 = vmatpush1.bf16.msra.mxu0 0
  %2877 = vmatprep.subr.bf16.mxu0 0
  %2878 = vmatpush1.bf16.msra.mxu0 0
  %2879 = vmatprep.mubr.bf16.mxu0 0
  %2880 = vmatmul.mubr.bf16.gmra.mrb[0].mxu0 %v2836
  %v2881 = vpop.f32.mrb[0].mxu0
  %v2882 = vadd.f32 0.0, %v2881
  %v2883 = vpop.f32.mrb[0].mxu0
  %v2884 = vpop.f32.mrb[0].mxu0
  %v2885 = vadd.f32 0.0, %v2884
  %v2886 = vpop.f32.mrb[0].mxu0
  %2887 = vmatprep.mubr.bf16.mxu0 0
  %2888 = vmatmul.mubr.bf16.gmra.mrb[0].mxu0 %v2839
  %v2889 = vpop.f32.mrb[0].mxu0
  %v2890 = vadd.f32 0.0, %v2889
  %v2891 = vpop.f32.mrb[0].mxu0
  %v2892 = vpop.f32.mrb[0].mxu0
  %v2893 = vadd.f32 0.0, %v2892
  %v2894 = vpop.f32.mrb[0].mxu0
  %2895 = vmatprep.mubr.bf16.mxu0 0
  %2896 = vmatmul.mubr.bf16.gmra.mrb[0].mxu0 %v2842
  %v2897 = vpop.f32.mrb[0].mxu0
  %v2898 = vadd.f32 0.0, %v2897
  %v2899 = vpop.f32.mrb[0].mxu0
  %v2900 = vpop.f32.mrb[0].mxu0
  %v2901 = vadd.f32 0.0, %v2900
  %v2902 = vpop.f32.mrb[0].mxu0
  %2903 = vmatprep.mubr.bf16.mxu0 0
  %2904 = vmatmul.mubr.bf16.gmra.mrb[0].mxu0 %v2845
  %v2905 = vpop.f32.mrb[0].mxu0
  %v2906 = vadd.f32 0.0, %v2905
  %v2907 = vpop.f32.mrb[0].mxu0
  %v2908 = vpop.f32.mrb[0].mxu0
  %v2909 = vadd.f32 0.0, %v2908
  %v2910 = vpop.f32.mrb[0].mxu0
  %2911 = vdwg.mxu0
  %v2912 = vpack.c.bf16 %v2885, %v2882
  %v2913 = vpack.c.bf16 %v2893, %v2890
  %v2914 = vpack.c.bf16 %v2901, %v2898
  %v2915 = vpack.c.bf16 %v2909, %v2906
  %s2916 = scalar_lea.vmem %s7, 8
  %v2917 = vld [vmem:[%s2916] sm:$0xf]
  %v2918 = vld [vmem:[%s2916 + $0x4] sm:$0xf]
  %v2921 = vunpack.c.l.b16 %v2917
  %v2922 = vunpack.c.l.b16 %v2918
  %v2923 = vpack.c.b16 %v2922, %v2921
  %2925 = vmatprep.subr.bf16.mxu0 0
  %2926 = vmatpush1.bf16.msra.mxu0 %v2923
  %2927 = vmatprep.subr.bf16.mxu0 0
  %2928 = vmatpush1.bf16.msra.mxu0 0
  %2929 = vmatprep.subr.bf16.mxu0 0
  %2930 = vmatpush1.bf16.msra.mxu0 0
  %2931 = vmatprep.subr.bf16.mxu0 0
  %2932 = vmatpush1.bf16.msra.mxu0 0
  %2933 = vmatprep.subr.bf16.mxu0 0
  %2934 = vmatpush1.bf16.msra.mxu0 0
  %2935 = vmatprep.subr.bf16.mxu0 0
  %2936 = vmatpush1.bf16.msra.mxu0 0
  %2937 = vmatprep.subr.bf16.mxu0 0
  %2938 = vmatpush1.bf16.msra.mxu0 0
  %2939 = vmatprep.subr.bf16.mxu0 0
  %2940 = vmatpush1.bf16.msra.mxu0 0
  %2941 = vmatprep.subr.bf16.mxu0 0
  %2942 = vmatpush1.bf16.msra.mxu0 0
  %2943 = vmatprep.subr.bf16.mxu0 0
  %2944 = vmatpush1.bf16.msra.mxu0 0
  %2945 = vmatprep.subr.bf16.mxu0 0
  %2946 = vmatpush1.bf16.msra.mxu0 0
  %2947 = vmatprep.subr.bf16.mxu0 0
  %2948 = vmatpush1.bf16.msra.mxu0 0
  %2949 = vmatprep.subr.bf16.mxu0 0
  %2950 = vmatpush1.bf16.msra.mxu0 0
  %2951 = vmatprep.subr.bf16.mxu0 0
  %2952 = vmatpush1.bf16.msra.mxu0 0
  %2953 = vmatprep.subr.bf16.mxu0 0
  %2954 = vmatpush1.bf16.msra.mxu0 0
  %2955 = vmatprep.subr.bf16.mxu0 0
  %2956 = vmatpush1.bf16.msra.mxu0 0
  %2957 = vmatprep.mubr.bf16.mxu0 0
  %2958 = vmatmul.mubr.bf16.gmra.mrb[0].mxu0 %v2836
  %v2959 = vpop.f32.mrb[0].mxu0
  %v2960 = vadd.f32 0.0, %v2959
  %v2961 = vpop.f32.mrb[0].mxu0
  %v2962 = vpop.f32.mrb[0].mxu0
  %v2963 = vadd.f32 0.0, %v2962
  %v2964 = vpop.f32.mrb[0].mxu0
  %2965 = vmatprep.mubr.bf16.mxu0 0
  %2966 = vmatmul.mubr.bf16.gmra.mrb[0].mxu0 %v2839
  %v2967 = vpop.f32.mrb[0].mxu0
  %v2968 = vadd.f32 0.0, %v2967
  %v2969 = vpop.f32.mrb[0].mxu0
  %v2970 = vpop.f32.mrb[0].mxu0
  %v2971 = vadd.f32 0.0, %v2970
  %v2972 = vpop.f32.mrb[0].mxu0
  %2973 = vmatprep.mubr.bf16.mxu0 0
  %2974 = vmatmul.mubr.bf16.gmra.mrb[0].mxu0 %v2842
  %v2975 = vpop.f32.mrb[0].mxu0
  %v2976 = vadd.f32 0.0, %v2975
  %v2977 = vpop.f32.mrb[0].mxu0
  %v2978 = vpop.f32.mrb[0].mxu0
  %v2979 = vadd.f32 0.0, %v2978
  %v2980 = vpop.f32.mrb[0].mxu0
  %2981 = vmatprep.mubr.bf16.mxu0 0
  %2982 = vmatmul.mubr.bf16.gmra.mrb[0].mxu0 %v2845
  %v2983 = vpop.f32.mrb[0].mxu0
  %v2984 = vadd.f32 0.0, %v2983
  %v2985 = vpop.f32.mrb[0].mxu0
  %v2986 = vpop.f32.mrb[0].mxu0
  %v2987 = vadd.f32 0.0, %v2986
  %v2988 = vpop.f32.mrb[0].mxu0
  %2989 = vdwg.mxu0
  %v2990 = vpack.c.bf16 %v2963, %v2960
  %v2991 = vpack.c.bf16 %v2971, %v2968
  %v2992 = vpack.c.bf16 %v2979, %v2976
  %v2993 = vpack.c.bf16 %v2987, %v2984
  %s2994 = scalar_lea.vmem %s7, 16
  %v2995 = vld [vmem:[%s2994] sm:$0xf]
  %v2996 = vld [vmem:[%s2994 + $0x4] sm:$0xf]
  %v2999 = vunpack.c.l.b16 %v2995
  %v3000 = vunpack.c.l.b16 %v2996
  %v3001 = vpack.c.b16 %v3000, %v2999
  %3003 = vmatprep.subr.bf16.mxu0 0
  %3004 = vmatpush1.bf16.msra.mxu0 %v3001
  %3005 = vmatprep.subr.bf16.mxu0 0
  %3006 = vmatpush1.bf16.msra.mxu0 0
  %3007 = vmatprep.subr.bf16.mxu0 0
  %3008 = vmatpush1.bf16.msra.mxu0 0
  %3009 = vmatprep.subr.bf16.mxu0 0
  %3010 = vmatpush1.bf16.msra.mxu0 0
  %3011 = vmatprep.subr.bf16.mxu0 0
  %3012 = vmatpush1.bf16.msra.mxu0 0
  %3013 = vmatprep.subr.bf16.mxu0 0
  %3014 = vmatpush1.bf16.msra.mxu0 0
  %3015 = vmatprep.subr.bf16.mxu0 0
  %3016 = vmatpush1.bf16.msra.mxu0 0
  %3017 = vmatprep.subr.bf16.mxu0 0
  %3018 = vmatpush1.bf16.msra.mxu0 0
  %3019 = vmatprep.subr.bf16.mxu0 0
  %3020 = vmatpush1.bf16.msra.mxu0 0
  %3021 = vmatprep.subr.bf16.mxu0 0
  %3022 = vmatpush1.bf16.msra.mxu0 0
  %3023 = vmatprep.subr.bf16.mxu0 0
  %3024 = vmatpush1.bf16.msra.mxu0 0
  %3025 = vmatprep.subr.bf16.mxu0 0
  %3026 = vmatpush1.bf16.msra.mxu0 0
  %3027 = vmatprep.subr.bf16.mxu0 0
  %3028 = vmatpush1.bf16.msra.mxu0 0
  %3029 = vmatprep.subr.bf16.mxu0 0
  %3030 = vmatpush1.bf16.msra.mxu0 0
  %3031 = vmatprep.subr.bf16.mxu0 0
  %3032 = vmatpush1.bf16.msra.mxu0 0
  %3033 = vmatprep.subr.bf16.mxu0 0
  %3034 = vmatpush1.bf16.msra.mxu0 0
  %3035 = vmatprep.mubr.bf16.mxu0 0
  %3036 = vmatmul.mubr.bf16.gmra.mrb[0].mxu0 %v2836
  %v3037 = vpop.f32.mrb[0].mxu0
  %v3038 = vadd.f32 0.0, %v3037
  %v3039 = vpop.f32.mrb[0].mxu0
  %v3040 = vpop.f32.mrb[0].mxu0
  %v3041 = vadd.f32 0.0, %v3040
  %v3042 = vpop.f32.mrb[0].mxu0
  %3043 = vmatprep.mubr.bf16.mxu0 0
  %3044 = vmatmul.mubr.bf16.gmra.mrb[0].mxu0 %v2839
  %v3045 = vpop.f32.mrb[0].mxu0
  %v3046 = vadd.f32 0.0, %v3045
  %v3047 = vpop.f32.mrb[0].mxu0
  %v3048 = vpop.f32.mrb[0].mxu0
  %v3049 = vadd.f32 0.0, %v3048
  %v3050 = vpop.f32.mrb[0].mxu0
  %3051 = vmatprep.mubr.bf16.mxu0 0
  %3052 = vmatmul.mubr.bf16.gmra.mrb[0].mxu0 %v2842
  %v3053 = vpop.f32.mrb[0].mxu0
  %v3054 = vadd.f32 0.0, %v3053
  %v3055 = vpop.f32.mrb[0].mxu0
  %v3056 = vpop.f32.mrb[0].mxu0
  %v3057 = vadd.f32 0.0, %v3056
  %v3058 = vpop.f32.mrb[0].mxu0
  %3059 = vmatprep.mubr.bf16.mxu0 0
  %3060 = vmatmul.mubr.bf16.gmra.mrb[0].mxu0 %v2845
  %v3061 = vpop.f32.mrb[0].mxu0
  %v3062 = vadd.f32 0.0, %v3061
  %v3063 = vpop.f32.mrb[0].mxu0
  %v3064 = vpop.f32.mrb[0].mxu0
  %v3065 = vadd.f32 0.0, %v3064
  %v3066 = vpop.f32.mrb[0].mxu0
  %3067 = vdwg.mxu0
  %v3068 = vpack.c.bf16 %v3041, %v3038
  %v3069 = vpack.c.bf16 %v3049, %v3046
  %v3070 = vpack.c.bf16 %v3057, %v3054
  %v3071 = vpack.c.bf16 %v3065, %v3062
  %s3072 = scalar_lea.vmem %s8, 64
  %v3073 = vld [vmem:[%s3072] sm:$0xf]
  %v3074 = vld [vmem:[%s3072 + $0x4] sm:$0xf]
  %v3075 = vld [vmem:[%s3072 + $0x8] sm:$0xf]
  %v3076 = vld [vmem:[%s3072 + $0xc] sm:$0xf]
  %s3077 = scalar_lea.vmem %s8, 80
  %v3078 = vld [vmem:[%s3077] sm:$0xf]
  %v3079 = vld [vmem:[%s3077 + $0x4] sm:$0xf]
  %v3080 = vld [vmem:[%s3077 + $0x8] sm:$0xf]
  %v3081 = vld [vmem:[%s3077 + $0xc] sm:$0xf]
  %s3082 = scalar_lea.vmem %s8, 48
  %v3083 = vld [vmem:[%s3082] sm:$0xf]
  %v3084 = vld [vmem:[%s3082 + $0x4] sm:$0xf]
  %v3085 = vld [vmem:[%s3082 + $0x8] sm:$0xf]
  %v3086 = vld [vmem:[%s3082 + $0xc] sm:$0xf]
  %v3091 = vunpack.c.l.b16 %v3083
  %v3092 = vunpack.c.l.b16 %v3084
  %v3093 = vunpack.c.l.b16 %v3085
  %v3094 = vunpack.c.l.b16 %v3086
  %v3095 = vpack.c.b16 %v3092, %v3091
  %v3096 = vpack.c.b16 %v3094, %v3093
  %v3098 = vsel %vm226, %v3095, 0
  %v3101 = vsel %vm226, %v3096, 0
  %3103 = vmatprep.subr.bf16.mxu0 0
  %3104 = vmatpush1.bf16.msra.mxu0 %v2912
  %3105 = vmatprep.subr.bf16.mxu0 0
  %3106 = vmatpush1.bf16.msra.mxu0 %v2913
  %3107 = vmatprep.subr.bf16.mxu0 0
  %3108 = vmatpush1.bf16.msra.mxu0 %v2914
  %3109 = vmatprep.subr.bf16.mxu0 0
  %3110 = vmatpush1.bf16.msra.mxu0 %v2915
  %3111 = vmatprep.subr.bf16.mxu0 0
  %3112 = vmatpush1.bf16.msra.mxu0 0
  %3113 = vmatprep.subr.bf16.mxu0 0
  %3114 = vmatpush1.bf16.msra.mxu0 0
  %3115 = vmatprep.subr.bf16.mxu0 0
  %3116 = vmatpush1.bf16.msra.mxu0 0
  %3117 = vmatprep.subr.bf16.mxu0 0
  %3118 = vmatpush1.bf16.msra.mxu0 0
  %3119 = vmatprep.subr.bf16.mxu0 0
  %3120 = vmatpush1.bf16.msra.mxu0 0
  %3121 = vmatprep.subr.bf16.mxu0 0
  %3122 = vmatpush1.bf16.msra.mxu0 0
  %3123 = vmatprep.subr.bf16.mxu0 0
  %3124 = vmatpush1.bf16.msra.mxu0 0
  %3125 = vmatprep.subr.bf16.mxu0 0
  %3126 = vmatpush1.bf16.msra.mxu0 0
  %3127 = vmatprep.subr.bf16.mxu0 0
  %3128 = vmatpush1.bf16.msra.mxu0 0
  %3129 = vmatprep.subr.bf16.mxu0 0
  %3130 = vmatpush1.bf16.msra.mxu0 0
  %3131 = vmatprep.subr.bf16.mxu0 0
  %3132 = vmatpush1.bf16.msra.mxu0 0
  %3133 = vmatprep.subr.bf16.mxu0 0
  %3134 = vmatpush1.bf16.msra.mxu0 0
  %3135 = vmatprep.mubr.bf16.mxu0 0
  %3136 = vmatmul.mubr.bf16.gmra.mrb[0].mxu0 %v3098
  %v3137 = vpop.f32.mrb[0].mxu0
  %v3138 = vadd.f32 0.0, %v3137
  %v3139 = vpop.f32.mrb[0].mxu0
  %v3140 = vpop.f32.mrb[0].mxu0
  %v3141 = vadd.f32 0.0, %v3140
  %v3142 = vpop.f32.mrb[0].mxu0
  %3143 = vmatprep.mubr.bf16.mxu0 0
  %3144 = vmatmul.mubr.bf16.gmra.mrb[0].mxu0 %v3101
  %v3145 = vpop.f32.mrb[0].mxu0
  %v3146 = vadd.f32 0.0, %v3145
  %v3147 = vpop.f32.mrb[0].mxu0
  %v3148 = vpop.f32.mrb[0].mxu0
  %v3149 = vadd.f32 0.0, %v3148
  %v3150 = vpop.f32.mrb[0].mxu0
  %3151 = vdwg.mxu0
  %v3156 = vunpack.c.l.b16 %v3078
  %v3157 = vunpack.c.l.b16 %v3079
  %v3158 = vunpack.c.l.b16 %v3080
  %v3159 = vunpack.c.l.b16 %v3081
  %v3160 = vpack.c.b16 %v3157, %v3156
  %v3161 = vpack.c.b16 %v3159, %v3158
  %v3163 = vsel %vm226, %v3160, 0
  %v3166 = vsel %vm226, %v3161, 0
  %3168 = vmatprep.subr.bf16.mxu0 0
  %3169 = vmatpush1.bf16.msra.mxu0 %v2823
  %3170 = vmatprep.subr.bf16.mxu0 0
  %3171 = vmatpush1.bf16.msra.mxu0 %v2824
  %3172 = vmatprep.subr.bf16.mxu0 0
  %3173 = vmatpush1.bf16.msra.mxu0 %v2825
  %3174 = vmatprep.subr.bf16.mxu0 0
  %3175 = vmatpush1.bf16.msra.mxu0 %v2826
  %3176 = vmatprep.subr.bf16.mxu0 0
  %3177 = vmatpush1.bf16.msra.mxu0 0
  %3178 = vmatprep.subr.bf16.mxu0 0
  %3179 = vmatpush1.bf16.msra.mxu0 0
  %3180 = vmatprep.subr.bf16.mxu0 0
  %3181 = vmatpush1.bf16.msra.mxu0 0
  %3182 = vmatprep.subr.bf16.mxu0 0
  %3183 = vmatpush1.bf16.msra.mxu0 0
  %3184 = vmatprep.subr.bf16.mxu0 0
  %3185 = vmatpush1.bf16.msra.mxu0 0
  %3186 = vmatprep.subr.bf16.mxu0 0
  %3187 = vmatpush1.bf16.msra.mxu0 0
  %3188 = vmatprep.subr.bf16.mxu0 0
  %3189 = vmatpush1.bf16.msra.mxu0 0
  %3190 = vmatprep.subr.bf16.mxu0 0
  %3191 = vmatpush1.bf16.msra.mxu0 0
  %3192 = vmatprep.subr.bf16.mxu0 0
  %3193 = vmatpush1.bf16.msra.mxu0 0
  %3194 = vmatprep.subr.bf16.mxu0 0
  %3195 = vmatpush1.bf16.msra.mxu0 0
  %3196 = vmatprep.subr.bf16.mxu0 0
  %3197 = vmatpush1.bf16.msra.mxu0 0
  %3198 = vmatprep.subr.bf16.mxu0 0
  %3199 = vmatpush1.bf16.msra.mxu0 0
  %3200 = vmatprep.mubr.bf16.mxu0 0
  %3201 = vmatmul.mubr.bf16.gmra.mrb[0].mxu0 %v3163
  %v3202 = vpop.f32.mrb[0].mxu0
  %v3203 = vadd.f32 %v3138, %v3202
  %v3204 = vpop.f32.mrb[0].mxu0
  %v3205 = vpop.f32.mrb[0].mxu0
  %v3206 = vadd.f32 %v3141, %v3205
  %v3207 = vpop.f32.mrb[0].mxu0
  %3208 = vmatprep.mubr.bf16.mxu0 0
  %3209 = vmatmul.mubr.bf16.gmra.mrb[0].mxu0 %v3166
  %v3210 = vpop.f32.mrb[0].mxu0
  %v3211 = vadd.f32 %v3146, %v3210
  %v3212 = vpop.f32.mrb[0].mxu0
  %v3213 = vpop.f32.mrb[0].mxu0
  %v3214 = vadd.f32 %v3149, %v3213
  %v3215 = vpop.f32.mrb[0].mxu0
  %3216 = vdwg.mxu0
  %s3217 = scalar_lea.vmem %s8, 112
  %v3218 = vld [vmem:[%s3217] sm:$0xf]
  %v3219 = vld [vmem:[%s3217 + $0x4] sm:$0xf]
  %v3220 = vld [vmem:[%s3217 + $0x8] sm:$0xf]
  %v3221 = vld [vmem:[%s3217 + $0xc] sm:$0xf]
  %s3222 = scalar_lea.vmem %s8, 16
  %v3223 = vld [vmem:[%s3222] sm:$0xf]
  %v3224 = vld [vmem:[%s3222 + $0x4] sm:$0xf]
  %v3225 = vld [vmem:[%s3222 + $0x8] sm:$0xf]
  %v3226 = vld [vmem:[%s3222 + $0xc] sm:$0xf]
  %v3231 = vunpack.c.l.b16 %v3223
  %v3232 = vunpack.c.l.b16 %v3224
  %v3233 = vunpack.c.l.b16 %v3225
  %v3234 = vunpack.c.l.b16 %v3226
  %v3235 = vpack.c.b16 %v3232, %v3231
  %v3236 = vpack.c.b16 %v3234, %v3233
  %v3238 = vsel %vm226, %v3235, 0
  %v3241 = vsel %vm226, %v3236, 0
  %3243 = vmatprep.subr.bf16.mxu0 0
  %3244 = vmatpush1.bf16.msra.mxu0 %v2990
  %3245 = vmatprep.subr.bf16.mxu0 0
  %3246 = vmatpush1.bf16.msra.mxu0 %v2991
  %3247 = vmatprep.subr.bf16.mxu0 0
  %3248 = vmatpush1.bf16.msra.mxu0 %v2992
  %3249 = vmatprep.subr.bf16.mxu0 0
  %3250 = vmatpush1.bf16.msra.mxu0 %v2993
  %3251 = vmatprep.subr.bf16.mxu0 0
  %3252 = vmatpush1.bf16.msra.mxu0 0
  %3253 = vmatprep.subr.bf16.mxu0 0
  %3254 = vmatpush1.bf16.msra.mxu0 0
  %3255 = vmatprep.subr.bf16.mxu0 0
  %3256 = vmatpush1.bf16.msra.mxu0 0
  %3257 = vmatprep.subr.bf16.mxu0 0
  %3258 = vmatpush1.bf16.msra.mxu0 0
  %3259 = vmatprep.subr.bf16.mxu0 0
  %3260 = vmatpush1.bf16.msra.mxu0 0
  %3261 = vmatprep.subr.bf16.mxu0 0
  %3262 = vmatpush1.bf16.msra.mxu0 0
  %3263 = vmatprep.subr.bf16.mxu0 0
  %3264 = vmatpush1.bf16.msra.mxu0 0
  %3265 = vmatprep.subr.bf16.mxu0 0
  %3266 = vmatpush1.bf16.msra.mxu0 0
  %3267 = vmatprep.subr.bf16.mxu0 0
  %3268 = vmatpush1.bf16.msra.mxu0 0
  %3269 = vmatprep.subr.bf16.mxu0 0
  %3270 = vmatpush1.bf16.msra.mxu0 0
  %3271 = vmatprep.subr.bf16.mxu0 0
  %3272 = vmatpush1.bf16.msra.mxu0 0
  %3273 = vmatprep.subr.bf16.mxu0 0
  %3274 = vmatpush1.bf16.msra.mxu0 0
  %3275 = vmatprep.mubr.bf16.mxu0 0
  %3276 = vmatmul.mubr.bf16.gmra.mrb[0].mxu0 %v3238
  %v3277 = vpop.f32.mrb[0].mxu0
  %v3278 = vadd.f32 0.0, %v3277
  %v3279 = vpop.f32.mrb[0].mxu0
  %v3280 = vpop.f32.mrb[0].mxu0
  %v3281 = vadd.f32 0.0, %v3280
  %v3282 = vpop.f32.mrb[0].mxu0
  %3283 = vmatprep.mubr.bf16.mxu0 0
  %3284 = vmatmul.mubr.bf16.gmra.mrb[0].mxu0 %v3241
  %v3285 = vpop.f32.mrb[0].mxu0
  %v3286 = vadd.f32 0.0, %v3285
  %v3287 = vpop.f32.mrb[0].mxu0
  %v3288 = vpop.f32.mrb[0].mxu0
  %v3289 = vadd.f32 0.0, %v3288
  %v3290 = vpop.f32.mrb[0].mxu0
  %3291 = vdwg.mxu0
  %v3296 = vunpack.c.l.b16 %v3218
  %v3297 = vunpack.c.l.b16 %v3219
  %v3298 = vunpack.c.l.b16 %v3220
  %v3299 = vunpack.c.l.b16 %v3221
  %v3300 = vpack.c.b16 %v3297, %v3296
  %v3301 = vpack.c.b16 %v3299, %v3298
  %v3303 = vsel %vm226, %v3300, 0
  %v3306 = vsel %vm226, %v3301, 0
  %3308 = vmatprep.subr.bf16.mxu0 0
  %3309 = vmatpush1.bf16.msra.mxu0 %v2823
  %3310 = vmatprep.subr.bf16.mxu0 0
  %3311 = vmatpush1.bf16.msra.mxu0 %v2824
  %3312 = vmatprep.subr.bf16.mxu0 0
  %3313 = vmatpush1.bf16.msra.mxu0 %v2825
  %3314 = vmatprep.subr.bf16.mxu0 0
  %3315 = vmatpush1.bf16.msra.mxu0 %v2826
  %3316 = vmatprep.subr.bf16.mxu0 0
  %3317 = vmatpush1.bf16.msra.mxu0 0
  %3318 = vmatprep.subr.bf16.mxu0 0
  %3319 = vmatpush1.bf16.msra.mxu0 0
  %3320 = vmatprep.subr.bf16.mxu0 0
  %3321 = vmatpush1.bf16.msra.mxu0 0
  %3322 = vmatprep.subr.bf16.mxu0 0
  %3323 = vmatpush1.bf16.msra.mxu0 0
  %3324 = vmatprep.subr.bf16.mxu0 0
  %3325 = vmatpush1.bf16.msra.mxu0 0
  %3326 = vmatprep.subr.bf16.mxu0 0
  %3327 = vmatpush1.bf16.msra.mxu0 0
  %3328 = vmatprep.subr.bf16.mxu0 0
  %3329 = vmatpush1.bf16.msra.mxu0 0
  %3330 = vmatprep.subr.bf16.mxu0 0
  %3331 = vmatpush1.bf16.msra.mxu0 0
  %3332 = vmatprep.subr.bf16.mxu0 0
  %3333 = vmatpush1.bf16.msra.mxu0 0
  %3334 = vmatprep.subr.bf16.mxu0 0
  %3335 = vmatpush1.bf16.msra.mxu0 0
  %3336 = vmatprep.subr.bf16.mxu0 0
  %3337 = vmatpush1.bf16.msra.mxu0 0
  %3338 = vmatprep.subr.bf16.mxu0 0
  %3339 = vmatpush1.bf16.msra.mxu0 0
  %3340 = vmatprep.mubr.bf16.mxu0 0
  %3341 = vmatmul.mubr.bf16.gmra.mrb[0].mxu0 %v3303
  %v3342 = vpop.f32.mrb[0].mxu0
  %v3343 = vadd.f32 %v3278, %v3342
  %v3344 = vpop.f32.mrb[0].mxu0
  %v3345 = vpop.f32.mrb[0].mxu0
  %v3346 = vadd.f32 %v3281, %v3345
  %v3347 = vpop.f32.mrb[0].mxu0
  %3348 = vmatprep.mubr.bf16.mxu0 0
  %3349 = vmatmul.mubr.bf16.gmra.mrb[0].mxu0 %v3306
  %v3350 = vpop.f32.mrb[0].mxu0
  %v3351 = vadd.f32 %v3286, %v3350
  %v3352 = vpop.f32.mrb[0].mxu0
  %v3353 = vpop.f32.mrb[0].mxu0
  %v3354 = vadd.f32 %v3289, %v3353
  %v3355 = vpop.f32.mrb[0].mxu0
  %3356 = vdwg.mxu0
  %s3357 = scalar_lea.vmem %s8, 128
  %v3358 = vld [vmem:[%s3357] sm:$0xf]
  %v3359 = vld [vmem:[%s3357 + $0x4] sm:$0xf]
  %v3360 = vld [vmem:[%s3357 + $0x8] sm:$0xf]
  %v3361 = vld [vmem:[%s3357 + $0xc] sm:$0xf]
  %s3362 = scalar_lea.vmem %s8, 96
  %v3363 = vld [vmem:[%s3362] sm:$0xf]
  %v3364 = vld [vmem:[%s3362 + $0x4] sm:$0xf]
  %v3365 = vld [vmem:[%s3362 + $0x8] sm:$0xf]
  %v3366 = vld [vmem:[%s3362 + $0xc] sm:$0xf]
  %v3371 = vunpack.c.l.b16 %v3363
  %v3372 = vunpack.c.l.b16 %v3364
  %v3373 = vunpack.c.l.b16 %v3365
  %v3374 = vunpack.c.l.b16 %v3366
  %v3375 = vpack.c.b16 %v3372, %v3371
  %v3376 = vpack.c.b16 %v3374, %v3373
  %v3378 = vsel %vm226, %v3375, 0
  %v3381 = vsel %vm226, %v3376, 0
  %3383 = vmatprep.subr.bf16.mxu0 0
  %3384 = vmatpush1.bf16.msra.mxu0 %v2912
  %3385 = vmatprep.subr.bf16.mxu0 0
  %3386 = vmatpush1.bf16.msra.mxu0 %v2913
  %3387 = vmatprep.subr.bf16.mxu0 0
  %3388 = vmatpush1.bf16.msra.mxu0 %v2914
  %3389 = vmatprep.subr.bf16.mxu0 0
  %3390 = vmatpush1.bf16.msra.mxu0 %v2915
  %3391 = vmatprep.subr.bf16.mxu0 0
  %3392 = vmatpush1.bf16.msra.mxu0 0
  %3393 = vmatprep.subr.bf16.mxu0 0
  %3394 = vmatpush1.bf16.msra.mxu0 0
  %3395 = vmatprep.subr.bf16.mxu0 0
  %3396 = vmatpush1.bf16.msra.mxu0 0
  %3397 = vmatprep.subr.bf16.mxu0 0
  %3398 = vmatpush1.bf16.msra.mxu0 0
  %3399 = vmatprep.subr.bf16.mxu0 0
  %3400 = vmatpush1.bf16.msra.mxu0 0
  %3401 = vmatprep.subr.bf16.mxu0 0
  %3402 = vmatpush1.bf16.msra.mxu0 0
  %3403 = vmatprep.subr.bf16.mxu0 0
  %3404 = vmatpush1.bf16.msra.mxu0 0
  %3405 = vmatprep.subr.bf16.mxu0 0
  %3406 = vmatpush1.bf16.msra.mxu0 0
  %3407 = vmatprep.subr.bf16.mxu0 0
  %3408 = vmatpush1.bf16.msra.mxu0 0
  %3409 = vmatprep.subr.bf16.mxu0 0
  %3410 = vmatpush1.bf16.msra.mxu0 0
  %3411 = vmatprep.subr.bf16.mxu0 0
  %3412 = vmatpush1.bf16.msra.mxu0 0
  %3413 = vmatprep.subr.bf16.mxu0 0
  %3414 = vmatpush1.bf16.msra.mxu0 0
  %3415 = vmatprep.mubr.bf16.mxu0 0
  %3416 = vmatmul.mubr.bf16.gmra.mrb[0].mxu0 %v3378
  %v3417 = vpop.f32.mrb[0].mxu0
  %v3418 = vadd.f32 0.0, %v3417
  %v3419 = vpop.f32.mrb[0].mxu0
  %v3420 = vpop.f32.mrb[0].mxu0
  %v3421 = vadd.f32 0.0, %v3420
  %v3422 = vpop.f32.mrb[0].mxu0
  %3423 = vmatprep.mubr.bf16.mxu0 0
  %3424 = vmatmul.mubr.bf16.gmra.mrb[0].mxu0 %v3381
  %v3425 = vpop.f32.mrb[0].mxu0
  %v3426 = vadd.f32 0.0, %v3425
  %v3427 = vpop.f32.mrb[0].mxu0
  %v3428 = vpop.f32.mrb[0].mxu0
  %v3429 = vadd.f32 0.0, %v3428
  %v3430 = vpop.f32.mrb[0].mxu0
  %3431 = vdwg.mxu0
  %v3436 = vunpack.c.l.b16 %v3358
  %v3437 = vunpack.c.l.b16 %v3359
  %v3438 = vunpack.c.l.b16 %v3360
  %v3439 = vunpack.c.l.b16 %v3361
  %v3440 = vpack.c.b16 %v3437, %v3436
  %v3441 = vpack.c.b16 %v3439, %v3438
  %v3443 = vsel %vm226, %v3440, 0
  %v3446 = vsel %vm226, %v3441, 0
  %3448 = vmatprep.subr.bf16.mxu0 0
  %3449 = vmatpush1.bf16.msra.mxu0 %v2823
  %3450 = vmatprep.subr.bf16.mxu0 0
  %3451 = vmatpush1.bf16.msra.mxu0 %v2824
  %3452 = vmatprep.subr.bf16.mxu0 0
  %3453 = vmatpush1.bf16.msra.mxu0 %v2825
  %3454 = vmatprep.subr.bf16.mxu0 0
  %3455 = vmatpush1.bf16.msra.mxu0 %v2826
  %3456 = vmatprep.subr.bf16.mxu0 0
  %3457 = vmatpush1.bf16.msra.mxu0 0
  %3458 = vmatprep.subr.bf16.mxu0 0
  %3459 = vmatpush1.bf16.msra.mxu0 0
  %3460 = vmatprep.subr.bf16.mxu0 0
  %3461 = vmatpush1.bf16.msra.mxu0 0
  %3462 = vmatprep.subr.bf16.mxu0 0
  %3463 = vmatpush1.bf16.msra.mxu0 0
  %3464 = vmatprep.subr.bf16.mxu0 0
  %3465 = vmatpush1.bf16.msra.mxu0 0
  %3466 = vmatprep.subr.bf16.mxu0 0
  %3467 = vmatpush1.bf16.msra.mxu0 0
  %3468 = vmatprep.subr.bf16.mxu0 0
  %3469 = vmatpush1.bf16.msra.mxu0 0
  %3470 = vmatprep.subr.bf16.mxu0 0
  %3471 = vmatpush1.bf16.msra.mxu0 0
  %3472 = vmatprep.subr.bf16.mxu0 0
  %3473 = vmatpush1.bf16.msra.mxu0 0
  %3474 = vmatprep.subr.bf16.mxu0 0
  %3475 = vmatpush1.bf16.msra.mxu0 0
  %3476 = vmatprep.subr.bf16.mxu0 0
  %3477 = vmatpush1.bf16.msra.mxu0 0
  %3478 = vmatprep.subr.bf16.mxu0 0
  %3479 = vmatpush1.bf16.msra.mxu0 0
  %3480 = vmatprep.mubr.bf16.mxu0 0
  %3481 = vmatmul.mubr.bf16.gmra.mrb[0].mxu0 %v3443
  %v3482 = vpop.f32.mrb[0].mxu0
  %v3483 = vadd.f32 %v3418, %v3482
  %v3484 = vpop.f32.mrb[0].mxu0
  %v3485 = vpop.f32.mrb[0].mxu0
  %v3486 = vadd.f32 %v3421, %v3485
  %v3487 = vpop.f32.mrb[0].mxu0
  %3488 = vmatprep.mubr.bf16.mxu0 0
  %3489 = vmatmul.mubr.bf16.gmra.mrb[0].mxu0 %v3446
  %v3490 = vpop.f32.mrb[0].mxu0
  %v3491 = vadd.f32 %v3426, %v3490
  %v3492 = vpop.f32.mrb[0].mxu0
  %v3493 = vpop.f32.mrb[0].mxu0
  %v3494 = vadd.f32 %v3429, %v3493
  %v3495 = vpop.f32.mrb[0].mxu0
  %3496 = vdwg.mxu0
  %s3497 = scalar_lea.vmem %s8, 32
  %v3498 = vld [vmem:[%s3497] sm:$0xf]
  %v3499 = vld [vmem:[%s3497 + $0x4] sm:$0xf]
  %v3500 = vld [vmem:[%s3497 + $0x8] sm:$0xf]
  %v3501 = vld [vmem:[%s3497 + $0xc] sm:$0xf]
  %v3506 = vunpack.c.l.b16 %v3498
  %v3507 = vunpack.c.l.b16 %v3499
  %v3508 = vunpack.c.l.b16 %v3500
  %v3509 = vunpack.c.l.b16 %v3501
  %v3510 = vpack.c.b16 %v3507, %v3506
  %v3511 = vpack.c.b16 %v3509, %v3508
  %v3513 = vsel %vm226, %v3510, 0
  %v3516 = vsel %vm226, %v3511, 0
  %3518 = vmatprep.subr.bf16.mxu0 0
  %3519 = vmatpush1.bf16.msra.mxu0 %v2990
  %3520 = vmatprep.subr.bf16.mxu0 0
  %3521 = vmatpush1.bf16.msra.mxu0 %v2991
  %3522 = vmatprep.subr.bf16.mxu0 0
  %3523 = vmatpush1.bf16.msra.mxu0 %v2992
  %3524 = vmatprep.subr.bf16.mxu0 0
  %3525 = vmatpush1.bf16.msra.mxu0 %v2993
  %3526 = vmatprep.subr.bf16.mxu0 0
  %3527 = vmatpush1.bf16.msra.mxu0 0
  %3528 = vmatprep.subr.bf16.mxu0 0
  %3529 = vmatpush1.bf16.msra.mxu0 0
  %3530 = vmatprep.subr.bf16.mxu0 0
  %3531 = vmatpush1.bf16.msra.mxu0 0
  %3532 = vmatprep.subr.bf16.mxu0 0
  %3533 = vmatpush1.bf16.msra.mxu0 0
  %3534 = vmatprep.subr.bf16.mxu0 0
  %3535 = vmatpush1.bf16.msra.mxu0 0
  %3536 = vmatprep.subr.bf16.mxu0 0
  %3537 = vmatpush1.bf16.msra.mxu0 0
  %3538 = vmatprep.subr.bf16.mxu0 0
  %3539 = vmatpush1.bf16.msra.mxu0 0
  %3540 = vmatprep.subr.bf16.mxu0 0
  %3541 = vmatpush1.bf16.msra.mxu0 0
  %3542 = vmatprep.subr.bf16.mxu0 0
  %3543 = vmatpush1.bf16.msra.mxu0 0
  %3544 = vmatprep.subr.bf16.mxu0 0
  %3545 = vmatpush1.bf16.msra.mxu0 0
  %3546 = vmatprep.subr.bf16.mxu0 0
  %3547 = vmatpush1.bf16.msra.mxu0 0
  %3548 = vmatprep.subr.bf16.mxu0 0
  %3549 = vmatpush1.bf16.msra.mxu0 0
  %3550 = vmatprep.mubr.bf16.mxu0 0
  %3551 = vmatmul.mubr.bf16.gmra.mrb[0].mxu0 %v3513
  %v3552 = vpop.f32.mrb[0].mxu0
  %v3553 = vadd.f32 0.0, %v3552
  %v3554 = vpop.f32.mrb[0].mxu0
  %v3555 = vpop.f32.mrb[0].mxu0
  %v3556 = vadd.f32 0.0, %v3555
  %v3557 = vpop.f32.mrb[0].mxu0
  %3558 = vmatprep.mubr.bf16.mxu0 0
  %3559 = vmatmul.mubr.bf16.gmra.mrb[0].mxu0 %v3516
  %v3560 = vpop.f32.mrb[0].mxu0
  %v3561 = vadd.f32 0.0, %v3560
  %v3562 = vpop.f32.mrb[0].mxu0
  %v3563 = vpop.f32.mrb[0].mxu0
  %v3564 = vadd.f32 0.0, %v3563
  %v3565 = vpop.f32.mrb[0].mxu0
  %3566 = vdwg.mxu0
  %v3567 = vadd.f32 %v3483, %v3553
  %v3568 = vadd.f32 %v3486, %v3556
  %v3569 = vadd.f32 %v3491, %v3561
  %v3570 = vadd.f32 %v3494, %v3564
  %v3571 = vld [vmem:[%s8] sm:$0xf]
  %v3572 = vld [vmem:[%s8 + $0x4] sm:$0xf]
  %v3573 = vld [vmem:[%s8 + $0x8] sm:$0xf]
  %v3574 = vld [vmem:[%s8 + $0xc] sm:$0xf]
  %v3579 = vunpack.c.l.b16 %v3571
  %v3580 = vunpack.c.l.b16 %v3572
  %v3581 = vunpack.c.l.b16 %v3573
  %v3582 = vunpack.c.l.b16 %v3574
  %v3583 = vpack.c.b16 %v3580, %v3579
  %v3584 = vpack.c.b16 %v3582, %v3581
  %v3586 = vsel %vm226, %v3583, 0
  %v3589 = vsel %vm226, %v3584, 0
  %3591 = vmatprep.subr.bf16.mxu0 0
  %3592 = vmatpush1.bf16.msra.mxu0 %v3068
  %3593 = vmatprep.subr.bf16.mxu0 0
  %3594 = vmatpush1.bf16.msra.mxu0 %v3069
  %3595 = vmatprep.subr.bf16.mxu0 0
  %3596 = vmatpush1.bf16.msra.mxu0 %v3070
  %3597 = vmatprep.subr.bf16.mxu0 0
  %3598 = vmatpush1.bf16.msra.mxu0 %v3071
  %3599 = vmatprep.subr.bf16.mxu0 0
  %3600 = vmatpush1.bf16.msra.mxu0 0
  %3601 = vmatprep.subr.bf16.mxu0 0
  %3602 = vmatpush1.bf16.msra.mxu0 0
  %3603 = vmatprep.subr.bf16.mxu0 0
  %3604 = vmatpush1.bf16.msra.mxu0 0
  %3605 = vmatprep.subr.bf16.mxu0 0
  %3606 = vmatpush1.bf16.msra.mxu0 0
  %3607 = vmatprep.subr.bf16.mxu0 0
  %3608 = vmatpush1.bf16.msra.mxu0 0
  %3609 = vmatprep.subr.bf16.mxu0 0
  %3610 = vmatpush1.bf16.msra.mxu0 0
  %3611 = vmatprep.subr.bf16.mxu0 0
  %3612 = vmatpush1.bf16.msra.mxu0 0
  %3613 = vmatprep.subr.bf16.mxu0 0
  %3614 = vmatpush1.bf16.msra.mxu0 0
  %3615 = vmatprep.subr.bf16.mxu0 0
  %3616 = vmatpush1.bf16.msra.mxu0 0
  %3617 = vmatprep.subr.bf16.mxu0 0
  %3618 = vmatpush1.bf16.msra.mxu0 0
  %3619 = vmatprep.subr.bf16.mxu0 0
  %3620 = vmatpush1.bf16.msra.mxu0 0
  %3621 = vmatprep.subr.bf16.mxu0 0
  %3622 = vmatpush1.bf16.msra.mxu0 0
  %3623 = vmatprep.mubr.bf16.mxu0 0
  %3624 = vmatmul.mubr.bf16.gmra.mrb[0].mxu0 %v3586
  %v3625 = vpop.f32.mrb[0].mxu0
  %v3626 = vadd.f32 0.0, %v3625
  %v3627 = vpop.f32.mrb[0].mxu0
  %v3628 = vpop.f32.mrb[0].mxu0
  %v3629 = vadd.f32 0.0, %v3628
  %v3630 = vpop.f32.mrb[0].mxu0
  %3631 = vmatprep.mubr.bf16.mxu0 0
  %3632 = vmatmul.mubr.bf16.gmra.mrb[0].mxu0 %v3589
  %v3633 = vpop.f32.mrb[0].mxu0
  %v3634 = vadd.f32 0.0, %v3633
  %v3635 = vpop.f32.mrb[0].mxu0
  %v3636 = vpop.f32.mrb[0].mxu0
  %v3637 = vadd.f32 0.0, %v3636
  %v3638 = vpop.f32.mrb[0].mxu0
  %3639 = vdwg.mxu0
  %v3640 = vadd.f32 %v3567, %v3626
  %v3641 = vadd.f32 %v3568, %v3629
  %v3642 = vadd.f32 %v3569, %v3634
  %v3643 = vadd.f32 %v3570, %v3637
  %v3644 = vld [vmem:[%s9] sm:$0xff]
  %v3645 = vld [vmem:[%s9 + $0x8] sm:$0xff]
  %v3646 = vld [vmem:[%s9 + $0x10] sm:$0xff]
  %v3647 = vld [vmem:[%s9 + $0x18] sm:$0xff]
  %3649 = vset.pattern.permute.xlu0 0
  %3650 = vperm.xlu0 %3649, %v3644
  %v3651 = vpop.permute.xlu0 %3650
  %3654 = vset.pattern.permute.xlu0 0
  %3655 = vperm.xlu0 %3654, %v3645
  %v3656 = vpop.permute.xlu0 %3655
  %3659 = vset.pattern.permute.xlu0 0
  %3660 = vperm.xlu0 %3659, %v3646
  %v3661 = vpop.permute.xlu0 %3660
  %3664 = vset.pattern.permute.xlu0 0
  %3665 = vperm.xlu0 %3664, %v3647
  %v3666 = vpop.permute.xlu0 %3665
  %v3672 = vunpack.c.l.b16 %v3073
  %v3673 = vunpack.c.l.b16 %v3074
  %v3674 = vunpack.c.l.b16 %v3075
  %v3675 = vunpack.c.l.b16 %v3076
  %v3676 = vpack.c.b16 %v3673, %v3672
  %v3677 = vpack.c.b16 %v3675, %v3674
  %v3679 = vsel %vm226, %v3676, 0
  %v3682 = vsel %vm226, %v3677, 0
  %3684 = vmatprep.subr.bf16.mxu0 0
  %3685 = vmatpush1.bf16.msra.mxu0 %v2823
  %3686 = vmatprep.subr.bf16.mxu0 0
  %3687 = vmatpush1.bf16.msra.mxu0 %v2824
  %3688 = vmatprep.subr.bf16.mxu0 0
  %3689 = vmatpush1.bf16.msra.mxu0 %v2825
  %3690 = vmatprep.subr.bf16.mxu0 0
  %3691 = vmatpush1.bf16.msra.mxu0 %v2826
  %3692 = vmatprep.subr.bf16.mxu0 0
  %3693 = vmatpush1.bf16.msra.mxu0 0
  %3694 = vmatprep.subr.bf16.mxu0 0
  %3695 = vmatpush1.bf16.msra.mxu0 0
  %3696 = vmatprep.subr.bf16.mxu0 0
  %3697 = vmatpush1.bf16.msra.mxu0 0
  %3698 = vmatprep.subr.bf16.mxu0 0
  %3699 = vmatpush1.bf16.msra.mxu0 0
  %3700 = vmatprep.subr.bf16.mxu0 0
  %3701 = vmatpush1.bf16.msra.mxu0 0
  %3702 = vmatprep.subr.bf16.mxu0 0
  %3703 = vmatpush1.bf16.msra.mxu0 0
  %3704 = vmatprep.subr.bf16.mxu0 0
  %3705 = vmatpush1.bf16.msra.mxu0 0
  %3706 = vmatprep.subr.bf16.mxu0 0
  %3707 = vmatpush1.bf16.msra.mxu0 0
  %3708 = vmatprep.subr.bf16.mxu0 0
  %3709 = vmatpush1.bf16.msra.mxu0 0
  %3710 = vmatprep.subr.bf16.mxu0 0
  %3711 = vmatpush1.bf16.msra.mxu0 0
  %3712 = vmatprep.subr.bf16.mxu0 0
  %3713 = vmatpush1.bf16.msra.mxu0 0
  %3714 = vmatprep.subr.bf16.mxu0 0
  %3715 = vmatpush1.bf16.msra.mxu0 0
  %3716 = vmatprep.mubr.bf16.mxu0 0
  %3717 = vmatmul.mubr.bf16.gmra.mrb[0].mxu0 %v3679
  %v3718 = vpop.f32.mrb[0].mxu0
  %v3719 = vadd.f32 %v3651, %v3718
  %v3720 = vpop.f32.mrb[0].mxu0
  %v3721 = vpop.f32.mrb[0].mxu0
  %v3722 = vadd.f32 %v3656, %v3721
  %v3723 = vpop.f32.mrb[0].mxu0
  %3724 = vmatprep.mubr.bf16.mxu0 0
  %3725 = vmatmul.mubr.bf16.gmra.mrb[0].mxu0 %v3682
  %v3726 = vpop.f32.mrb[0].mxu0
  %v3727 = vadd.f32 %v3661, %v3726
  %v3728 = vpop.f32.mrb[0].mxu0
  %v3729 = vpop.f32.mrb[0].mxu0
  %v3730 = vadd.f32 %v3666, %v3729
  %v3731 = vpop.f32.mrb[0].mxu0
  %3732 = vdwg.mxu0
  %v3733 = vmax.f32 %v3719, 0.0
  %v3734 = vmax.f32 %v3722, 0.0
  %v3735 = vmax.f32 %v3727, 0.0
  %v3736 = vmax.f32 %v3730, 0.0
  %v3737 = vpack.c.bf16 %v3734, %v3733
  %v3738 = vpack.c.bf16 %v3736, %v3735
  %v3739 = vadd.f32 %v3203, %v3651
  %v3740 = vadd.f32 %v3206, %v3656
  %v3741 = vadd.f32 %v3211, %v3661
  %v3742 = vadd.f32 %v3214, %v3666
  %v3743 = vmax.f32 %v3739, 0.0
  %v3744 = vmax.f32 %v3740, 0.0
  %v3745 = vmax.f32 %v3741, 0.0
  %v3746 = vmax.f32 %v3742, 0.0
  %v3747 = vpack.c.bf16 %v3744, %v3743
  %v3748 = vpack.c.bf16 %v3746, %v3745
  %v3749 = vadd.f32 %v3343, %v3651
  %v3750 = vadd.f32 %v3346, %v3656
  %v3751 = vadd.f32 %v3351, %v3661
  %v3752 = vadd.f32 %v3354, %v3666
  %v3753 = vmax.f32 %v3749, 0.0
  %v3754 = vmax.f32 %v3750, 0.0
  %v3755 = vmax.f32 %v3751, 0.0
  %v3756 = vmax.f32 %v3752, 0.0
  %v3757 = vpack.c.bf16 %v3754, %v3753
  %v3758 = vpack.c.bf16 %v3756, %v3755
  %v3759 = vadd.f32 %v3640, %v3651
  %v3760 = vadd.f32 %v3641, %v3656
  %v3761 = vadd.f32 %v3642, %v3661
  %v3762 = vadd.f32 %v3643, %v3666
  %v3763 = vmax.f32 %v3759, 0.0
  %v3764 = vmax.f32 %v3760, 0.0
  %v3765 = vmax.f32 %v3761, 0.0
  %v3766 = vmax.f32 %v3762, 0.0
  %v3767 = vpack.c.bf16 %v3764, %v3763
  %v3768 = vpack.c.bf16 %v3766, %v3765
  %v3769 = vld [vmem:[%s10] sm:$0xff]
  %v3770 = vld [vmem:[%s10 + $0x8] sm:$0xff]
  %s3771 = scalar_lea.vmem %s10, 16
  %v3772 = vld [vmem:[%s3771] sm:$0xff]
  %v3773 = vld [vmem:[%s3771 + $0x8] sm:$0xff]
  %v3776 = vunpack.c.l.b16 %v3772
  %v3777 = vunpack.c.h.b16 %v3772
  %v3778 = vunpack.c.l.b16 %v3773
  %v3779 = vunpack.c.h.b16 %v3773
  %v3780 = vpack.c.b16 %v3778, %v3776
  %v3781 = vpack.c.b16 %v3779, %v3777
  %v3785 = vsel %vm1793, %v3747, 0
  %v3788 = vsel %vm1793, %v3748, 0
  %3790 = vmatprep.subr.bf16.mxu0 %v3781
  %3791 = vmatpush1.bf16.msra.mxu0 %v3780
  %3792 = vmatprep.subr.bf16.mxu0 0
  %3793 = vmatpush1.bf16.msra.mxu0 0
  %3794 = vmatprep.subr.bf16.mxu0 0
  %3795 = vmatpush1.bf16.msra.mxu0 0
  %3796 = vmatprep.subr.bf16.mxu0 0
  %3797 = vmatpush1.bf16.msra.mxu0 0
  %3798 = vmatprep.subr.bf16.mxu0 0
  %3799 = vmatpush1.bf16.msra.mxu0 0
  %3800 = vmatprep.subr.bf16.mxu0 0
  %3801 = vmatpush1.bf16.msra.mxu0 0
  %3802 = vmatprep.subr.bf16.mxu0 0
  %3803 = vmatpush1.bf16.msra.mxu0 0
  %3804 = vmatprep.subr.bf16.mxu0 0
  %3805 = vmatpush1.bf16.msra.mxu0 0
  %3806 = vmatprep.subr.bf16.mxu0 0
  %3807 = vmatpush1.bf16.msra.mxu0 0
  %3808 = vmatprep.subr.bf16.mxu0 0
  %3809 = vmatpush1.bf16.msra.mxu0 0
  %3810 = vmatprep.subr.bf16.mxu0 0
  %3811 = vmatpush1.bf16.msra.mxu0 0
  %3812 = vmatprep.subr.bf16.mxu0 0
  %3813 = vmatpush1.bf16.msra.mxu0 0
  %3814 = vmatprep.subr.bf16.mxu0 0
  %3815 = vmatpush1.bf16.msra.mxu0 0
  %3816 = vmatprep.subr.bf16.mxu0 0
  %3817 = vmatpush1.bf16.msra.mxu0 0
  %3818 = vmatprep.subr.bf16.mxu0 0
  %3819 = vmatpush1.bf16.msra.mxu0 0
  %3820 = vmatprep.subr.bf16.mxu0 0
  %3821 = vmatpush1.bf16.msra.mxu0 0
  %3822 = vmatprep.mubr.bf16.mxu0 0
  %3823 = vmatmul.mubr.bf16.gmra.mrb[0].mxu0 %v3785
  %v3824 = vpop.f32.mrb[0].mxu0
  %v3825 = vadd.f32 0.0, %v3824
  %v3826 = vpop.f32.mrb[0].mxu0
  %v3827 = vadd.f32 0.0, %v3826
  %v3828 = vpop.f32.mrb[0].mxu0
  %v3829 = vadd.f32 0.0, %v3828
  %v3830 = vpop.f32.mrb[0].mxu0
  %v3831 = vadd.f32 0.0, %v3830
  %3832 = vmatprep.mubr.bf16.mxu0 0
  %3833 = vmatmul.mubr.bf16.gmra.mrb[0].mxu0 %v3788
  %v3834 = vpop.f32.mrb[0].mxu0
  %v3835 = vadd.f32 0.0, %v3834
  %v3836 = vpop.f32.mrb[0].mxu0
  %v3837 = vadd.f32 0.0, %v3836
  %v3838 = vpop.f32.mrb[0].mxu0
  %v3839 = vadd.f32 0.0, %v3838
  %v3840 = vpop.f32.mrb[0].mxu0
  %v3841 = vadd.f32 0.0, %v3840
  %3842 = vdwg.mxu0
  %v3845 = vunpack.c.l.b16 %v3769
  %v3846 = vunpack.c.h.b16 %v3769
  %v3847 = vunpack.c.l.b16 %v3770
  %v3848 = vunpack.c.h.b16 %v3770
  %v3849 = vpack.c.b16 %v3847, %v3845
  %v3850 = vpack.c.b16 %v3848, %v3846
  %v3854 = vsel %vm1793, %v3737, 0
  %v3857 = vsel %vm1793, %v3738, 0
  %3859 = vmatprep.subr.bf16.mxu0 %v3850
  %3860 = vmatpush1.bf16.msra.mxu0 %v3849
  %3861 = vmatprep.subr.bf16.mxu0 0
  %3862 = vmatpush1.bf16.msra.mxu0 0
  %3863 = vmatprep.subr.bf16.mxu0 0
  %3864 = vmatpush1.bf16.msra.mxu0 0
  %3865 = vmatprep.subr.bf16.mxu0 0
  %3866 = vmatpush1.bf16.msra.mxu0 0
  %3867 = vmatprep.subr.bf16.mxu0 0
  %3868 = vmatpush1.bf16.msra.mxu0 0
  %3869 = vmatprep.subr.bf16.mxu0 0
  %3870 = vmatpush1.bf16.msra.mxu0 0
  %3871 = vmatprep.subr.bf16.mxu0 0
  %3872 = vmatpush1.bf16.msra.mxu0 0
  %3873 = vmatprep.subr.bf16.mxu0 0
  %3874 = vmatpush1.bf16.msra.mxu0 0
  %3875 = vmatprep.subr.bf16.mxu0 0
  %3876 = vmatpush1.bf16.msra.mxu0 0
  %3877 = vmatprep.subr.bf16.mxu0 0
  %3878 = vmatpush1.bf16.msra.mxu0 0
  %3879 = vmatprep.subr.bf16.mxu0 0
  %3880 = vmatpush1.bf16.msra.mxu0 0
  %3881 = vmatprep.subr.bf16.mxu0 0
  %3882 = vmatpush1.bf16.msra.mxu0 0
  %3883 = vmatprep.subr.bf16.mxu0 0
  %3884 = vmatpush1.bf16.msra.mxu0 0
  %3885 = vmatprep.subr.bf16.mxu0 0
  %3886 = vmatpush1.bf16.msra.mxu0 0
  %3887 = vmatprep.subr.bf16.mxu0 0
  %3888 = vmatpush1.bf16.msra.mxu0 0
  %3889 = vmatprep.subr.bf16.mxu0 0
  %3890 = vmatpush1.bf16.msra.mxu0 0
  %3891 = vmatprep.mubr.bf16.mxu0 0
  %3892 = vmatmul.mubr.bf16.gmra.mrb[0].mxu0 %v3854
  %v3893 = vpop.f32.mrb[0].mxu0
  %v3894 = vadd.f32 %v3825, %v3893
  %v3895 = vpop.f32.mrb[0].mxu0
  %v3896 = vadd.f32 %v3827, %v3895
  %v3897 = vpop.f32.mrb[0].mxu0
  %v3898 = vadd.f32 %v3829, %v3897
  %v3899 = vpop.f32.mrb[0].mxu0
  %v3900 = vadd.f32 %v3831, %v3899
  %3901 = vmatprep.mubr.bf16.mxu0 0
  %3902 = vmatmul.mubr.bf16.gmra.mrb[0].mxu0 %v3857
  %v3903 = vpop.f32.mrb[0].mxu0
  %v3904 = vadd.f32 %v3835, %v3903
  %v3905 = vpop.f32.mrb[0].mxu0
  %v3906 = vadd.f32 %v3837, %v3905
  %v3907 = vpop.f32.mrb[0].mxu0
  %v3908 = vadd.f32 %v3839, %v3907
  %v3909 = vpop.f32.mrb[0].mxu0
  %v3910 = vadd.f32 %v3841, %v3909
  %3911 = vdwg.mxu0
  %s3912 = scalar_lea.vmem %s10, 32
  %v3913 = vld [vmem:[%s3912] sm:$0xff]
  %v3914 = vld [vmem:[%s3912 + $0x8] sm:$0xff]
  %v3917 = vunpack.c.l.b16 %v3913
  %v3918 = vunpack.c.h.b16 %v3913
  %v3919 = vunpack.c.l.b16 %v3914
  %v3920 = vunpack.c.h.b16 %v3914
  %v3921 = vpack.c.b16 %v3919, %v3917
  %v3922 = vpack.c.b16 %v3920, %v3918
  %v3926 = vsel %vm1793, %v3757, 0
  %v3929 = vsel %vm1793, %v3758, 0
  %3931 = vmatprep.subr.bf16.mxu0 %v3922
  %3932 = vmatpush1.bf16.msra.mxu0 %v3921
  %3933 = vmatprep.subr.bf16.mxu0 0
  %3934 = vmatpush1.bf16.msra.mxu0 0
  %3935 = vmatprep.subr.bf16.mxu0 0
  %3936 = vmatpush1.bf16.msra.mxu0 0
  %3937 = vmatprep.subr.bf16.mxu0 0
  %3938 = vmatpush1.bf16.msra.mxu0 0
  %3939 = vmatprep.subr.bf16.mxu0 0
  %3940 = vmatpush1.bf16.msra.mxu0 0
  %3941 = vmatprep.subr.bf16.mxu0 0
  %3942 = vmatpush1.bf16.msra.mxu0 0
  %3943 = vmatprep.subr.bf16.mxu0 0
  %3944 = vmatpush1.bf16.msra.mxu0 0
  %3945 = vmatprep.subr.bf16.mxu0 0
  %3946 = vmatpush1.bf16.msra.mxu0 0
  %3947 = vmatprep.subr.bf16.mxu0 0
  %3948 = vmatpush1.bf16.msra.mxu0 0
  %3949 = vmatprep.subr.bf16.mxu0 0
  %3950 = vmatpush1.bf16.msra.mxu0 0
  %3951 = vmatprep.subr.bf16.mxu0 0
  %3952 = vmatpush1.bf16.msra.mxu0 0
  %3953 = vmatprep.subr.bf16.mxu0 0
  %3954 = vmatpush1.bf16.msra.mxu0 0
  %3955 = vmatprep.subr.bf16.mxu0 0
  %3956 = vmatpush1.bf16.msra.mxu0 0
  %3957 = vmatprep.subr.bf16.mxu0 0
  %3958 = vmatpush1.bf16.msra.mxu0 0
  %3959 = vmatprep.subr.bf16.mxu0 0
  %3960 = vmatpush1.bf16.msra.mxu0 0
  %3961 = vmatprep.subr.bf16.mxu0 0
  %3962 = vmatpush1.bf16.msra.mxu0 0
  %3963 = vmatprep.mubr.bf16.mxu0 0
  %3964 = vmatmul.mubr.bf16.gmra.mrb[0].mxu0 %v3926
  %v3965 = vpop.f32.mrb[0].mxu0
  %v3966 = vadd.f32 0.0, %v3965
  %v3967 = vpop.f32.mrb[0].mxu0
  %v3968 = vadd.f32 0.0, %v3967
  %v3969 = vpop.f32.mrb[0].mxu0
  %v3970 = vadd.f32 0.0, %v3969
  %v3971 = vpop.f32.mrb[0].mxu0
  %v3972 = vadd.f32 0.0, %v3971
  %3973 = vmatprep.mubr.bf16.mxu0 0
  %3974 = vmatmul.mubr.bf16.gmra.mrb[0].mxu0 %v3929
  %v3975 = vpop.f32.mrb[0].mxu0
  %v3976 = vadd.f32 0.0, %v3975
  %v3977 = vpop.f32.mrb[0].mxu0
  %v3978 = vadd.f32 0.0, %v3977
  %v3979 = vpop.f32.mrb[0].mxu0
  %v3980 = vadd.f32 0.0, %v3979
  %v3981 = vpop.f32.mrb[0].mxu0
  %v3982 = vadd.f32 0.0, %v3981
  %3983 = vdwg.mxu0
  %v3984 = vadd.f32 %v3894, %v3966
  %v3985 = vadd.f32 %v3896, %v3968
  %v3986 = vadd.f32 %v3898, %v3970
  %v3987 = vadd.f32 %v3900, %v3972
  %v3988 = vadd.f32 %v3904, %v3976
  %v3989 = vadd.f32 %v3906, %v3978
  %v3990 = vadd.f32 %v3908, %v3980
  %v3991 = vadd.f32 %v3910, %v3982
  %s3992 = scalar_lea.vmem %s10, 48
  %v3993 = vld [vmem:[%s3992] sm:$0xff]
  %v3994 = vld [vmem:[%s3992 + $0x8] sm:$0xff]
  %v3997 = vunpack.c.l.b16 %v3993
  %v3998 = vunpack.c.h.b16 %v3993
  %v3999 = vunpack.c.l.b16 %v3994
  %v4000 = vunpack.c.h.b16 %v3994
  %v4001 = vpack.c.b16 %v3999, %v3997
  %v4002 = vpack.c.b16 %v4000, %v3998
  %v4006 = vsel %vm1793, %v3767, 0
  %v4009 = vsel %vm1793, %v3768, 0
  %4011 = vmatprep.subr.bf16.mxu0 %v4002
  %4012 = vmatpush1.bf16.msra.mxu0 %v4001
  %4013 = vmatprep.subr.bf16.mxu0 0
  %4014 = vmatpush1.bf16.msra.mxu0 0
  %4015 = vmatprep.subr.bf16.mxu0 0
  %4016 = vmatpush1.bf16.msra.mxu0 0
  %4017 = vmatprep.subr.bf16.mxu0 0
  %4018 = vmatpush1.bf16.msra.mxu0 0
  %4019 = vmatprep.subr.bf16.mxu0 0
  %4020 = vmatpush1.bf16.msra.mxu0 0
  %4021 = vmatprep.subr.bf16.mxu0 0
  %4022 = vmatpush1.bf16.msra.mxu0 0
  %4023 = vmatprep.subr.bf16.mxu0 0
  %4024 = vmatpush1.bf16.msra.mxu0 0
  %4025 = vmatprep.subr.bf16.mxu0 0
  %4026 = vmatpush1.bf16.msra.mxu0 0
  %4027 = vmatprep.subr.bf16.mxu0 0
  %4028 = vmatpush1.bf16.msra.mxu0 0
  %4029 = vmatprep.subr.bf16.mxu0 0
  %4030 = vmatpush1.bf16.msra.mxu0 0
  %4031 = vmatprep.subr.bf16.mxu0 0
  %4032 = vmatpush1.bf16.msra.mxu0 0
  %4033 = vmatprep.subr.bf16.mxu0 0
  %4034 = vmatpush1.bf16.msra.mxu0 0
  %4035 = vmatprep.subr.bf16.mxu0 0
  %4036 = vmatpush1.bf16.msra.mxu0 0
  %4037 = vmatprep.subr.bf16.mxu0 0
  %4038 = vmatpush1.bf16.msra.mxu0 0
  %4039 = vmatprep.subr.bf16.mxu0 0
  %4040 = vmatpush1.bf16.msra.mxu0 0
  %4041 = vmatprep.subr.bf16.mxu0 0
  %4042 = vmatpush1.bf16.msra.mxu0 0
  %4043 = vmatprep.mubr.bf16.mxu0 0
  %4044 = vmatmul.mubr.bf16.gmra.mrb[0].mxu0 %v4006
  %v4045 = vpop.f32.mrb[0].mxu0
  %v4046 = vadd.f32 0.0, %v4045
  %v4047 = vpop.f32.mrb[0].mxu0
  %v4048 = vadd.f32 0.0, %v4047
  %v4049 = vpop.f32.mrb[0].mxu0
  %v4050 = vadd.f32 0.0, %v4049
  %v4051 = vpop.f32.mrb[0].mxu0
  %v4052 = vadd.f32 0.0, %v4051
  %4053 = vmatprep.mubr.bf16.mxu0 0
  %4054 = vmatmul.mubr.bf16.gmra.mrb[0].mxu0 %v4009
  %v4055 = vpop.f32.mrb[0].mxu0
  %v4056 = vadd.f32 0.0, %v4055
  %v4057 = vpop.f32.mrb[0].mxu0
  %v4058 = vadd.f32 0.0, %v4057
  %v4059 = vpop.f32.mrb[0].mxu0
  %v4060 = vadd.f32 0.0, %v4059
  %v4061 = vpop.f32.mrb[0].mxu0
  %v4062 = vadd.f32 0.0, %v4061
  %4063 = vdwg.mxu0
  %v4064 = vadd.f32 %v3984, %v4046
  %v4065 = vadd.f32 %v3985, %v4048
  %v4066 = vadd.f32 %v3986, %v4050
  %v4067 = vadd.f32 %v3987, %v4052
  %v4068 = vadd.f32 %v3988, %v4056
  %v4069 = vadd.f32 %v3989, %v4058
  %v4070 = vadd.f32 %v3990, %v4060
  %v4071 = vadd.f32 %v3991, %v4062
  %v4072 = vpack.c.bf16 %v4066, %v4064
  %v4073 = vpack.c.bf16 %v4067, %v4065
  %v4074 = vpack.c.bf16 %v4070, %v4068
  %v4075 = vpack.c.bf16 %v4071, %v4069
  %s4076 = scalar_lea.vmem %s11, 16
  %v4077 = vld [vmem:[%s4076] sm:$0xf]
  %v4079 = vsel %vm2664, %v4077, 0
  %4081 = vmatprep.subr.bf16.mxu0 0
  %4082 = vmatpush1.bf16.msra.mxu0 %v4072
  %4083 = vmatprep.subr.bf16.mxu0 0
  %4084 = vmatpush1.bf16.msra.mxu0 %v4074
  %4085 = vmatprep.subr.bf16.mxu0 0
  %4086 = vmatpush1.bf16.msra.mxu0 0
  %4087 = vmatprep.subr.bf16.mxu0 0
  %4088 = vmatpush1.bf16.msra.mxu0 0
  %4089 = vmatprep.subr.bf16.mxu0 0
  %4090 = vmatpush1.bf16.msra.mxu0 0
  %4091 = vmatprep.subr.bf16.mxu0 0
  %4092 = vmatpush1.bf16.msra.mxu0 0
  %4093 = vmatprep.subr.bf16.mxu0 0
  %4094 = vmatpush1.bf16.msra.mxu0 0
  %4095 = vmatprep.subr.bf16.mxu0 0
  %4096 = vmatpush1.bf16.msra.mxu0 0
  %4097 = vmatprep.subr.bf16.mxu0 0
  %4098 = vmatpush1.bf16.msra.mxu0 0
  %4099 = vmatprep.subr.bf16.mxu0 0
  %4100 = vmatpush1.bf16.msra.mxu0 0
  %4101 = vmatprep.subr.bf16.mxu0 0
  %4102 = vmatpush1.bf16.msra.mxu0 0
  %4103 = vmatprep.subr.bf16.mxu0 0
  %4104 = vmatpush1.bf16.msra.mxu0 0
  %4105 = vmatprep.subr.bf16.mxu0 0
  %4106 = vmatpush1.bf16.msra.mxu0 0
  %4107 = vmatprep.subr.bf16.mxu0 0
  %4108 = vmatpush1.bf16.msra.mxu0 0
  %4109 = vmatprep.subr.bf16.mxu0 0
  %4110 = vmatpush1.bf16.msra.mxu0 0
  %4111 = vmatprep.subr.bf16.mxu0 0
  %4112 = vmatpush1.bf16.msra.mxu0 0
  %4113 = vmatprep.mubr.bf16.mxu0 0
  %4114 = vmatmul.mubr.bf16.gmra.mrb[0].mxu0 %v4079
  %v4115 = vpop.f32.mrb[0].mxu0
  %v4116 = vadd.f32 0.0, %v4115
  %v4117 = vpop.f32.mrb[0].mxu0
  %v4118 = vpop.f32.mrb[0].mxu0
  %v4119 = vpop.f32.mrb[0].mxu0
  %4120 = vdwg.mxu0
  %s4121 = scalar_lea.vmem %s11, 20
  %v4122 = vld [vmem:[%s4121] sm:$0xf]
  %s4123 = scalar_lea.vmem %s11, 12
  %v4124 = vld [vmem:[%s4123] sm:$0xf]
  %4127 = vrot.lane.b32.xlu0 %v4072, 64
  %v4128 = vpop.permute.xlu0 %4127
  %4129 = vrot.lane.b32.xlu0 %v4074, 64
  %v4130 = vpop.permute.xlu0 %4129
  %v4134 = vsel %vm2664, %v4124, 0
  %4136 = vmatprep.subr.bf16.mxu0 0
  %4137 = vmatpush1.bf16.msra.mxu0 %v4128
  %4138 = vmatprep.subr.bf16.mxu0 0
  %4139 = vmatpush1.bf16.msra.mxu0 %v4130
  %4140 = vmatprep.subr.bf16.mxu0 0
  %4141 = vmatpush1.bf16.msra.mxu0 0
  %4142 = vmatprep.subr.bf16.mxu0 0
  %4143 = vmatpush1.bf16.msra.mxu0 0
  %4144 = vmatprep.subr.bf16.mxu0 0
  %4145 = vmatpush1.bf16.msra.mxu0 0
  %4146 = vmatprep.subr.bf16.mxu0 0
  %4147 = vmatpush1.bf16.msra.mxu0 0
  %4148 = vmatprep.subr.bf16.mxu0 0
  %4149 = vmatpush1.bf16.msra.mxu0 0
  %4150 = vmatprep.subr.bf16.mxu0 0
  %4151 = vmatpush1.bf16.msra.mxu0 0
  %4152 = vmatprep.subr.bf16.mxu0 0
  %4153 = vmatpush1.bf16.msra.mxu0 0
  %4154 = vmatprep.subr.bf16.mxu0 0
  %4155 = vmatpush1.bf16.msra.mxu0 0
  %4156 = vmatprep.subr.bf16.mxu0 0
  %4157 = vmatpush1.bf16.msra.mxu0 0
  %4158 = vmatprep.subr.bf16.mxu0 0
  %4159 = vmatpush1.bf16.msra.mxu0 0
  %4160 = vmatprep.subr.bf16.mxu0 0
  %4161 = vmatpush1.bf16.msra.mxu0 0
  %4162 = vmatprep.subr.bf16.mxu0 0
  %4163 = vmatpush1.bf16.msra.mxu0 0
  %4164 = vmatprep.subr.bf16.mxu0 0
  %4165 = vmatpush1.bf16.msra.mxu0 0
  %4166 = vmatprep.subr.bf16.mxu0 0
  %4167 = vmatpush1.bf16.msra.mxu0 0
  %4168 = vmatprep.mubr.bf16.mxu0 0
  %4169 = vmatmul.mubr.bf16.gmra.mrb[0].mxu0 %v4134
  %v4170 = vpop.f32.mrb[0].mxu0
  %v4171 = vadd.f32 0.0, %v4170
  %v4172 = vpop.f32.mrb[0].mxu0
  %v4173 = vpop.f32.mrb[0].mxu0
  %v4174 = vpop.f32.mrb[0].mxu0
  %4175 = vdwg.mxu0
  %v4177 = vsel %vm2664, %v4122, 0
  %4179 = vmatprep.subr.bf16.mxu0 0
  %4180 = vmatpush1.bf16.msra.mxu0 %v4072
  %4181 = vmatprep.subr.bf16.mxu0 0
  %4182 = vmatpush1.bf16.msra.mxu0 %v4074
  %4183 = vmatprep.subr.bf16.mxu0 0
  %4184 = vmatpush1.bf16.msra.mxu0 0
  %4185 = vmatprep.subr.bf16.mxu0 0
  %4186 = vmatpush1.bf16.msra.mxu0 0
  %4187 = vmatprep.subr.bf16.mxu0 0
  %4188 = vmatpush1.bf16.msra.mxu0 0
  %4189 = vmatprep.subr.bf16.mxu0 0
  %4190 = vmatpush1.bf16.msra.mxu0 0
  %4191 = vmatprep.subr.bf16.mxu0 0
  %4192 = vmatpush1.bf16.msra.mxu0 0
  %4193 = vmatprep.subr.bf16.mxu0 0
  %4194 = vmatpush1.bf16.msra.mxu0 0
  %4195 = vmatprep.subr.bf16.mxu0 0
  %4196 = vmatpush1.bf16.msra.mxu0 0
  %4197 = vmatprep.subr.bf16.mxu0 0
  %4198 = vmatpush1.bf16.msra.mxu0 0
  %4199 = vmatprep.subr.bf16.mxu0 0
  %4200 = vmatpush1.bf16.msra.mxu0 0
  %4201 = vmatprep.subr.bf16.mxu0 0
  %4202 = vmatpush1.bf16.msra.mxu0 0
  %4203 = vmatprep.subr.bf16.mxu0 0
  %4204 = vmatpush1.bf16.msra.mxu0 0
  %4205 = vmatprep.subr.bf16.mxu0 0
  %4206 = vmatpush1.bf16.msra.mxu0 0
  %4207 = vmatprep.subr.bf16.mxu0 0
  %4208 = vmatpush1.bf16.msra.mxu0 0
  %4209 = vmatprep.subr.bf16.mxu0 0
  %4210 = vmatpush1.bf16.msra.mxu0 0
  %4211 = vmatprep.mubr.bf16.mxu0 0
  %4212 = vmatmul.mubr.bf16.gmra.mrb[0].mxu0 %v4177
  %v4213 = vpop.f32.mrb[0].mxu0
  %v4214 = vadd.f32 %v4171, %v4213
  %v4215 = vpop.f32.mrb[0].mxu0
  %v4216 = vpop.f32.mrb[0].mxu0
  %v4217 = vpop.f32.mrb[0].mxu0
  %4218 = vdwg.mxu0
  %s4219 = scalar_lea.vmem %s11, 28
  %v4220 = vld [vmem:[%s4219] sm:$0xf]
  %s4221 = scalar_lea.vmem %s11, 4
  %v4222 = vld [vmem:[%s4221] sm:$0xf]
  %v4224 = vsel %vm2664, %v4222, 0
  %4226 = vmatprep.subr.bf16.mxu0 0
  %4227 = vmatpush1.bf16.msra.mxu0 %v4073
  %4228 = vmatprep.subr.bf16.mxu0 0
  %4229 = vmatpush1.bf16.msra.mxu0 %v4075
  %4230 = vmatprep.subr.bf16.mxu0 0
  %4231 = vmatpush1.bf16.msra.mxu0 0
  %4232 = vmatprep.subr.bf16.mxu0 0
  %4233 = vmatpush1.bf16.msra.mxu0 0
  %4234 = vmatprep.subr.bf16.mxu0 0
  %4235 = vmatpush1.bf16.msra.mxu0 0
  %4236 = vmatprep.subr.bf16.mxu0 0
  %4237 = vmatpush1.bf16.msra.mxu0 0
  %4238 = vmatprep.subr.bf16.mxu0 0
  %4239 = vmatpush1.bf16.msra.mxu0 0
  %4240 = vmatprep.subr.bf16.mxu0 0
  %4241 = vmatpush1.bf16.msra.mxu0 0
  %4242 = vmatprep.subr.bf16.mxu0 0
  %4243 = vmatpush1.bf16.msra.mxu0 0
  %4244 = vmatprep.subr.bf16.mxu0 0
  %4245 = vmatpush1.bf16.msra.mxu0 0
  %4246 = vmatprep.subr.bf16.mxu0 0
  %4247 = vmatpush1.bf16.msra.mxu0 0
  %4248 = vmatprep.subr.bf16.mxu0 0
  %4249 = vmatpush1.bf16.msra.mxu0 0
  %4250 = vmatprep.subr.bf16.mxu0 0
  %4251 = vmatpush1.bf16.msra.mxu0 0
  %4252 = vmatprep.subr.bf16.mxu0 0
  %4253 = vmatpush1.bf16.msra.mxu0 0
  %4254 = vmatprep.subr.bf16.mxu0 0
  %4255 = vmatpush1.bf16.msra.mxu0 0
  %4256 = vmatprep.subr.bf16.mxu0 0
  %4257 = vmatpush1.bf16.msra.mxu0 0
  %4258 = vmatprep.mubr.bf16.mxu0 0
  %4259 = vmatmul.mubr.bf16.gmra.mrb[0].mxu0 %v4224
  %v4260 = vpop.f32.mrb[0].mxu0
  %v4261 = vadd.f32 0.0, %v4260
  %v4262 = vpop.f32.mrb[0].mxu0
  %v4263 = vpop.f32.mrb[0].mxu0
  %v4264 = vpop.f32.mrb[0].mxu0
  %4265 = vdwg.mxu0
  %v4267 = vsel %vm2664, %v4220, 0
  %4269 = vmatprep.subr.bf16.mxu0 0
  %4270 = vmatpush1.bf16.msra.mxu0 %v4072
  %4271 = vmatprep.subr.bf16.mxu0 0
  %4272 = vmatpush1.bf16.msra.mxu0 %v4074
  %4273 = vmatprep.subr.bf16.mxu0 0
  %4274 = vmatpush1.bf16.msra.mxu0 0
  %4275 = vmatprep.subr.bf16.mxu0 0
  %4276 = vmatpush1.bf16.msra.mxu0 0
  %4277 = vmatprep.subr.bf16.mxu0 0
  %4278 = vmatpush1.bf16.msra.mxu0 0
  %4279 = vmatprep.subr.bf16.mxu0 0
  %4280 = vmatpush1.bf16.msra.mxu0 0
  %4281 = vmatprep.subr.bf16.mxu0 0
  %4282 = vmatpush1.bf16.msra.mxu0 0
  %4283 = vmatprep.subr.bf16.mxu0 0
  %4284 = vmatpush1.bf16.msra.mxu0 0
  %4285 = vmatprep.subr.bf16.mxu0 0
  %4286 = vmatpush1.bf16.msra.mxu0 0
  %4287 = vmatprep.subr.bf16.mxu0 0
  %4288 = vmatpush1.bf16.msra.mxu0 0
  %4289 = vmatprep.subr.bf16.mxu0 0
  %4290 = vmatpush1.bf16.msra.mxu0 0
  %4291 = vmatprep.subr.bf16.mxu0 0
  %4292 = vmatpush1.bf16.msra.mxu0 0
  %4293 = vmatprep.subr.bf16.mxu0 0
  %4294 = vmatpush1.bf16.msra.mxu0 0
  %4295 = vmatprep.subr.bf16.mxu0 0
  %4296 = vmatpush1.bf16.msra.mxu0 0
  %4297 = vmatprep.subr.bf16.mxu0 0
  %4298 = vmatpush1.bf16.msra.mxu0 0
  %4299 = vmatprep.subr.bf16.mxu0 0
  %4300 = vmatpush1.bf16.msra.mxu0 0
  %4301 = vmatprep.mubr.bf16.mxu0 0
  %4302 = vmatmul.mubr.bf16.gmra.mrb[0].mxu0 %v4267
  %v4303 = vpop.f32.mrb[0].mxu0
  %v4304 = vadd.f32 %v4261, %v4303
  %v4305 = vpop.f32.mrb[0].mxu0
  %v4306 = vpop.f32.mrb[0].mxu0
  %v4307 = vpop.f32.mrb[0].mxu0
  %4308 = vdwg.mxu0
  %s4309 = scalar_lea.vmem %s11, 32
  %v4310 = vld [vmem:[%s4309] sm:$0xf]
  %s4311 = scalar_lea.vmem %s11, 24
  %v4312 = vld [vmem:[%s4311] sm:$0xf]
  %v4314 = vsel %vm2664, %v4312, 0
  %4316 = vmatprep.subr.bf16.mxu0 0
  %4317 = vmatpush1.bf16.msra.mxu0 %v4128
  %4318 = vmatprep.subr.bf16.mxu0 0
  %4319 = vmatpush1.bf16.msra.mxu0 %v4130
  %4320 = vmatprep.subr.bf16.mxu0 0
  %4321 = vmatpush1.bf16.msra.mxu0 0
  %4322 = vmatprep.subr.bf16.mxu0 0
  %4323 = vmatpush1.bf16.msra.mxu0 0
  %4324 = vmatprep.subr.bf16.mxu0 0
  %4325 = vmatpush1.bf16.msra.mxu0 0
  %4326 = vmatprep.subr.bf16.mxu0 0
  %4327 = vmatpush1.bf16.msra.mxu0 0
  %4328 = vmatprep.subr.bf16.mxu0 0
  %4329 = vmatpush1.bf16.msra.mxu0 0
  %4330 = vmatprep.subr.bf16.mxu0 0
  %4331 = vmatpush1.bf16.msra.mxu0 0
  %4332 = vmatprep.subr.bf16.mxu0 0
  %4333 = vmatpush1.bf16.msra.mxu0 0
  %4334 = vmatprep.subr.bf16.mxu0 0
  %4335 = vmatpush1.bf16.msra.mxu0 0
  %4336 = vmatprep.subr.bf16.mxu0 0
  %4337 = vmatpush1.bf16.msra.mxu0 0
  %4338 = vmatprep.subr.bf16.mxu0 0
  %4339 = vmatpush1.bf16.msra.mxu0 0
  %4340 = vmatprep.subr.bf16.mxu0 0
  %4341 = vmatpush1.bf16.msra.mxu0 0
  %4342 = vmatprep.subr.bf16.mxu0 0
  %4343 = vmatpush1.bf16.msra.mxu0 0
  %4344 = vmatprep.subr.bf16.mxu0 0
  %4345 = vmatpush1.bf16.msra.mxu0 0
  %4346 = vmatprep.subr.bf16.mxu0 0
  %4347 = vmatpush1.bf16.msra.mxu0 0
  %4348 = vmatprep.mubr.bf16.mxu0 0
  %4349 = vmatmul.mubr.bf16.gmra.mrb[0].mxu0 %v4314
  %v4350 = vpop.f32.mrb[0].mxu0
  %v4351 = vadd.f32 0.0, %v4350
  %v4352 = vpop.f32.mrb[0].mxu0
  %v4353 = vpop.f32.mrb[0].mxu0
  %v4354 = vpop.f32.mrb[0].mxu0
  %4355 = vdwg.mxu0
  %v4357 = vsel %vm2664, %v4310, 0
  %4359 = vmatprep.subr.bf16.mxu0 0
  %4360 = vmatpush1.bf16.msra.mxu0 %v4072
  %4361 = vmatprep.subr.bf16.mxu0 0
  %4362 = vmatpush1.bf16.msra.mxu0 %v4074
  %4363 = vmatprep.subr.bf16.mxu0 0
  %4364 = vmatpush1.bf16.msra.mxu0 0
  %4365 = vmatprep.subr.bf16.mxu0 0
  %4366 = vmatpush1.bf16.msra.mxu0 0
  %4367 = vmatprep.subr.bf16.mxu0 0
  %4368 = vmatpush1.bf16.msra.mxu0 0
  %4369 = vmatprep.subr.bf16.mxu0 0
  %4370 = vmatpush1.bf16.msra.mxu0 0
  %4371 = vmatprep.subr.bf16.mxu0 0
  %4372 = vmatpush1.bf16.msra.mxu0 0
  %4373 = vmatprep.subr.bf16.mxu0 0
  %4374 = vmatpush1.bf16.msra.mxu0 0
  %4375 = vmatprep.subr.bf16.mxu0 0
  %4376 = vmatpush1.bf16.msra.mxu0 0
  %4377 = vmatprep.subr.bf16.mxu0 0
  %4378 = vmatpush1.bf16.msra.mxu0 0
  %4379 = vmatprep.subr.bf16.mxu0 0
  %4380 = vmatpush1.bf16.msra.mxu0 0
  %4381 = vmatprep.subr.bf16.mxu0 0
  %4382 = vmatpush1.bf16.msra.mxu0 0
  %4383 = vmatprep.subr.bf16.mxu0 0
  %4384 = vmatpush1.bf16.msra.mxu0 0
  %4385 = vmatprep.subr.bf16.mxu0 0
  %4386 = vmatpush1.bf16.msra.mxu0 0
  %4387 = vmatprep.subr.bf16.mxu0 0
  %4388 = vmatpush1.bf16.msra.mxu0 0
  %4389 = vmatprep.subr.bf16.mxu0 0
  %4390 = vmatpush1.bf16.msra.mxu0 0
  %4391 = vmatprep.mubr.bf16.mxu0 0
  %4392 = vmatmul.mubr.bf16.gmra.mrb[0].mxu0 %v4357
  %v4393 = vpop.f32.mrb[0].mxu0
  %v4394 = vadd.f32 %v4351, %v4393
  %v4395 = vpop.f32.mrb[0].mxu0
  %v4396 = vpop.f32.mrb[0].mxu0
  %v4397 = vpop.f32.mrb[0].mxu0
  %4398 = vdwg.mxu0
  %s4399 = scalar_lea.vmem %s11, 8
  %v4400 = vld [vmem:[%s4399] sm:$0xf]
  %v4402 = vsel %vm2664, %v4400, 0
  %4404 = vmatprep.subr.bf16.mxu0 0
  %4405 = vmatpush1.bf16.msra.mxu0 %v4073
  %4406 = vmatprep.subr.bf16.mxu0 0
  %4407 = vmatpush1.bf16.msra.mxu0 %v4075
  %4408 = vmatprep.subr.bf16.mxu0 0
  %4409 = vmatpush1.bf16.msra.mxu0 0
  %4410 = vmatprep.subr.bf16.mxu0 0
  %4411 = vmatpush1.bf16.msra.mxu0 0
  %4412 = vmatprep.subr.bf16.mxu0 0
  %4413 = vmatpush1.bf16.msra.mxu0 0
  %4414 = vmatprep.subr.bf16.mxu0 0
  %4415 = vmatpush1.bf16.msra.mxu0 0
  %4416 = vmatprep.subr.bf16.mxu0 0
  %4417 = vmatpush1.bf16.msra.mxu0 0
  %4418 = vmatprep.subr.bf16.mxu0 0
  %4419 = vmatpush1.bf16.msra.mxu0 0
  %4420 = vmatprep.subr.bf16.mxu0 0
  %4421 = vmatpush1.bf16.msra.mxu0 0
  %4422 = vmatprep.subr.bf16.mxu0 0
  %4423 = vmatpush1.bf16.msra.mxu0 0
  %4424 = vmatprep.subr.bf16.mxu0 0
  %4425 = vmatpush1.bf16.msra.mxu0 0
  %4426 = vmatprep.subr.bf16.mxu0 0
  %4427 = vmatpush1.bf16.msra.mxu0 0
  %4428 = vmatprep.subr.bf16.mxu0 0
  %4429 = vmatpush1.bf16.msra.mxu0 0
  %4430 = vmatprep.subr.bf16.mxu0 0
  %4431 = vmatpush1.bf16.msra.mxu0 0
  %4432 = vmatprep.subr.bf16.mxu0 0
  %4433 = vmatpush1.bf16.msra.mxu0 0
  %4434 = vmatprep.subr.bf16.mxu0 0
  %4435 = vmatpush1.bf16.msra.mxu0 0
  %4436 = vmatprep.mubr.bf16.mxu0 0
  %4437 = vmatmul.mubr.bf16.gmra.mrb[0].mxu0 %v4402
  %v4438 = vpop.f32.mrb[0].mxu0
  %v4439 = vadd.f32 0.0, %v4438
  %v4440 = vpop.f32.mrb[0].mxu0
  %v4441 = vpop.f32.mrb[0].mxu0
  %v4442 = vpop.f32.mrb[0].mxu0
  %4443 = vdwg.mxu0
  %v4444 = vadd.f32 %v4394, %v4439
  %v4445 = vld [vmem:[%s11] sm:$0xf]
  %4448 = vrot.lane.b32.xlu0 %v4073, 64
  %v4449 = vpop.permute.xlu0 %4448
  %4450 = vrot.lane.b32.xlu0 %v4075, 64
  %v4451 = vpop.permute.xlu0 %4450
  %v4455 = vsel %vm2664, %v4445, 0
  %4457 = vmatprep.subr.bf16.mxu0 0
  %4458 = vmatpush1.bf16.msra.mxu0 %v4449
  %4459 = vmatprep.subr.bf16.mxu0 0
  %4460 = vmatpush1.bf16.msra.mxu0 %v4451
  %4461 = vmatprep.subr.bf16.mxu0 0
  %4462 = vmatpush1.bf16.msra.mxu0 0
  %4463 = vmatprep.subr.bf16.mxu0 0
  %4464 = vmatpush1.bf16.msra.mxu0 0
  %4465 = vmatprep.subr.bf16.mxu0 0
  %4466 = vmatpush1.bf16.msra.mxu0 0
  %4467 = vmatprep.subr.bf16.mxu0 0
  %4468 = vmatpush1.bf16.msra.mxu0 0
  %4469 = vmatprep.subr.bf16.mxu0 0
  %4470 = vmatpush1.bf16.msra.mxu0 0
  %4471 = vmatprep.subr.bf16.mxu0 0
  %4472 = vmatpush1.bf16.msra.mxu0 0
  %4473 = vmatprep.subr.bf16.mxu0 0
  %4474 = vmatpush1.bf16.msra.mxu0 0
  %4475 = vmatprep.subr.bf16.mxu0 0
  %4476 = vmatpush1.bf16.msra.mxu0 0
  %4477 = vmatprep.subr.bf16.mxu0 0
  %4478 = vmatpush1.bf16.msra.mxu0 0
  %4479 = vmatprep.subr.bf16.mxu0 0
  %4480 = vmatpush1.bf16.msra.mxu0 0
  %4481 = vmatprep.subr.bf16.mxu0 0
  %4482 = vmatpush1.bf16.msra.mxu0 0
  %4483 = vmatprep.subr.bf16.mxu0 0
  %4484 = vmatpush1.bf16.msra.mxu0 0
  %4485 = vmatprep.subr.bf16.mxu0 0
  %4486 = vmatpush1.bf16.msra.mxu0 0
  %4487 = vmatprep.subr.bf16.mxu0 0
  %4488 = vmatpush1.bf16.msra.mxu0 0
  %4489 = vmatprep.mubr.bf16.mxu0 0
  %4490 = vmatmul.mubr.bf16.gmra.mrb[0].mxu0 %v4455
  %v4491 = vpop.f32.mrb[0].mxu0
  %v4492 = vadd.f32 0.0, %v4491
  %v4493 = vpop.f32.mrb[0].mxu0
  %v4494 = vpop.f32.mrb[0].mxu0
  %v4495 = vpop.f32.mrb[0].mxu0
  %4496 = vdwg.mxu0
  %v4497 = vadd.f32 %v4444, %v4492
  %v4498 = vpack.c.bf16 %v4116, %v4116
  %v4499 = vld [vmem:[%s12] sm:$0xff]
  %v4500 = vld [vmem:[%s12 + $0x8] sm:$0xff]
  %v4501 = vld [vmem:[%s12 + $0x10] sm:$0xff]
  %v4502 = vld [vmem:[%s12 + $0x18] sm:$0xff]
  %v4503 = vld [vmem:[%s12 + $0x20] sm:$0xff]
  %v4504 = vld [vmem:[%s12 + $0x28] sm:$0xff]
  %v4505 = vld [vmem:[%s12 + $0x30] sm:$0xff]
  %v4506 = vld [vmem:[%s12 + $0x38] sm:$0xff]
  %v4507 = vpack.c.bf16 %v4214, %v4214
  %s4508 = scalar_lea.vmem %s12, 64
  %v4509 = vld [vmem:[%s4508] sm:$0xff]
  %v4510 = vld [vmem:[%s4508 + $0x8] sm:$0xff]
  %v4511 = vld [vmem:[%s4508 + $0x10] sm:$0xff]
  %v4512 = vld [vmem:[%s4508 + $0x18] sm:$0xff]
  %v4513 = vld [vmem:[%s4508 + $0x20] sm:$0xff]
  %v4514 = vld [vmem:[%s4508 + $0x28] sm:$0xff]
  %v4515 = vld [vmem:[%s4508 + $0x30] sm:$0xff]
  %v4516 = vld [vmem:[%s4508 + $0x38] sm:$0xff]
  %v4525 = vunpack.c.l.b16 %v4509
  %v4526 = vunpack.c.h.b16 %v4509
  %v4527 = vunpack.c.l.b16 %v4510
  %v4528 = vunpack.c.h.b16 %v4510
  %v4529 = vunpack.c.l.b16 %v4511
  %v4530 = vunpack.c.h.b16 %v4511
  %v4531 = vunpack.c.l.b16 %v4512
  %v4532 = vunpack.c.h.b16 %v4512
  %v4533 = vunpack.c.l.b16 %v4513
  %v4534 = vunpack.c.h.b16 %v4513
  %v4535 = vunpack.c.l.b16 %v4514
  %v4536 = vunpack.c.h.b16 %v4514
  %v4537 = vunpack.c.l.b16 %v4515
  %v4538 = vunpack.c.h.b16 %v4515
  %v4539 = vunpack.c.l.b16 %v4516
  %v4540 = vunpack.c.h.b16 %v4516
  %v4541 = vpack.c.b16 %v4527, %v4525
  %v4542 = vpack.c.b16 %v4528, %v4526
  %v4543 = vpack.c.b16 %v4531, %v4529
  %v4544 = vpack.c.b16 %v4532, %v4530
  %v4545 = vpack.c.b16 %v4535, %v4533
  %v4546 = vpack.c.b16 %v4536, %v4534
  %v4547 = vpack.c.b16 %v4539, %v4537
  %v4548 = vpack.c.b16 %v4540, %v4538
  %v4558 = vsel %vm226, %v4507, 0
  %4560 = vmatprep.subr.bf16.mxu0 %v4542
  %4561 = vmatpush1.bf16.msra.mxu0 %v4541
  %4562 = vmatprep.subr.bf16.mxu0 %v4544
  %4563 = vmatpush1.bf16.msra.mxu0 %v4543
  %4564 = vmatprep.subr.bf16.mxu0 %v4546
  %4565 = vmatpush1.bf16.msra.mxu0 %v4545
  %4566 = vmatprep.subr.bf16.mxu0 %v4548
  %4567 = vmatpush1.bf16.msra.mxu0 %v4547
  %4568 = vmatprep.subr.bf16.mxu0 0
  %4569 = vmatpush1.bf16.msra.mxu0 0
  %4570 = vmatprep.subr.bf16.mxu0 0
  %4571 = vmatpush1.bf16.msra.mxu0 0
  %4572 = vmatprep.subr.bf16.mxu0 0
  %4573 = vmatpush1.bf16.msra.mxu0 0
  %4574 = vmatprep.subr.bf16.mxu0 0
  %4575 = vmatpush1.bf16.msra.mxu0 0
  %4576 = vmatprep.subr.bf16.mxu0 0
  %4577 = vmatpush1.bf16.msra.mxu0 0
  %4578 = vmatprep.subr.bf16.mxu0 0
  %4579 = vmatpush1.bf16.msra.mxu0 0
  %4580 = vmatprep.subr.bf16.mxu0 0
  %4581 = vmatpush1.bf16.msra.mxu0 0
  %4582 = vmatprep.subr.bf16.mxu0 0
  %4583 = vmatpush1.bf16.msra.mxu0 0
  %4584 = vmatprep.subr.bf16.mxu0 0
  %4585 = vmatpush1.bf16.msra.mxu0 0
  %4586 = vmatprep.subr.bf16.mxu0 0
  %4587 = vmatpush1.bf16.msra.mxu0 0
  %4588 = vmatprep.subr.bf16.mxu0 0
  %4589 = vmatpush1.bf16.msra.mxu0 0
  %4590 = vmatprep.subr.bf16.mxu0 0
  %4591 = vmatpush1.bf16.msra.mxu0 0
  %4592 = vmatprep.mubr.bf16.mxu0 0
  %4593 = vmatmul.mubr.bf16.gmra.mrb[0].mxu0 %v4558
  %v4594 = vpop.f32.mrb[0].mxu0
  %v4595 = vadd.f32 0.0, %v4594
  %v4596 = vpop.f32.mrb[0].mxu0
  %v4597 = vadd.f32 0.0, %v4596
  %v4598 = vpop.f32.mrb[0].mxu0
  %v4599 = vpop.f32.mrb[0].mxu0
  %4600 = vdwg.mxu0
  %v4609 = vunpack.c.l.b16 %v4499
  %v4610 = vunpack.c.h.b16 %v4499
  %v4611 = vunpack.c.l.b16 %v4500
  %v4612 = vunpack.c.h.b16 %v4500
  %v4613 = vunpack.c.l.b16 %v4501
  %v4614 = vunpack.c.h.b16 %v4501
  %v4615 = vunpack.c.l.b16 %v4502
  %v4616 = vunpack.c.h.b16 %v4502
  %v4617 = vunpack.c.l.b16 %v4503
  %v4618 = vunpack.c.h.b16 %v4503
  %v4619 = vunpack.c.l.b16 %v4504
  %v4620 = vunpack.c.h.b16 %v4504
  %v4621 = vunpack.c.l.b16 %v4505
  %v4622 = vunpack.c.h.b16 %v4505
  %v4623 = vunpack.c.l.b16 %v4506
  %v4624 = vunpack.c.h.b16 %v4506
  %v4625 = vpack.c.b16 %v4611, %v4609
  %v4626 = vpack.c.b16 %v4612, %v4610
  %v4627 = vpack.c.b16 %v4615, %v4613
  %v4628 = vpack.c.b16 %v4616, %v4614
  %v4629 = vpack.c.b16 %v4619, %v4617
  %v4630 = vpack.c.b16 %v4620, %v4618
  %v4631 = vpack.c.b16 %v4623, %v4621
  %v4632 = vpack.c.b16 %v4624, %v4622
  %v4642 = vsel %vm226, %v4498, 0
  %4644 = vmatprep.subr.bf16.mxu0 %v4626
  %4645 = vmatpush1.bf16.msra.mxu0 %v4625
  %4646 = vmatprep.subr.bf16.mxu0 %v4628
  %4647 = vmatpush1.bf16.msra.mxu0 %v4627
  %4648 = vmatprep.subr.bf16.mxu0 %v4630
  %4649 = vmatpush1.bf16.msra.mxu0 %v4629
  %4650 = vmatprep.subr.bf16.mxu0 %v4632
  %4651 = vmatpush1.bf16.msra.mxu0 %v4631
  %4652 = vmatprep.subr.bf16.mxu0 0
  %4653 = vmatpush1.bf16.msra.mxu0 0
  %4654 = vmatprep.subr.bf16.mxu0 0
  %4655 = vmatpush1.bf16.msra.mxu0 0
  %4656 = vmatprep.subr.bf16.mxu0 0
  %4657 = vmatpush1.bf16.msra.mxu0 0
  %4658 = vmatprep.subr.bf16.mxu0 0
  %4659 = vmatpush1.bf16.msra.mxu0 0
  %4660 = vmatprep.subr.bf16.mxu0 0
  %4661 = vmatpush1.bf16.msra.mxu0 0
  %4662 = vmatprep.subr.bf16.mxu0 0
  %4663 = vmatpush1.bf16.msra.mxu0 0
  %4664 = vmatprep.subr.bf16.mxu0 0
  %4665 = vmatpush1.bf16.msra.mxu0 0
  %4666 = vmatprep.subr.bf16.mxu0 0
  %4667 = vmatpush1.bf16.msra.mxu0 0
  %4668 = vmatprep.subr.bf16.mxu0 0
  %4669 = vmatpush1.bf16.msra.mxu0 0
  %4670 = vmatprep.subr.bf16.mxu0 0
  %4671 = vmatpush1.bf16.msra.mxu0 0
  %4672 = vmatprep.subr.bf16.mxu0 0
  %4673 = vmatpush1.bf16.msra.mxu0 0
  %4674 = vmatprep.subr.bf16.mxu0 0
  %4675 = vmatpush1.bf16.msra.mxu0 0
  %4676 = vmatprep.mubr.bf16.mxu0 0
  %4677 = vmatmul.mubr.bf16.gmra.mrb[0].mxu0 %v4642
  %v4678 = vpop.f32.mrb[0].mxu0
  %v4679 = vadd.f32 %v4595, %v4678
  %v4680 = vpop.f32.mrb[0].mxu0
  %v4681 = vadd.f32 %v4597, %v4680
  %v4682 = vpop.f32.mrb[0].mxu0
  %v4683 = vpop.f32.mrb[0].mxu0
  %4684 = vdwg.mxu0
  %v4685 = vpack.c.bf16 %v4304, %v4304
  %s4686 = scalar_lea.vmem %s12, 128
  %v4687 = vld [vmem:[%s4686] sm:$0xff]
  %v4688 = vld [vmem:[%s4686 + $0x8] sm:$0xff]
  %v4689 = vld [vmem:[%s4686 + $0x10] sm:$0xff]
  %v4690 = vld [vmem:[%s4686 + $0x18] sm:$0xff]
  %v4691 = vld [vmem:[%s4686 + $0x20] sm:$0xff]
  %v4692 = vld [vmem:[%s4686 + $0x28] sm:$0xff]
  %v4693 = vld [vmem:[%s4686 + $0x30] sm:$0xff]
  %v4694 = vld [vmem:[%s4686 + $0x38] sm:$0xff]
  %v4703 = vunpack.c.l.b16 %v4687
  %v4704 = vunpack.c.h.b16 %v4687
  %v4705 = vunpack.c.l.b16 %v4688
  %v4706 = vunpack.c.h.b16 %v4688
  %v4707 = vunpack.c.l.b16 %v4689
  %v4708 = vunpack.c.h.b16 %v4689
  %v4709 = vunpack.c.l.b16 %v4690
  %v4710 = vunpack.c.h.b16 %v4690
  %v4711 = vunpack.c.l.b16 %v4691
  %v4712 = vunpack.c.h.b16 %v4691
  %v4713 = vunpack.c.l.b16 %v4692
  %v4714 = vunpack.c.h.b16 %v4692
  %v4715 = vunpack.c.l.b16 %v4693
  %v4716 = vunpack.c.h.b16 %v4693
  %v4717 = vunpack.c.l.b16 %v4694
  %v4718 = vunpack.c.h.b16 %v4694
  %v4719 = vpack.c.b16 %v4705, %v4703
  %v4720 = vpack.c.b16 %v4706, %v4704
  %v4721 = vpack.c.b16 %v4709, %v4707
  %v4722 = vpack.c.b16 %v4710, %v4708
  %v4723 = vpack.c.b16 %v4713, %v4711
  %v4724 = vpack.c.b16 %v4714, %v4712
  %v4725 = vpack.c.b16 %v4717, %v4715
  %v4726 = vpack.c.b16 %v4718, %v4716
  %v4736 = vsel %vm226, %v4685, 0
  %4738 = vmatprep.subr.bf16.mxu0 %v4720
  %4739 = vmatpush1.bf16.msra.mxu0 %v4719
  %4740 = vmatprep.subr.bf16.mxu0 %v4722
  %4741 = vmatpush1.bf16.msra.mxu0 %v4721
  %4742 = vmatprep.subr.bf16.mxu0 %v4724
  %4743 = vmatpush1.bf16.msra.mxu0 %v4723
  %4744 = vmatprep.subr.bf16.mxu0 %v4726
  %4745 = vmatpush1.bf16.msra.mxu0 %v4725
  %4746 = vmatprep.subr.bf16.mxu0 0
  %4747 = vmatpush1.bf16.msra.mxu0 0
  %4748 = vmatprep.subr.bf16.mxu0 0
  %4749 = vmatpush1.bf16.msra.mxu0 0
  %4750 = vmatprep.subr.bf16.mxu0 0
  %4751 = vmatpush1.bf16.msra.mxu0 0
  %4752 = vmatprep.subr.bf16.mxu0 0
  %4753 = vmatpush1.bf16.msra.mxu0 0
  %4754 = vmatprep.subr.bf16.mxu0 0
  %4755 = vmatpush1.bf16.msra.mxu0 0
  %4756 = vmatprep.subr.bf16.mxu0 0
  %4757 = vmatpush1.bf16.msra.mxu0 0
  %4758 = vmatprep.subr.bf16.mxu0 0
  %4759 = vmatpush1.bf16.msra.mxu0 0
  %4760 = vmatprep.subr.bf16.mxu0 0
  %4761 = vmatpush1.bf16.msra.mxu0 0
  %4762 = vmatprep.subr.bf16.mxu0 0
  %4763 = vmatpush1.bf16.msra.mxu0 0
  %4764 = vmatprep.subr.bf16.mxu0 0
  %4765 = vmatpush1.bf16.msra.mxu0 0
  %4766 = vmatprep.subr.bf16.mxu0 0
  %4767 = vmatpush1.bf16.msra.mxu0 0
  %4768 = vmatprep.subr.bf16.mxu0 0
  %4769 = vmatpush1.bf16.msra.mxu0 0
  %4770 = vmatprep.mubr.bf16.mxu0 0
  %4771 = vmatmul.mubr.bf16.gmra.mrb[0].mxu0 %v4736
  %v4772 = vpop.f32.mrb[0].mxu0
  %v4773 = vadd.f32 0.0, %v4772
  %v4774 = vpop.f32.mrb[0].mxu0
  %v4775 = vadd.f32 0.0, %v4774
  %v4776 = vpop.f32.mrb[0].mxu0
  %v4777 = vpop.f32.mrb[0].mxu0
  %4778 = vdwg.mxu0
  %v4779 = vadd.f32 %v4679, %v4773
  %v4780 = vadd.f32 %v4681, %v4775
  %v4781 = vpack.c.bf16 %v4497, %v4497
  %s4782 = scalar_lea.vmem %s12, 192
  %v4783 = vld [vmem:[%s4782] sm:$0xff]
  %v4784 = vld [vmem:[%s4782 + $0x8] sm:$0xff]
  %v4785 = vld [vmem:[%s4782 + $0x10] sm:$0xff]
  %v4786 = vld [vmem:[%s4782 + $0x18] sm:$0xff]
  %v4787 = vld [vmem:[%s4782 + $0x20] sm:$0xff]
  %v4788 = vld [vmem:[%s4782 + $0x28] sm:$0xff]
  %v4789 = vld [vmem:[%s4782 + $0x30] sm:$0xff]
  %v4790 = vld [vmem:[%s4782 + $0x38] sm:$0xff]
  %v4799 = vunpack.c.l.b16 %v4783
  %v4800 = vunpack.c.h.b16 %v4783
  %v4801 = vunpack.c.l.b16 %v4784
  %v4802 = vunpack.c.h.b16 %v4784
  %v4803 = vunpack.c.l.b16 %v4785
  %v4804 = vunpack.c.h.b16 %v4785
  %v4805 = vunpack.c.l.b16 %v4786
  %v4806 = vunpack.c.h.b16 %v4786
  %v4807 = vunpack.c.l.b16 %v4787
  %v4808 = vunpack.c.h.b16 %v4787
  %v4809 = vunpack.c.l.b16 %v4788
  %v4810 = vunpack.c.h.b16 %v4788
  %v4811 = vunpack.c.l.b16 %v4789
  %v4812 = vunpack.c.h.b16 %v4789
  %v4813 = vunpack.c.l.b16 %v4790
  %v4814 = vunpack.c.h.b16 %v4790
  %v4815 = vpack.c.b16 %v4801, %v4799
  %v4816 = vpack.c.b16 %v4802, %v4800
  %v4817 = vpack.c.b16 %v4805, %v4803
  %v4818 = vpack.c.b16 %v4806, %v4804
  %v4819 = vpack.c.b16 %v4809, %v4807
  %v4820 = vpack.c.b16 %v4810, %v4808
  %v4821 = vpack.c.b16 %v4813, %v4811
  %v4822 = vpack.c.b16 %v4814, %v4812
  %v4832 = vsel %vm226, %v4781, 0
  %4834 = vmatprep.subr.bf16.mxu0 %v4816
  %4835 = vmatpush1.bf16.msra.mxu0 %v4815
  %4836 = vmatprep.subr.bf16.mxu0 %v4818
  %4837 = vmatpush1.bf16.msra.mxu0 %v4817
  %4838 = vmatprep.subr.bf16.mxu0 %v4820
  %4839 = vmatpush1.bf16.msra.mxu0 %v4819
  %4840 = vmatprep.subr.bf16.mxu0 %v4822
  %4841 = vmatpush1.bf16.msra.mxu0 %v4821
  %4842 = vmatprep.subr.bf16.mxu0 0
  %4843 = vmatpush1.bf16.msra.mxu0 0
  %4844 = vmatprep.subr.bf16.mxu0 0
  %4845 = vmatpush1.bf16.msra.mxu0 0
  %4846 = vmatprep.subr.bf16.mxu0 0
  %4847 = vmatpush1.bf16.msra.mxu0 0
  %4848 = vmatprep.subr.bf16.mxu0 0
  %4849 = vmatpush1.bf16.msra.mxu0 0
  %4850 = vmatprep.subr.bf16.mxu0 0
  %4851 = vmatpush1.bf16.msra.mxu0 0
  %4852 = vmatprep.subr.bf16.mxu0 0
  %4853 = vmatpush1.bf16.msra.mxu0 0
  %4854 = vmatprep.subr.bf16.mxu0 0
  %4855 = vmatpush1.bf16.msra.mxu0 0
  %4856 = vmatprep.subr.bf16.mxu0 0
  %4857 = vmatpush1.bf16.msra.mxu0 0
  %4858 = vmatprep.subr.bf16.mxu0 0
  %4859 = vmatpush1.bf16.msra.mxu0 0
  %4860 = vmatprep.subr.bf16.mxu0 0
  %4861 = vmatpush1.bf16.msra.mxu0 0
  %4862 = vmatprep.subr.bf16.mxu0 0
  %4863 = vmatpush1.bf16.msra.mxu0 0
  %4864 = vmatprep.subr.bf16.mxu0 0
  %4865 = vmatpush1.bf16.msra.mxu0 0
  %4866 = vmatprep.mubr.bf16.mxu0 0
  %4867 = vmatmul.mubr.bf16.gmra.mrb[0].mxu0 %v4832
  %v4868 = vpop.f32.mrb[0].mxu0
  %v4869 = vadd.f32 0.0, %v4868
  %v4870 = vpop.f32.mrb[0].mxu0
  %v4871 = vadd.f32 0.0, %v4870
  %v4872 = vpop.f32.mrb[0].mxu0
  %v4873 = vpop.f32.mrb[0].mxu0
  %4874 = vdwg.mxu0
  %v4875 = vadd.f32 %v4779, %v4869
  %v4876 = vadd.f32 %v4780, %v4871
  %v4877 = vld [vmem:[%s13] sm:$0xff]
  %4879 = vset.pattern.permute.xlu0 0
  %4880 = vperm.xlu0 %4879, %v4877
  %v4881 = vpop.permute.xlu0 %4880
  %v4883 = vadd.f32 %v4875, %v4881
  %v4884 = vadd.f32 %v4876, %v4881
  %v4885 = vsub.f32 0.0, %v4883
  %v4886 = vsub.f32 0.0, %v4884
  %v4887 = vmul.f32 %v4885, 1.442695
  %v4888 = vpow.pop %v4887
  %v4889 = vmul.f32 %v4886, 1.442695
  %v4890 = vpow.pop %v4889
  %v4891 = vadd.f32 %v4888, 1.0
  %v4892 = vadd.f32 %v4890, 1.0
  %v4893 = vrcp.pop %v4891
  %v4894 = vmul.f32 1.0, %v4893
  %v4895 = vrcp.pop %v4892
  %v4896 = vmul.f32 1.0, %v4895
  %4897 = vst [vmem:[%s15] sm:$0xff] %v4894
  %4898 = vst [vmem:[%s15 + $0x8] sm:$0xff] %v4896
  // Predicated region
  $region58: #{ae_forward.1} parent=0 // pred_check
    _
  $region59: #{ae_forward.1} parent=0 // pred_check_branch
    %4900 = sbr.rel (0) target = $region61
  $region60: #{ae_forward.1} parent=0 // pred_region
    _
  $region61: #{ae_forward.1} parent=0 // pred_fallthru
    _
  // Predicated region
  $region62: #{ae_forward.1} parent=0 // pred_check
    _
  $region63: #{ae_forward.1} parent=0 // pred_check_branch
    %4902 = sbr.rel (0) target = $region65
  $region64: #{ae_forward.1} parent=0 // pred_region
    _
  $region65: #{ae_forward.1} parent=0 // pred_fallthru
    _
  // Predicated region
  $region66: #{ae_forward.1} parent=0 // pred_check
    _
  $region67: #{ae_forward.1} parent=0 // pred_check_branch
    %4904 = sbr.rel (0) target = $region69
  $region68: #{ae_forward.1} parent=0 // pred_region
    _
  $region69: #{ae_forward.1} parent=0 // pred_fallthru
    _
  // Predicated region
  $region70: #{ae_forward.1} parent=0 // pred_check
    _
  $region71: #{ae_forward.1} parent=0 // pred_check_branch
    %4906 = sbr.rel (0) target = $region73
  $region72: #{ae_forward.1} parent=0 // pred_region
    _
  $region73: #{ae_forward.1} parent=0 // pred_fallthru
    _

</llo_original>
